<compile_context>
chip_gen: v6e
topology: v6e:2x2x1
jax: 0.10.0
libtpu: 0.0.40
codegen_flags: <defaults>
</compile_context>

<pallas_src>
import functools

import jax
import jax.numpy as jnp
from jax import lax
from jax.experimental import pallas as pl
from jax.experimental.pallas import tpu as pltpu

_MIB = 1024 * 1024

# Ids gathered per grid step on the VMEM-resident (one-hot MXU) path.
# 256 = full v6e/v7x MXU tile; auto-shrunk if the double-buffered output block
# would exceed ~8 MiB.
VMEM_IDS_PER_STEP = 256

# Ids gathered per grid step on the HBM per-row-DMA path (cross-step
# double-buffered).  Each id is its own DMA descriptor and the issue/wait
# loops are fully unrolled, so this is kept moderate.
HBM_IDS_PER_STEP = 64

# One-hot chunk width along the user axis: bounds the one-hot workspace to
# ids_per_step * _USER_CHUNK * itemsize (~1 MiB at the defaults).
_USER_CHUNK = 1024


def _round_up(x: int, m: int) -> int:
    return ((x + m - 1) // m) * m


def _vmem_capacity_bytes() -> int:
    """Physical VMEM per TensorCore; conservative 64 MiB (v7x) fallback."""
    try:
        cap = getattr(pltpu.get_tpu_info(), "vmem_capacity_bytes", None)
        if cap:
            return int(cap)
    except Exception:
        pass
    return 64 * _MIB


# ---------------------------------------------------------------------------
# Small-table path: table VMEM-resident, one-hot gather on the MXU.
# ---------------------------------------------------------------------------
def _onehot_gather_kernel(ids_ref, table_ref, out_ref, *, user_chunk):
    """ids_ref: (ids_per_step, 1) i32; table_ref: (users, hidden_p) resident;
    out_ref: (ids_per_step, hidden_p)."""
    ids_col = ids_ref[...]                              # (m, 1) int32
    m = ids_col.shape[0]
    users_num, hidden_p = table_ref.shape

    acc = jnp.zeros((m, hidden_p), jnp.float32)
    for off in range(0, users_num, user_chunk):
        cur = min(user_chunk, users_num - off)
        # one_hot[k, u] = 1  iff  ids[k] == off + u
        row_iota = lax.broadcasted_iota(jnp.int32, (m, cur), 1) + off
        one_hot = (row_iota == ids_col).astype(table_ref.dtype)
        # 1.0 * x with f32 accumulation and HIGHEST precision is exact, so the
        # MXU gather reproduces the table rows bit-for-bit (up to <=1 ulp).
        acc = acc + jnp.dot(one_hot, table_ref[pl.ds(off, cur), :],
                            preferred_element_type=jnp.float32,
                            precision=lax.Precision.HIGHEST)
    out_ref[...] = acc.astype(out_ref.dtype)


# ---------------------------------------------------------------------------
# Large-table path: table stays in HBM, per-row DMAs double-buffered across
# grid steps into a ping-pong VMEM staging buffer.
# ---------------------------------------------------------------------------
def _dma_gather_kernel(ids_ref, table_hbm, out_ref, row_buf, copy_sems, *,
                       ids_per_step, hidden):
    i = pl.program_id(0)
    n = pl.num_programs(0)

    def issue(step, slot):
        base = step * ids_per_step
        for k in range(ids_per_step):
            idx = ids_ref[base + k]
            pltpu.make_async_copy(
                table_hbm.at[pl.ds(idx, 1), :],
                row_buf.at[slot, pl.ds(k, 1), pl.ds(0, hidden)],
                copy_sems.at[slot, k],
            ).start()

    @pl.when(i == 0)
    def _prime():
        issue(0, 0)

    # Issue next step's DMAs (and do its SMEM id reads) BEFORE waiting on the
    # current slot so the tiny row copies overlap the wait + output writeback
    # and SMEM sst->sld forwarding isn't broken by the .wait().
    @pl.when(i + 1 < n)
    def _prefetch():
        issue(i + 1, (i + 1) % 2)

    slot = i % 2
    for k in range(ids_per_step):
        # The copies were started in a previous grid step; only the shape and
        # semaphore matter for the wait's byte accounting, so the descriptor
        # is rebuilt against a same-shaped source slice.
        pltpu.make_async_copy(
            table_hbm.at[pl.ds(0, 1), :],
            row_buf.at[slot, pl.ds(k, 1), pl.ds(0, hidden)],
            copy_sems.at[slot, k],
        ).wait()
    out_ref[...] = row_buf[slot]


# ---------------------------------------------------------------------------
# Wrapper
# ---------------------------------------------------------------------------
def user_embeddings_forward(user_id: jax.Array, table: jax.Array, *,
                            ids_per_step: int | None = None,
                            force_hbm_path: bool = False) -> jax.Array:
    """Pallas equivalent of UserEmbeddings.forward(user_id)."""
    users_num, hidden = table.shape
    orig_shape = user_id.shape
    dtype = table.dtype
    itemsize = jnp.dtype(dtype).itemsize

    flat_ids = user_id.reshape(-1).astype(jnp.int32)
    num_ids = flat_ids.shape[0]
    # torch raises on OOB ids; clamp so we never gather / DMA off the table.
    flat_ids = jnp.clip(flat_ids, 0, users_num - 1)

    # Lane-dense output: pad hidden to a multiple of 128 (sliced off below).
    hidden_p = _round_up(hidden, 128)

    cap = _vmem_capacity_bytes()
    # Resident-table cutoff per generation; budgets below assume the table
    # could end up double-buffered, so they are safe even without Buffered(1).
    resident_limit = 40 * _MIB if cap >= 128 * _MIB else 18 * _MIB
    table_p_bytes = users_num * hidden_p * itemsize
    use_vmem_table = table_p_bytes <= resident_limit and not force_hbm_path

    if use_vmem_table:
        # ----- one-hot MXU gather over a VMEM-resident table -----
        ips = ids_per_step or VMEM_IDS_PER_STEP
        while ips > 8 and 2 * ips * hidden_p * itemsize > 8 * _MIB:
            ips //= 2
        ips = max(8, _round_up(ips, 8))

        num_steps = pl.cdiv(num_ids, ips)
        padded = num_steps * ips
        if padded != num_ids:
            flat_ids = jnp.pad(flat_ids, (0, padded - num_ids))
        ids_col = flat_ids.reshape(padded, 1)

        table_p = table
        if hidden_p != hidden:
            table_p = jnp.pad(table, ((0, 0), (0, hidden_p - hidden)))

        out_shape = jax.ShapeDtypeStruct((padded, hidden_p), dtype)
        vmem_limit = int(min(cap - 8 * _MIB,
                             max(32 * _MIB,
                                 2 * table_p_bytes
                                 + 2 * ips * hidden_p * itemsize + 8 * _MIB)))
        compiler_params = pltpu.CompilerParams(
            dimension_semantics=("parallel",),       # id batches independent
            vmem_limit_bytes=vmem_limit)
        kernel = functools.partial(_onehot_gather_kernel,
                                   user_chunk=_USER_CHUNK)

        def build(single_buffer_table: bool):
            table_kwargs = {}
            if single_buffer_table:
                # Block index never changes -> one VMEM copy of the table.
                table_kwargs["pipeline_mode"] = pl.Buffered(1)
            grid_spec = pltpu.PrefetchScalarGridSpec(
                num_scalar_prefetch=0,
                grid=(num_steps,),
                in_specs=[
                    pl.BlockSpec((ips, 1), lambda i: (i, 0)),          # ids
                    pl.BlockSpec((users_num, hidden_p), lambda i: (0, 0),
                                 **table_kwargs),                      # table
                ],
                out_specs=pl.BlockSpec((ips, hidden_p), lambda i: (i, 0)),
            )
            return pl.pallas_call(kernel, grid_spec=grid_spec,
                                  out_shape=out_shape,
                                  compiler_params=compiler_params)

        try:
            out = build(single_buffer_table=True)(ids_col, table_p)
        except Exception:
            # pipeline_mode support can differ across JAX versions; fall back
            # to default double buffering (already budgeted for above).
            out = build(single_buffer_table=False)(ids_col, table_p)
    else:
        # ----- per-row DMA gather from HBM, double-buffered across steps ----
        ips = ids_per_step or HBM_IDS_PER_STEP
        ips = max(8, _round_up(min(ips, 512), 8))

        num_steps = pl.cdiv(num_ids, ips)
        padded = num_steps * ips
        if padded != num_ids:
            flat_ids = jnp.pad(flat_ids, (0, padded - num_ids))
        # TODO(synk): chunk the wrapper call for very large id counts — the
        # scalar-prefetched i32[padded] array must fit in SMEM.

        out_shape = jax.ShapeDtypeStruct((padded, hidden_p), dtype)
        vmem_limit = int(min(cap - 8 * _MIB,
                             max(32 * _MIB,
                                 4 * ips * hidden_p * itemsize + 16 * _MIB)))
        compiler_params = pltpu.CompilerParams(
            # Steps are chained by the cross-step prefetch; keep sequential.
            dimension_semantics=("arbitrary",),
            vmem_limit_bytes=vmem_limit)
        grid_spec = pltpu.PrefetchScalarGridSpec(
            num_scalar_prefetch=1,
            grid=(num_steps,),
            in_specs=[pl.BlockSpec(memory_space=pl.ANY)],   # table stays in HBM
            out_specs=pl.BlockSpec((ips, hidden_p), lambda i, ids: (i, 0)),
            scratch_shapes=[
                pltpu.VMEM((2, ips, hidden_p), dtype),      # ping-pong staging
                pltpu.SemaphoreType.DMA((2, ips)),
            ],
        )
        kernel = functools.partial(_dma_gather_kernel, ids_per_step=ips,
                                   hidden=hidden)
        out = pl.pallas_call(kernel, grid_spec=grid_spec, out_shape=out_shape,
                             compiler_params=compiler_params)(flat_ids, table)

    out = out[:num_ids, :hidden]
    return out.reshape(orig_shape + (hidden,))


if __name__ == "__main__":
    users_num = 64
    hidden_size = 128
    num_ids = 20  # deliberately not a multiple of the per-step batch (padding)

    key = jax.random.PRNGKey(0)
    k_table, k_ids = jax.random.split(key)

    # nn.Embedding weight ~ N(0, 1) by default.
    table = jax.random.normal(k_table, (users_num, hidden_size),
                              dtype=jnp.float32)
    user_id = jax.random.randint(k_ids, (num_ids,), 0, users_num,
                                 dtype=jnp.int32)

    ref = table[user_id]

    # Fast path: VMEM-resident table, one-hot MXU gather.
    out_vmem = jax.block_until_ready(user_embeddings_forward(user_id, table))
    assert out_vmem.shape == (num_ids, hidden_size)
    assert jnp.allclose(out_vmem, ref, rtol=1e-6, atol=1e-6), \
        "VMEM-path mismatch vs reference"

    # Large-table path: double-buffered per-row DMA gather (forced for coverage).
    out_hbm = jax.block_until_ready(
        user_embeddings_forward(user_id, table, force_hbm_path=True))
    assert out_hbm.shape == (num_ids, hidden_size)
    assert jnp.array_equal(out_hbm, ref), "HBM-path mismatch vs reference"

    print("KERNEL_OK")
</pallas_src>

<mosaic_0001>
module attributes {stable_mosaic.version = 11 : i64} {
  func.func @_onehot_gather_kernel(%arg0: i32, %arg1: memref<256x1xi32, #tpu.memory_space<vmem>>, %arg2: memref<64x128xf32, #tpu.memory_space<vmem>>, %arg3: memref<256x128xf32, #tpu.memory_space<vmem>>) attributes {dimension_semantics = [#tpu.dimension_semantics<parallel>], iteration_bounds = array<i64: 1>, scalar_prefetch = 0 : i64, scratch_operands = 0 : i64, tpu.core_type = #tpu.core_type<tc>, window_params = [{transform_indices = @transform_0, window_bounds = array<i64: 256, 1>}, {pipeline_mode = #tpu.pipeline_mode<synchronous>, transform_indices = @transform_1, window_bounds = array<i64: 64, 128>}, {transform_indices = @transform_2, window_bounds = array<i64: 256, 128>}]} {
    %c0 = arith.constant 0 : index
    %c0_0 = arith.constant 0 : index
    %0 = vector.load %arg1[%c0, %c0_0] : memref<256x1xi32, #tpu.memory_space<vmem>>, vector<256x1xi32>
    %cst = arith.constant 0.000000e+00 : f32
    %1 = vector.broadcast %cst : f32 to vector<256x128xf32>
    %2 = tpu.iota {dimensions = array<i32: 1>} : vector<256x64xi32>
    %c0_i32 = arith.constant 0 : i32
    %3 = vector.broadcast %c0_i32 : i32 to vector<256x64xi32>
    %4 = arith.addi %2, %3 : vector<256x64xi32>
    %5 = vector.broadcast %0 : vector<256x1xi32> to vector<256x64xi32>
    %6 = arith.cmpi eq, %4, %5 : vector<256x64xi32>
    %7 = arith.extui %6 : vector<256x64xi1> to vector<256x64xi32>
    %8 = arith.sitofp %7 : vector<256x64xi32> to vector<256x64xf32>
    %c0_1 = arith.constant 0 : index
    %c0_2 = arith.constant 0 : index
    %9 = vector.load %arg2[%c0_1, %c0_2] : memref<64x128xf32, #tpu.memory_space<vmem>>, vector<64x128xf32>
    %cst_3 = arith.constant dense<0.000000e+00> : vector<256x128xf32>
    %10 = tpu.matmul %8, %9, %cst_3 {dimension_numbers = #tpu.dot_dimension_numbers<[1], [0], [0], [1], [0, 0, 1, 1], [], []>, precision = #tpu.contract_precision<fp32>} : vector<256x64xf32>, vector<64x128xf32>, vector<256x128xf32> -> vector<256x128xf32>
    %11 = arith.addf %1, %10 : vector<256x128xf32>
    %c0_4 = arith.constant 0 : index
    %c0_5 = arith.constant 0 : index
    %12 = vector.load %arg3[%c0_4, %c0_5] : memref<256x128xf32, #tpu.memory_space<vmem>>, vector<256x128xf32>
    tpu.vector_store %arg3[%c0_4, %c0_5], %11 {strides = array<i32>} : memref<256x128xf32, #tpu.memory_space<vmem>>, vector<256x128xf32>,
    return
  }
  func.func @transform_0(%arg0: i32) -> (i32, i32) {
    %c0_i32 = arith.constant 0 : i32
    %c0_i32_0 = arith.constant 0 : i32
    return %arg0, %c0_i32 : i32, i32
  }
  func.func @transform_1(%arg0: i32) -> (i32, i32) {
    %c0_i32 = arith.constant 0 : i32
    %c0_i32_0 = arith.constant 0 : i32
    %c0_i32_1 = arith.constant 0 : i32
    return %c0_i32, %c0_i32_0 : i32, i32
  }
  func.func @transform_2(%arg0: i32) -> (i32, i32) {
    %c0_i32 = arith.constant 0 : i32
    %c0_i32_0 = arith.constant 0 : i32
    return %arg0, %c0_i32 : i32, i32
  }
}

module attributes {stable_mosaic.version = 11 : i64} {
  func.func @_onehot_gather_kernel(%arg0: i32, %arg1: memref<256x1xi32, #tpu.memory_space<vmem>>, %arg2: memref<64x128xf32, #tpu.memory_space<vmem>>, %arg3: memref<256x128xf32, #tpu.memory_space<vmem>>) attributes {dimension_semantics = [#tpu.dimension_semantics<parallel>], iteration_bounds = array<i64: 1>, scalar_prefetch = 0 : i64, scratch_operands = 0 : i64, tpu.core_type = #tpu.core_type<tc>, window_params = [{transform_indices = @transform_0, window_bounds = array<i64: 256, 1>}, {pipeline_mode = #tpu.pipeline_mode<synchronous>, transform_indices = @transform_1, window_bounds = array<i64: 64, 128>}, {transform_indices = @transform_2, window_bounds = array<i64: 256, 128>}]} {
    %c0 = arith.constant 0 : index
    %c0_0 = arith.constant 0 : index
    %0 = vector.load %arg1[%c0, %c0_0] : memref<256x1xi32, #tpu.memory_space<vmem>>, vector<256x1xi32>
    %cst = arith.constant 0.000000e+00 : f32
    %1 = vector.broadcast %cst : f32 to vector<256x128xf32>
    %2 = tpu.iota {dimensions = array<i32: 1>} : vector<256x64xi32>
    %c0_i32 = arith.constant 0 : i32
    %3 = vector.broadcast %c0_i32 : i32 to vector<256x64xi32>
    %4 = arith.addi %2, %3 : vector<256x64xi32>
    %5 = vector.broadcast %0 : vector<256x1xi32> to vector<256x64xi32>
    %6 = arith.cmpi eq, %4, %5 : vector<256x64xi32>
    %7 = arith.extui %6 : vector<256x64xi1> to vector<256x64xi32>
    %8 = arith.sitofp %7 : vector<256x64xi32> to vector<256x64xf32>
    %c0_1 = arith.constant 0 : index
    %c0_2 = arith.constant 0 : index
    %9 = vector.load %arg2[%c0_1, %c0_2] : memref<64x128xf32, #tpu.memory_space<vmem>>, vector<64x128xf32>
    %cst_3 = arith.constant dense<0.000000e+00> : vector<256x128xf32>
    %10 = tpu.matmul %8, %9, %cst_3 {dimension_numbers = #tpu.dot_dimension_numbers<[1], [0], [0], [1], [0, 0, 1, 1], [], []>, precision = #tpu.contract_precision<fp32>} : vector<256x64xf32>, vector<64x128xf32>, vector<256x128xf32> -> vector<256x128xf32>
    %11 = arith.addf %1, %10 : vector<256x128xf32>
    %c0_4 = arith.constant 0 : index
    %c0_5 = arith.constant 0 : index
    %12 = vector.load %arg3[%c0_4, %c0_5] : memref<256x128xf32, #tpu.memory_space<vmem>>, vector<256x128xf32>
    tpu.vector_store %arg3[%c0_4, %c0_5], %11 {strides = array<i32>} : memref<256x128xf32, #tpu.memory_space<vmem>>, vector<256x128xf32>,
    return
  }
  func.func @transform_0(%arg0: i32) -> (i32, i32) {
    %c0_i32 = arith.constant 0 : i32
    %c0_i32_0 = arith.constant 0 : i32
    return %arg0, %c0_i32 : i32, i32
  }
  func.func @transform_1(%arg0: i32) -> (i32, i32) {
    %c0_i32 = arith.constant 0 : i32
    %c0_i32_0 = arith.constant 0 : i32
    %c0_i32_1 = arith.constant 0 : i32
    return %c0_i32, %c0_i32_0 : i32, i32
  }
  func.func @transform_2(%arg0: i32) -> (i32, i32) {
    %c0_i32 = arith.constant 0 : i32
    %c0_i32_0 = arith.constant 0 : i32
    return %arg0, %c0_i32 : i32, i32
  }
}

</mosaic_0001>

<llo_original>
// kernel: tpu_custom_call.1
$region0: #{tpu_custom_call.1}
  #allocation0 [shape = 'u32[]', space=smem, size = 0x4, offset = 0x4, fixed_abs, tag = 'smem constant byte address 0x4 - core index']
  #allocation1 [shape = 'u32[144,128]{1,0:T(1,128)}', space=vmem, size = 0x12000, scoped, tag = 'internal scratch']
  %s0 = inlined_call_operand.vmem [shape: s32[256,1], index: 0, kind: input, shape index: {}]
  %s1 = inlined_call_operand.vmem [shape: f32[64,128], index: 1, kind: input, shape index: {}]
  %s2 = inlined_call_operand.hbm [shape: f32[256,128], index: 2, kind: output, shape index: {}]
  %s3 = sld [smem:[#allocation0]]
  $region18: #{tpu_custom_call.1} parent=0
    _
  %s5 = ssub.s32 1, %s3
  %s6 = scalar_select 0, %s5, %s3
  $region1: #{tpu_custom_call.1} parent=0
    #allocation2 [shape = 'u8[131072]{0}', space=vmem, size = 0x20000, scoped, tag = 'output window, operand 0, single buffered']
    #allocation3 [shape = 's32[1]{0}', space=sflag, size = 0x4, scoped, tag = 'scoped memory for tpu_custom_call.1']
    %7 = vsyncpa [#allocation3], 0
    // Predicated region
    $region2: #{tpu_custom_call.1} parent=1 // pred_check
      _
    $region3: #{tpu_custom_call.1} parent=1 // pred_check_branch
      %9 = sbr.rel (0) target = $region5
    $region4: #{tpu_custom_call.1} parent=1 // pred_region
      _
    $region5: #{tpu_custom_call.1} parent=1 // pred_fallthru
      _
    // Predicated region
    $region6: #{tpu_custom_call.1} parent=1 // pred_check
      _
    $region7: #{tpu_custom_call.1} parent=1 // pred_check_branch
      %11 = sbr.rel (0) target = $region9
    $region8: #{tpu_custom_call.1} parent=1 // pred_region
      _
    $region9: #{tpu_custom_call.1} parent=1 // pred_fallthru
      _
    %v12 = vld [vmem:[%s0] sm:$0xff]
    %v13 = vld [vmem:[%s0 + $0x8] sm:$0xff]
    %v14 = vld [vmem:[%s0 + $0x10] sm:$0xff]
    %v15 = vld [vmem:[%s0 + $0x18] sm:$0xff]
    %v16 = vld [vmem:[%s0 + $0x20] sm:$0xff]
    %v17 = vld [vmem:[%s0 + $0x28] sm:$0xff]
    %v18 = vld [vmem:[%s0 + $0x30] sm:$0xff]
    %v19 = vld [vmem:[%s0 + $0x38] sm:$0xff]
    %v20 = vld [vmem:[%s0 + $0x40] sm:$0xff]
    %v21 = vld [vmem:[%s0 + $0x48] sm:$0xff]
    %v22 = vld [vmem:[%s0 + $0x50] sm:$0xff]
    %v23 = vld [vmem:[%s0 + $0x58] sm:$0xff]
    %v24 = vld [vmem:[%s0 + $0x60] sm:$0xff]
    %v25 = vld [vmem:[%s0 + $0x68] sm:$0xff]
    %v26 = vld [vmem:[%s0 + $0x70] sm:$0xff]
    %v27 = vld [vmem:[%s0 + $0x78] sm:$0xff]
    %v28 = vld [vmem:[%s0 + $0x80] sm:$0xff]
    %v29 = vld [vmem:[%s0 + $0x88] sm:$0xff]
    %v30 = vld [vmem:[%s0 + $0x90] sm:$0xff]
    %v31 = vld [vmem:[%s0 + $0x98] sm:$0xff]
    %v32 = vld [vmem:[%s0 + $0xa0] sm:$0xff]
    %v33 = vld [vmem:[%s0 + $0xa8] sm:$0xff]
    %v34 = vld [vmem:[%s0 + $0xb0] sm:$0xff]
    %v35 = vld [vmem:[%s0 + $0xb8] sm:$0xff]
    %v36 = vld [vmem:[%s0 + $0xc0] sm:$0xff]
    %v37 = vld [vmem:[%s0 + $0xc8] sm:$0xff]
    %v38 = vld [vmem:[%s0 + $0xd0] sm:$0xff]
    %v39 = vld [vmem:[%s0 + $0xd8] sm:$0xff]
    %v40 = vld [vmem:[%s0 + $0xe0] sm:$0xff]
    %v41 = vld [vmem:[%s0 + $0xe8] sm:$0xff]
    %v42 = vld [vmem:[%s0 + $0xf0] sm:$0xff]
    %v43 = vld [vmem:[%s0 + $0xf8] sm:$0xff]
    %v44 = vlaneseq
    %v45 = vand.u32 %v44, 127
    %46 = vset.pattern.permute.xlu0 0
    %47 = vperm.xlu0 %46, %v12
    %v48 = vpop.permute.xlu0 %47
    %49 = vset.pattern.permute.xlu0 0
    %50 = vperm.xlu0 %49, %v13
    %v51 = vpop.permute.xlu0 %50
    %52 = vset.pattern.permute.xlu0 0
    %53 = vperm.xlu0 %52, %v14
    %v54 = vpop.permute.xlu0 %53
    %55 = vset.pattern.permute.xlu0 0
    %56 = vperm.xlu0 %55, %v15
    %v57 = vpop.permute.xlu0 %56
    %58 = vset.pattern.permute.xlu0 0
    %59 = vperm.xlu0 %58, %v16
    %v60 = vpop.permute.xlu0 %59
    %61 = vset.pattern.permute.xlu0 0
    %62 = vperm.xlu0 %61, %v17
    %v63 = vpop.permute.xlu0 %62
    %64 = vset.pattern.permute.xlu0 0
    %65 = vperm.xlu0 %64, %v18
    %v66 = vpop.permute.xlu0 %65
    %67 = vset.pattern.permute.xlu0 0
    %68 = vperm.xlu0 %67, %v19
    %v69 = vpop.permute.xlu0 %68
    %70 = vset.pattern.permute.xlu0 0
    %71 = vperm.xlu0 %70, %v20
    %v72 = vpop.permute.xlu0 %71
    %73 = vset.pattern.permute.xlu0 0
    %74 = vperm.xlu0 %73, %v21
    %v75 = vpop.permute.xlu0 %74
    %76 = vset.pattern.permute.xlu0 0
    %77 = vperm.xlu0 %76, %v22
    %v78 = vpop.permute.xlu0 %77
    %79 = vset.pattern.permute.xlu0 0
    %80 = vperm.xlu0 %79, %v23
    %v81 = vpop.permute.xlu0 %80
    %82 = vset.pattern.permute.xlu0 0
    %83 = vperm.xlu0 %82, %v24
    %v84 = vpop.permute.xlu0 %83
    %85 = vset.pattern.permute.xlu0 0
    %86 = vperm.xlu0 %85, %v25
    %v87 = vpop.permute.xlu0 %86
    %88 = vset.pattern.permute.xlu0 0
    %89 = vperm.xlu0 %88, %v26
    %v90 = vpop.permute.xlu0 %89
    %91 = vset.pattern.permute.xlu0 0
    %92 = vperm.xlu0 %91, %v27
    %v93 = vpop.permute.xlu0 %92
    %94 = vset.pattern.permute.xlu0 0
    %95 = vperm.xlu0 %94, %v28
    %v96 = vpop.permute.xlu0 %95
    %97 = vset.pattern.permute.xlu0 0
    %98 = vperm.xlu0 %97, %v29
    %v99 = vpop.permute.xlu0 %98
    %100 = vset.pattern.permute.xlu0 0
    %101 = vperm.xlu0 %100, %v30
    %v102 = vpop.permute.xlu0 %101
    %103 = vset.pattern.permute.xlu0 0
    %104 = vperm.xlu0 %103, %v31
    %v105 = vpop.permute.xlu0 %104
    %106 = vset.pattern.permute.xlu0 0
    %107 = vperm.xlu0 %106, %v32
    %v108 = vpop.permute.xlu0 %107
    %109 = vset.pattern.permute.xlu0 0
    %110 = vperm.xlu0 %109, %v33
    %v111 = vpop.permute.xlu0 %110
    %112 = vset.pattern.permute.xlu0 0
    %113 = vperm.xlu0 %112, %v34
    %v114 = vpop.permute.xlu0 %113
    %115 = vset.pattern.permute.xlu0 0
    %116 = vperm.xlu0 %115, %v35
    %v117 = vpop.permute.xlu0 %116
    %118 = vset.pattern.permute.xlu0 0
    %119 = vperm.xlu0 %118, %v36
    %v120 = vpop.permute.xlu0 %119
    %121 = vset.pattern.permute.xlu0 0
    %122 = vperm.xlu0 %121, %v37
    %v123 = vpop.permute.xlu0 %122
    %124 = vset.pattern.permute.xlu0 0
    %125 = vperm.xlu0 %124, %v38
    %v126 = vpop.permute.xlu0 %125
    %127 = vset.pattern.permute.xlu0 0
    %128 = vperm.xlu0 %127, %v39
    %v129 = vpop.permute.xlu0 %128
    %130 = vset.pattern.permute.xlu0 0
    %131 = vperm.xlu0 %130, %v40
    %v132 = vpop.permute.xlu0 %131
    %133 = vset.pattern.permute.xlu0 0
    %134 = vperm.xlu0 %133, %v41
    %v135 = vpop.permute.xlu0 %134
    %136 = vset.pattern.permute.xlu0 0
    %137 = vperm.xlu0 %136, %v42
    %v138 = vpop.permute.xlu0 %137
    %139 = vset.pattern.permute.xlu0 0
    %140 = vperm.xlu0 %139, %v43
    %v141 = vpop.permute.xlu0 %140
    %vm142 = vcmp.eq.s32.totalorder %v45, %v48
    %vm143 = vcmp.eq.s32.totalorder %v45, %v51
    %vm144 = vcmp.eq.s32.totalorder %v45, %v54
    %vm145 = vcmp.eq.s32.totalorder %v45, %v57
    %vm146 = vcmp.eq.s32.totalorder %v45, %v60
    %vm147 = vcmp.eq.s32.totalorder %v45, %v63
    %vm148 = vcmp.eq.s32.totalorder %v45, %v66
    %vm149 = vcmp.eq.s32.totalorder %v45, %v69
    %vm150 = vcmp.eq.s32.totalorder %v45, %v72
    %vm151 = vcmp.eq.s32.totalorder %v45, %v75
    %vm152 = vcmp.eq.s32.totalorder %v45, %v78
    %vm153 = vcmp.eq.s32.totalorder %v45, %v81
    %vm154 = vcmp.eq.s32.totalorder %v45, %v84
    %vm155 = vcmp.eq.s32.totalorder %v45, %v87
    %vm156 = vcmp.eq.s32.totalorder %v45, %v90
    %vm157 = vcmp.eq.s32.totalorder %v45, %v93
    %vm158 = vcmp.eq.s32.totalorder %v45, %v96
    %vm159 = vcmp.eq.s32.totalorder %v45, %v99
    %vm160 = vcmp.eq.s32.totalorder %v45, %v102
    %vm161 = vcmp.eq.s32.totalorder %v45, %v105
    %vm162 = vcmp.eq.s32.totalorder %v45, %v108
    %vm163 = vcmp.eq.s32.totalorder %v45, %v111
    %vm164 = vcmp.eq.s32.totalorder %v45, %v114
    %vm165 = vcmp.eq.s32.totalorder %v45, %v117
    %vm166 = vcmp.eq.s32.totalorder %v45, %v120
    %vm167 = vcmp.eq.s32.totalorder %v45, %v123
    %vm168 = vcmp.eq.s32.totalorder %v45, %v126
    %vm169 = vcmp.eq.s32.totalorder %v45, %v129
    %vm170 = vcmp.eq.s32.totalorder %v45, %v132
    %vm171 = vcmp.eq.s32.totalorder %v45, %v135
    %vm172 = vcmp.eq.s32.totalorder %v45, %v138
    %vm173 = vcmp.eq.s32.totalorder %v45, %v141
    %v174 = vsel %vm142, 1, 0
    %v175 = vsel %vm143, 1, 0
    %v176 = vsel %vm144, 1, 0
    %v177 = vsel %vm145, 1, 0
    %v178 = vsel %vm146, 1, 0
    %v179 = vsel %vm147, 1, 0
    %v180 = vsel %vm148, 1, 0
    %v181 = vsel %vm149, 1, 0
    %v182 = vsel %vm150, 1, 0
    %v183 = vsel %vm151, 1, 0
    %v184 = vsel %vm152, 1, 0
    %v185 = vsel %vm153, 1, 0
    %v186 = vsel %vm154, 1, 0
    %v187 = vsel %vm155, 1, 0
    %v188 = vsel %vm156, 1, 0
    %v189 = vsel %vm157, 1, 0
    %v190 = vsel %vm158, 1, 0
    %v191 = vsel %vm159, 1, 0
    %v192 = vsel %vm160, 1, 0
    %v193 = vsel %vm161, 1, 0
    %v194 = vsel %vm162, 1, 0
    %v195 = vsel %vm163, 1, 0
    %v196 = vsel %vm164, 1, 0
    %v197 = vsel %vm165, 1, 0
    %v198 = vsel %vm166, 1, 0
    %v199 = vsel %vm167, 1, 0
    %v200 = vsel %vm168, 1, 0
    %v201 = vsel %vm169, 1, 0
    %v202 = vsel %vm170, 1, 0
    %v203 = vsel %vm171, 1, 0
    %v204 = vsel %vm172, 1, 0
    %v205 = vsel %vm173, 1, 0
    %v206 = vcvt.s32.f32 %v174
    %v207 = vcvt.s32.f32 %v175
    %v208 = vcvt.s32.f32 %v176
    %v209 = vcvt.s32.f32 %v177
    %v210 = vcvt.s32.f32 %v178
    %v211 = vcvt.s32.f32 %v179
    %v212 = vcvt.s32.f32 %v180
    %v213 = vcvt.s32.f32 %v181
    %v214 = vcvt.s32.f32 %v182
    %v215 = vcvt.s32.f32 %v183
    %v216 = vcvt.s32.f32 %v184
    %v217 = vcvt.s32.f32 %v185
    %v218 = vcvt.s32.f32 %v186
    %v219 = vcvt.s32.f32 %v187
    %v220 = vcvt.s32.f32 %v188
    %v221 = vcvt.s32.f32 %v189
    %v222 = vcvt.s32.f32 %v190
    %v223 = vcvt.s32.f32 %v191
    %v224 = vcvt.s32.f32 %v192
    %v225 = vcvt.s32.f32 %v193
    %v226 = vcvt.s32.f32 %v194
    %v227 = vcvt.s32.f32 %v195
    %v228 = vcvt.s32.f32 %v196
    %v229 = vcvt.s32.f32 %v197
    %v230 = vcvt.s32.f32 %v198
    %v231 = vcvt.s32.f32 %v199
    %v232 = vcvt.s32.f32 %v200
    %v233 = vcvt.s32.f32 %v201
    %v234 = vcvt.s32.f32 %v202
    %v235 = vcvt.s32.f32 %v203
    %v236 = vcvt.s32.f32 %v204
    %v237 = vcvt.s32.f32 %v205
    %v238 = vld [vmem:[%s1] sm:$0xff]
    %v239 = vld [vmem:[%s1 + $0x8] sm:$0xff]
    %v240 = vld [vmem:[%s1 + $0x10] sm:$0xff]
    %v241 = vld [vmem:[%s1 + $0x18] sm:$0xff]
    %v242 = vld [vmem:[%s1 + $0x20] sm:$0xff]
    %v243 = vld [vmem:[%s1 + $0x28] sm:$0xff]
    %v244 = vld [vmem:[%s1 + $0x30] sm:$0xff]
    %v245 = vld [vmem:[%s1 + $0x38] sm:$0xff]
    %vm246 = vcmask 523264
    %v248 = vsel %vm246, %v206, 0
    %v251 = vsel %vm246, %v207, 0
    %v254 = vsel %vm246, %v208, 0
    %v257 = vsel %vm246, %v209, 0
    %v260 = vsel %vm246, %v210, 0
    %v263 = vsel %vm246, %v211, 0
    %v266 = vsel %vm246, %v212, 0
    %v269 = vsel %vm246, %v213, 0
    %v272 = vsel %vm246, %v214, 0
    %v275 = vsel %vm246, %v215, 0
    %v278 = vsel %vm246, %v216, 0
    %v281 = vsel %vm246, %v217, 0
    %v284 = vsel %vm246, %v218, 0
    %v287 = vsel %vm246, %v219, 0
    %v290 = vsel %vm246, %v220, 0
    %v293 = vsel %vm246, %v221, 0
    %v296 = vsel %vm246, %v222, 0
    %v299 = vsel %vm246, %v223, 0
    %v302 = vsel %vm246, %v224, 0
    %v305 = vsel %vm246, %v225, 0
    %v308 = vsel %vm246, %v226, 0
    %v311 = vsel %vm246, %v227, 0
    %v314 = vsel %vm246, %v228, 0
    %v317 = vsel %vm246, %v229, 0
    %v320 = vsel %vm246, %v230, 0
    %v323 = vsel %vm246, %v231, 0
    %v326 = vsel %vm246, %v232, 0
    %v329 = vsel %vm246, %v233, 0
    %v332 = vsel %vm246, %v234, 0
    %v335 = vsel %vm246, %v235, 0
    %v338 = vsel %vm246, %v236, 0
    %v341 = vsel %vm246, %v237, 0
    %343 = vmatprep.subr.mxu0 0.0
    %344 = vmatpush1.msra.mxu0 0.0
    %345 = vmatprep.subr.mxu0 0.0
    %346 = vmatpush1.msra.mxu0 0.0
    %347 = vmatprep.subr.mxu0 0.0
    %348 = vmatpush1.msra.mxu0 0.0
    %349 = vmatprep.subr.mxu0 0.0
    %350 = vmatpush1.msra.mxu0 0.0
    %351 = vmatprep.subr.mxu0 0.0
    %352 = vmatpush1.msra.mxu0 0.0
    %353 = vmatprep.subr.mxu0 0.0
    %354 = vmatpush1.msra.mxu0 0.0
    %355 = vmatprep.subr.mxu0 0.0
    %356 = vmatpush1.msra.mxu0 0.0
    %357 = vmatprep.subr.mxu0 0.0
    %358 = vmatpush1.msra.mxu0 0.0
    %359 = vmatprep.subr.mxu0 0.0
    %v360 = vand.u32 %v245, 4294901760
    %361 = vmatpush1.msra.mxu0 %v360
    %362 = vmatprep.subr.mxu0 0.0
    %v363 = vand.u32 %v244, 4294901760
    %364 = vmatpush1.msra.mxu0 %v363
    %365 = vmatprep.subr.mxu0 0.0
    %v366 = vand.u32 %v243, 4294901760
    %367 = vmatpush1.msra.mxu0 %v366
    %368 = vmatprep.subr.mxu0 0.0
    %v369 = vand.u32 %v242, 4294901760
    %370 = vmatpush1.msra.mxu0 %v369
    %371 = vmatprep.subr.mxu0 0.0
    %v372 = vand.u32 %v241, 4294901760
    %373 = vmatpush1.msra.mxu0 %v372
    %374 = vmatprep.subr.mxu0 0.0
    %v375 = vand.u32 %v240, 4294901760
    %376 = vmatpush1.msra.mxu0 %v375
    %377 = vmatprep.subr.mxu0 0.0
    %v378 = vand.u32 %v239, 4294901760
    %379 = vmatpush1.msra.mxu0 %v378
    %380 = vmatprep.subr.mxu0 0.0
    %v381 = vand.u32 %v238, 4294901760
    %382 = vmatpush1.msra.mxu0 %v381
    %383 = vmatprep.subr.mxu0 0.0
    %384 = vmatpush2.msra.mxu0 0.0
    %385 = vmatprep.subr.mxu0 0.0
    %386 = vmatpush2.msra.mxu0 0.0
    %387 = vmatprep.subr.mxu0 0.0
    %388 = vmatpush2.msra.mxu0 0.0
    %389 = vmatprep.subr.mxu0 0.0
    %390 = vmatpush2.msra.mxu0 0.0
    %391 = vmatprep.subr.mxu0 0.0
    %392 = vmatpush2.msra.mxu0 0.0
    %393 = vmatprep.subr.mxu0 0.0
    %394 = vmatpush2.msra.mxu0 0.0
    %395 = vmatprep.subr.mxu0 0.0
    %396 = vmatpush2.msra.mxu0 0.0
    %397 = vmatprep.subr.mxu0 0.0
    %398 = vmatpush2.msra.mxu0 0.0
    %399 = vmatprep.subr.mxu0 0.0
    %400 = vmatpush2.msra.mxu0 0.0
    %401 = vmatprep.subr.mxu0 0.0
    %402 = vmatpush2.msra.mxu0 0.0
    %403 = vmatprep.subr.mxu0 0.0
    %404 = vmatpush2.msra.mxu0 0.0
    %405 = vmatprep.subr.mxu0 0.0
    %406 = vmatpush2.msra.mxu0 0.0
    %407 = vmatprep.subr.mxu0 0.0
    %408 = vmatpush2.msra.mxu0 0.0
    %409 = vmatprep.subr.mxu0 0.0
    %410 = vmatpush2.msra.mxu0 0.0
    %411 = vmatprep.subr.mxu0 0.0
    %412 = vmatpush2.msra.mxu0 0.0
    %413 = vmatprep.subr.mxu0 0.0
    %414 = vmatpush2.msra.mxu0 0.0
    %415 = vmatprep.mubr.f32.mxu0 0.0
    %v416 = vand.u32 %v248, 4294901760
    %v417 = vsub.f32 %v248, %v416
    %v418 = vand.u32 %v417, 4294901760
    %v419 = vsub.f32 %v417, %v418
    %v420 = vand.u32 %v419, 4294901760
    %421 = vmatmul.mubr.f32.gmra.mxu0 %v420
    %v422 = vpop.f32.mrf.mxu0
    %v423 = vadd.f32 0.0, %v422
    %v424 = vpop.f32.mrf.mxu0
    %425 = vmatprep.mubr.f32.mxu0 0.0
    %v426 = vand.u32 %v251, 4294901760
    %v427 = vsub.f32 %v251, %v426
    %v428 = vand.u32 %v427, 4294901760
    %v429 = vsub.f32 %v427, %v428
    %v430 = vand.u32 %v429, 4294901760
    %431 = vmatmul.mubr.f32.gmra.mxu0 %v430
    %v432 = vpop.f32.mrf.mxu0
    %v433 = vadd.f32 0.0, %v432
    %v434 = vpop.f32.mrf.mxu0
    %435 = vmatprep.mubr.f32.mxu0 0.0
    %v436 = vand.u32 %v254, 4294901760
    %v437 = vsub.f32 %v254, %v436
    %v438 = vand.u32 %v437, 4294901760
    %v439 = vsub.f32 %v437, %v438
    %v440 = vand.u32 %v439, 4294901760
    %441 = vmatmul.mubr.f32.gmra.mxu0 %v440
    %v442 = vpop.f32.mrf.mxu0
    %v443 = vadd.f32 0.0, %v442
    %v444 = vpop.f32.mrf.mxu0
    %445 = vmatprep.mubr.f32.mxu0 0.0
    %v446 = vand.u32 %v257, 4294901760
    %v447 = vsub.f32 %v257, %v446
    %v448 = vand.u32 %v447, 4294901760
    %v449 = vsub.f32 %v447, %v448
    %v450 = vand.u32 %v449, 4294901760
    %451 = vmatmul.mubr.f32.gmra.mxu0 %v450
    %v452 = vpop.f32.mrf.mxu0
    %v453 = vadd.f32 0.0, %v452
    %v454 = vpop.f32.mrf.mxu0
    %455 = vmatprep.mubr.f32.mxu0 0.0
    %v456 = vand.u32 %v260, 4294901760
    %v457 = vsub.f32 %v260, %v456
    %v458 = vand.u32 %v457, 4294901760
    %v459 = vsub.f32 %v457, %v458
    %v460 = vand.u32 %v459, 4294901760
    %461 = vmatmul.mubr.f32.gmra.mxu0 %v460
    %v462 = vpop.f32.mrf.mxu0
    %v463 = vadd.f32 0.0, %v462
    %v464 = vpop.f32.mrf.mxu0
    %465 = vmatprep.mubr.f32.mxu0 0.0
    %v466 = vand.u32 %v263, 4294901760
    %v467 = vsub.f32 %v263, %v466
    %v468 = vand.u32 %v467, 4294901760
    %v469 = vsub.f32 %v467, %v468
    %v470 = vand.u32 %v469, 4294901760
    %471 = vmatmul.mubr.f32.gmra.mxu0 %v470
    %v472 = vpop.f32.mrf.mxu0
    %v473 = vadd.f32 0.0, %v472
    %v474 = vpop.f32.mrf.mxu0
    %475 = vmatprep.mubr.f32.mxu0 0.0
    %v476 = vand.u32 %v266, 4294901760
    %v477 = vsub.f32 %v266, %v476
    %v478 = vand.u32 %v477, 4294901760
    %v479 = vsub.f32 %v477, %v478
    %v480 = vand.u32 %v479, 4294901760
    %481 = vmatmul.mubr.f32.gmra.mxu0 %v480
    %v482 = vpop.f32.mrf.mxu0
    %v483 = vadd.f32 0.0, %v482
    %v484 = vpop.f32.mrf.mxu0
    %485 = vmatprep.mubr.f32.mxu0 0.0
    %v486 = vand.u32 %v269, 4294901760
    %v487 = vsub.f32 %v269, %v486
    %v488 = vand.u32 %v487, 4294901760
    %v489 = vsub.f32 %v487, %v488
    %v490 = vand.u32 %v489, 4294901760
    %491 = vmatmul.mubr.f32.gmra.mxu0 %v490
    %v492 = vpop.f32.mrf.mxu0
    %v493 = vadd.f32 0.0, %v492
    %v494 = vpop.f32.mrf.mxu0
    %495 = vmatprep.mubr.f32.mxu0 0.0
    %v496 = vand.u32 %v272, 4294901760
    %v497 = vsub.f32 %v272, %v496
    %v498 = vand.u32 %v497, 4294901760
    %v499 = vsub.f32 %v497, %v498
    %v500 = vand.u32 %v499, 4294901760
    %501 = vmatmul.mubr.f32.gmra.mxu0 %v500
    %v502 = vpop.f32.mrf.mxu0
    %v503 = vadd.f32 0.0, %v502
    %v504 = vpop.f32.mrf.mxu0
    %505 = vmatprep.mubr.f32.mxu0 0.0
    %v506 = vand.u32 %v275, 4294901760
    %v507 = vsub.f32 %v275, %v506
    %v508 = vand.u32 %v507, 4294901760
    %v509 = vsub.f32 %v507, %v508
    %v510 = vand.u32 %v509, 4294901760
    %511 = vmatmul.mubr.f32.gmra.mxu0 %v510
    %v512 = vpop.f32.mrf.mxu0
    %v513 = vadd.f32 0.0, %v512
    %v514 = vpop.f32.mrf.mxu0
    %515 = vmatprep.mubr.f32.mxu0 0.0
    %v516 = vand.u32 %v278, 4294901760
    %v517 = vsub.f32 %v278, %v516
    %v518 = vand.u32 %v517, 4294901760
    %v519 = vsub.f32 %v517, %v518
    %v520 = vand.u32 %v519, 4294901760
    %521 = vmatmul.mubr.f32.gmra.mxu0 %v520
    %v522 = vpop.f32.mrf.mxu0
    %v523 = vadd.f32 0.0, %v522
    %v524 = vpop.f32.mrf.mxu0
    %525 = vmatprep.mubr.f32.mxu0 0.0
    %v526 = vand.u32 %v281, 4294901760
    %v527 = vsub.f32 %v281, %v526
    %v528 = vand.u32 %v527, 4294901760
    %v529 = vsub.f32 %v527, %v528
    %v530 = vand.u32 %v529, 4294901760
    %531 = vmatmul.mubr.f32.gmra.mxu0 %v530
    %v532 = vpop.f32.mrf.mxu0
    %v533 = vadd.f32 0.0, %v532
    %v534 = vpop.f32.mrf.mxu0
    %535 = vmatprep.mubr.f32.mxu0 0.0
    %v536 = vand.u32 %v284, 4294901760
    %v537 = vsub.f32 %v284, %v536
    %v538 = vand.u32 %v537, 4294901760
    %v539 = vsub.f32 %v537, %v538
    %v540 = vand.u32 %v539, 4294901760
    %541 = vmatmul.mubr.f32.gmra.mxu0 %v540
    %v542 = vpop.f32.mrf.mxu0
    %v543 = vadd.f32 0.0, %v542
    %v544 = vpop.f32.mrf.mxu0
    %545 = vmatprep.mubr.f32.mxu0 0.0
    %v546 = vand.u32 %v287, 4294901760
    %v547 = vsub.f32 %v287, %v546
    %v548 = vand.u32 %v547, 4294901760
    %v549 = vsub.f32 %v547, %v548
    %v550 = vand.u32 %v549, 4294901760
    %551 = vmatmul.mubr.f32.gmra.mxu0 %v550
    %v552 = vpop.f32.mrf.mxu0
    %v553 = vadd.f32 0.0, %v552
    %v554 = vpop.f32.mrf.mxu0
    %555 = vmatprep.mubr.f32.mxu0 0.0
    %v556 = vand.u32 %v290, 4294901760
    %v557 = vsub.f32 %v290, %v556
    %v558 = vand.u32 %v557, 4294901760
    %v559 = vsub.f32 %v557, %v558
    %v560 = vand.u32 %v559, 4294901760
    %561 = vmatmul.mubr.f32.gmra.mxu0 %v560
    %v562 = vpop.f32.mrf.mxu0
    %v563 = vadd.f32 0.0, %v562
    %v564 = vpop.f32.mrf.mxu0
    %565 = vmatprep.mubr.f32.mxu0 0.0
    %v566 = vand.u32 %v293, 4294901760
    %v567 = vsub.f32 %v293, %v566
    %v568 = vand.u32 %v567, 4294901760
    %v569 = vsub.f32 %v567, %v568
    %v570 = vand.u32 %v569, 4294901760
    %571 = vmatmul.mubr.f32.gmra.mxu0 %v570
    %v572 = vpop.f32.mrf.mxu0
    %v573 = vadd.f32 0.0, %v572
    %v574 = vpop.f32.mrf.mxu0
    %575 = vmatprep.mubr.f32.mxu0 0.0
    %v576 = vand.u32 %v296, 4294901760
    %v577 = vsub.f32 %v296, %v576
    %v578 = vand.u32 %v577, 4294901760
    %v579 = vsub.f32 %v577, %v578
    %v580 = vand.u32 %v579, 4294901760
    %581 = vmatmul.mubr.f32.gmra.mxu0 %v580
    %v582 = vpop.f32.mrf.mxu0
    %v583 = vadd.f32 0.0, %v582
    %v584 = vpop.f32.mrf.mxu0
    %585 = vmatprep.mubr.f32.mxu0 0.0
    %v586 = vand.u32 %v299, 4294901760
    %v587 = vsub.f32 %v299, %v586
    %v588 = vand.u32 %v587, 4294901760
    %v589 = vsub.f32 %v587, %v588
    %v590 = vand.u32 %v589, 4294901760
    %591 = vmatmul.mubr.f32.gmra.mxu0 %v590
    %v592 = vpop.f32.mrf.mxu0
    %v593 = vadd.f32 0.0, %v592
    %v594 = vpop.f32.mrf.mxu0
    %595 = vmatprep.mubr.f32.mxu0 0.0
    %v596 = vand.u32 %v302, 4294901760
    %v597 = vsub.f32 %v302, %v596
    %v598 = vand.u32 %v597, 4294901760
    %v599 = vsub.f32 %v597, %v598
    %v600 = vand.u32 %v599, 4294901760
    %601 = vmatmul.mubr.f32.gmra.mxu0 %v600
    %v602 = vpop.f32.mrf.mxu0
    %v603 = vadd.f32 0.0, %v602
    %v604 = vpop.f32.mrf.mxu0
    %605 = vmatprep.mubr.f32.mxu0 0.0
    %v606 = vand.u32 %v305, 4294901760
    %v607 = vsub.f32 %v305, %v606
    %v608 = vand.u32 %v607, 4294901760
    %v609 = vsub.f32 %v607, %v608
    %v610 = vand.u32 %v609, 4294901760
    %611 = vmatmul.mubr.f32.gmra.mxu0 %v610
    %v612 = vpop.f32.mrf.mxu0
    %v613 = vadd.f32 0.0, %v612
    %v614 = vpop.f32.mrf.mxu0
    %615 = vmatprep.mubr.f32.mxu0 0.0
    %v616 = vand.u32 %v308, 4294901760
    %v617 = vsub.f32 %v308, %v616
    %v618 = vand.u32 %v617, 4294901760
    %v619 = vsub.f32 %v617, %v618
    %v620 = vand.u32 %v619, 4294901760
    %621 = vmatmul.mubr.f32.gmra.mxu0 %v620
    %v622 = vpop.f32.mrf.mxu0
    %v623 = vadd.f32 0.0, %v622
    %v624 = vpop.f32.mrf.mxu0
    %625 = vmatprep.mubr.f32.mxu0 0.0
    %v626 = vand.u32 %v311, 4294901760
    %v627 = vsub.f32 %v311, %v626
    %v628 = vand.u32 %v627, 4294901760
    %v629 = vsub.f32 %v627, %v628
    %v630 = vand.u32 %v629, 4294901760
    %631 = vmatmul.mubr.f32.gmra.mxu0 %v630
    %v632 = vpop.f32.mrf.mxu0
    %v633 = vadd.f32 0.0, %v632
    %v634 = vpop.f32.mrf.mxu0
    %635 = vmatprep.mubr.f32.mxu0 0.0
    %v636 = vand.u32 %v314, 4294901760
    %v637 = vsub.f32 %v314, %v636
    %v638 = vand.u32 %v637, 4294901760
    %v639 = vsub.f32 %v637, %v638
    %v640 = vand.u32 %v639, 4294901760
    %641 = vmatmul.mubr.f32.gmra.mxu0 %v640
    %v642 = vpop.f32.mrf.mxu0
    %v643 = vadd.f32 0.0, %v642
    %v644 = vpop.f32.mrf.mxu0
    %645 = vmatprep.mubr.f32.mxu0 0.0
    %v646 = vand.u32 %v317, 4294901760
    %v647 = vsub.f32 %v317, %v646
    %v648 = vand.u32 %v647, 4294901760
    %v649 = vsub.f32 %v647, %v648
    %v650 = vand.u32 %v649, 4294901760
    %651 = vmatmul.mubr.f32.gmra.mxu0 %v650
    %v652 = vpop.f32.mrf.mxu0
    %v653 = vadd.f32 0.0, %v652
    %v654 = vpop.f32.mrf.mxu0
    %655 = vmatprep.mubr.f32.mxu0 0.0
    %v656 = vand.u32 %v320, 4294901760
    %v657 = vsub.f32 %v320, %v656
    %v658 = vand.u32 %v657, 4294901760
    %v659 = vsub.f32 %v657, %v658
    %v660 = vand.u32 %v659, 4294901760
    %661 = vmatmul.mubr.f32.gmra.mxu0 %v660
    %v662 = vpop.f32.mrf.mxu0
    %v663 = vadd.f32 0.0, %v662
    %v664 = vpop.f32.mrf.mxu0
    %665 = vmatprep.mubr.f32.mxu0 0.0
    %v666 = vand.u32 %v323, 4294901760
    %v667 = vsub.f32 %v323, %v666
    %v668 = vand.u32 %v667, 4294901760
    %v669 = vsub.f32 %v667, %v668
    %v670 = vand.u32 %v669, 4294901760
    %671 = vmatmul.mubr.f32.gmra.mxu0 %v670
    %v672 = vpop.f32.mrf.mxu0
    %v673 = vadd.f32 0.0, %v672
    %v674 = vpop.f32.mrf.mxu0
    %675 = vmatprep.mubr.f32.mxu0 0.0
    %v676 = vand.u32 %v326, 4294901760
    %v677 = vsub.f32 %v326, %v676
    %v678 = vand.u32 %v677, 4294901760
    %v679 = vsub.f32 %v677, %v678
    %v680 = vand.u32 %v679, 4294901760
    %681 = vmatmul.mubr.f32.gmra.mxu0 %v680
    %v682 = vpop.f32.mrf.mxu0
    %v683 = vadd.f32 0.0, %v682
    %v684 = vpop.f32.mrf.mxu0
    %685 = vmatprep.mubr.f32.mxu0 0.0
    %v686 = vand.u32 %v329, 4294901760
    %v687 = vsub.f32 %v329, %v686
    %v688 = vand.u32 %v687, 4294901760
    %v689 = vsub.f32 %v687, %v688
    %v690 = vand.u32 %v689, 4294901760
    %691 = vmatmul.mubr.f32.gmra.mxu0 %v690
    %v692 = vpop.f32.mrf.mxu0
    %v693 = vadd.f32 0.0, %v692
    %v694 = vpop.f32.mrf.mxu0
    %695 = vmatprep.mubr.f32.mxu0 0.0
    %v696 = vand.u32 %v332, 4294901760
    %v697 = vsub.f32 %v332, %v696
    %v698 = vand.u32 %v697, 4294901760
    %v699 = vsub.f32 %v697, %v698
    %v700 = vand.u32 %v699, 4294901760
    %701 = vmatmul.mubr.f32.gmra.mxu0 %v700
    %v702 = vpop.f32.mrf.mxu0
    %v703 = vadd.f32 0.0, %v702
    %v704 = vpop.f32.mrf.mxu0
    %705 = vmatprep.mubr.f32.mxu0 0.0
    %v706 = vand.u32 %v335, 4294901760
    %v707 = vsub.f32 %v335, %v706
    %v708 = vand.u32 %v707, 4294901760
    %v709 = vsub.f32 %v707, %v708
    %v710 = vand.u32 %v709, 4294901760
    %711 = vmatmul.mubr.f32.gmra.mxu0 %v710
    %v712 = vpop.f32.mrf.mxu0
    %v713 = vadd.f32 0.0, %v712
    %v714 = vpop.f32.mrf.mxu0
    %715 = vmatprep.mubr.f32.mxu0 0.0
    %v716 = vand.u32 %v338, 4294901760
    %v717 = vsub.f32 %v338, %v716
    %v718 = vand.u32 %v717, 4294901760
    %v719 = vsub.f32 %v717, %v718
    %v720 = vand.u32 %v719, 4294901760
    %721 = vmatmul.mubr.f32.gmra.mxu0 %v720
    %v722 = vpop.f32.mrf.mxu0
    %v723 = vadd.f32 0.0, %v722
    %v724 = vpop.f32.mrf.mxu0
    %725 = vmatprep.mubr.f32.mxu0 0.0
    %v726 = vand.u32 %v341, 4294901760
    %v727 = vsub.f32 %v341, %v726
    %v728 = vand.u32 %v727, 4294901760
    %v729 = vsub.f32 %v727, %v728
    %v730 = vand.u32 %v729, 4294901760
    %731 = vmatmul.mubr.f32.gmra.mxu0 %v730
    %v732 = vpop.f32.mrf.mxu0
    %v733 = vadd.f32 0.0, %v732
    %v734 = vpop.f32.mrf.mxu0
    %735 = vdwg.mxu0
    %736 = vmatprep.subr.mxu0 0.0
    %737 = vmatpush1.msra.mxu0 0.0
    %738 = vmatprep.subr.mxu0 0.0
    %739 = vmatpush1.msra.mxu0 0.0
    %740 = vmatprep.subr.mxu0 0.0
    %741 = vmatpush1.msra.mxu0 0.0
    %742 = vmatprep.subr.mxu0 0.0
    %743 = vmatpush1.msra.mxu0 0.0
    %744 = vmatprep.subr.mxu0 0.0
    %745 = vmatpush1.msra.mxu0 0.0
    %746 = vmatprep.subr.mxu0 0.0
    %747 = vmatpush1.msra.mxu0 0.0
    %748 = vmatprep.subr.mxu0 0.0
    %749 = vmatpush1.msra.mxu0 0.0
    %750 = vmatprep.subr.mxu0 0.0
    %751 = vmatpush1.msra.mxu0 0.0
    %752 = vmatprep.subr.mxu0 0.0
    %v753 = vand.u32 %v245, 4294901760
    %v754 = vsub.f32 %v245, %v753
    %v755 = vand.u32 %v754, 4294901760
    %v756 = vsub.f32 %v754, %v755
    %v757 = vand.u32 %v756, 4294901760
    %758 = vmatpush1.msra.mxu0 %v757
    %759 = vmatprep.subr.mxu0 0.0
    %v760 = vand.u32 %v244, 4294901760
    %v761 = vsub.f32 %v244, %v760
    %v762 = vand.u32 %v761, 4294901760
    %v763 = vsub.f32 %v761, %v762
    %v764 = vand.u32 %v763, 4294901760
    %765 = vmatpush1.msra.mxu0 %v764
    %766 = vmatprep.subr.mxu0 0.0
    %v767 = vand.u32 %v243, 4294901760
    %v768 = vsub.f32 %v243, %v767
    %v769 = vand.u32 %v768, 4294901760
    %v770 = vsub.f32 %v768, %v769
    %v771 = vand.u32 %v770, 4294901760
    %772 = vmatpush1.msra.mxu0 %v771
    %773 = vmatprep.subr.mxu0 0.0
    %v774 = vand.u32 %v242, 4294901760
    %v775 = vsub.f32 %v242, %v774
    %v776 = vand.u32 %v775, 4294901760
    %v777 = vsub.f32 %v775, %v776
    %v778 = vand.u32 %v777, 4294901760
    %779 = vmatpush1.msra.mxu0 %v778
    %780 = vmatprep.subr.mxu0 0.0
    %v781 = vand.u32 %v241, 4294901760
    %v782 = vsub.f32 %v241, %v781
    %v783 = vand.u32 %v782, 4294901760
    %v784 = vsub.f32 %v782, %v783
    %v785 = vand.u32 %v784, 4294901760
    %786 = vmatpush1.msra.mxu0 %v785
    %787 = vmatprep.subr.mxu0 0.0
    %v788 = vand.u32 %v240, 4294901760
    %v789 = vsub.f32 %v240, %v788
    %v790 = vand.u32 %v789, 4294901760
    %v791 = vsub.f32 %v789, %v790
    %v792 = vand.u32 %v791, 4294901760
    %793 = vmatpush1.msra.mxu0 %v792
    %794 = vmatprep.subr.mxu0 0.0
    %v795 = vand.u32 %v239, 4294901760
    %v796 = vsub.f32 %v239, %v795
    %v797 = vand.u32 %v796, 4294901760
    %v798 = vsub.f32 %v796, %v797
    %v799 = vand.u32 %v798, 4294901760
    %800 = vmatpush1.msra.mxu0 %v799
    %801 = vmatprep.subr.mxu0 0.0
    %v802 = vand.u32 %v238, 4294901760
    %v803 = vsub.f32 %v238, %v802
    %v804 = vand.u32 %v803, 4294901760
    %v805 = vsub.f32 %v803, %v804
    %v806 = vand.u32 %v805, 4294901760
    %807 = vmatpush1.msra.mxu0 %v806
    %808 = vmatprep.subr.mxu0 0.0
    %809 = vmatpush2.msra.mxu0 0.0
    %810 = vmatprep.subr.mxu0 0.0
    %811 = vmatpush2.msra.mxu0 0.0
    %812 = vmatprep.subr.mxu0 0.0
    %813 = vmatpush2.msra.mxu0 0.0
    %814 = vmatprep.subr.mxu0 0.0
    %815 = vmatpush2.msra.mxu0 0.0
    %816 = vmatprep.subr.mxu0 0.0
    %817 = vmatpush2.msra.mxu0 0.0
    %818 = vmatprep.subr.mxu0 0.0
    %819 = vmatpush2.msra.mxu0 0.0
    %820 = vmatprep.subr.mxu0 0.0
    %821 = vmatpush2.msra.mxu0 0.0
    %822 = vmatprep.subr.mxu0 0.0
    %823 = vmatpush2.msra.mxu0 0.0
    %824 = vmatprep.subr.mxu0 0.0
    %825 = vmatpush2.msra.mxu0 0.0
    %826 = vmatprep.subr.mxu0 0.0
    %827 = vmatpush2.msra.mxu0 0.0
    %828 = vmatprep.subr.mxu0 0.0
    %829 = vmatpush2.msra.mxu0 0.0
    %830 = vmatprep.subr.mxu0 0.0
    %831 = vmatpush2.msra.mxu0 0.0
    %832 = vmatprep.subr.mxu0 0.0
    %833 = vmatpush2.msra.mxu0 0.0
    %834 = vmatprep.subr.mxu0 0.0
    %835 = vmatpush2.msra.mxu0 0.0
    %836 = vmatprep.subr.mxu0 0.0
    %837 = vmatpush2.msra.mxu0 0.0
    %838 = vmatprep.subr.mxu0 0.0
    %839 = vmatpush2.msra.mxu0 0.0
    %840 = vmatprep.mubr.f32.mxu0 0.0
    %v841 = vand.u32 %v248, 4294901760
    %842 = vmatmul.mubr.f32.gmra.mxu0 %v841
    %v843 = vpop.f32.mrf.mxu0
    %v844 = vadd.f32 %v423, %v843
    %v845 = vpop.f32.mrf.mxu0
    %846 = vmatprep.mubr.f32.mxu0 0.0
    %v847 = vand.u32 %v251, 4294901760
    %848 = vmatmul.mubr.f32.gmra.mxu0 %v847
    %v849 = vpop.f32.mrf.mxu0
    %v850 = vadd.f32 %v433, %v849
    %v851 = vpop.f32.mrf.mxu0
    %852 = vmatprep.mubr.f32.mxu0 0.0
    %v853 = vand.u32 %v254, 4294901760
    %854 = vmatmul.mubr.f32.gmra.mxu0 %v853
    %v855 = vpop.f32.mrf.mxu0
    %v856 = vadd.f32 %v443, %v855
    %v857 = vpop.f32.mrf.mxu0
    %858 = vmatprep.mubr.f32.mxu0 0.0
    %v859 = vand.u32 %v257, 4294901760
    %860 = vmatmul.mubr.f32.gmra.mxu0 %v859
    %v861 = vpop.f32.mrf.mxu0
    %v862 = vadd.f32 %v453, %v861
    %v863 = vpop.f32.mrf.mxu0
    %864 = vmatprep.mubr.f32.mxu0 0.0
    %v865 = vand.u32 %v260, 4294901760
    %866 = vmatmul.mubr.f32.gmra.mxu0 %v865
    %v867 = vpop.f32.mrf.mxu0
    %v868 = vadd.f32 %v463, %v867
    %v869 = vpop.f32.mrf.mxu0
    %870 = vmatprep.mubr.f32.mxu0 0.0
    %v871 = vand.u32 %v263, 4294901760
    %872 = vmatmul.mubr.f32.gmra.mxu0 %v871
    %v873 = vpop.f32.mrf.mxu0
    %v874 = vadd.f32 %v473, %v873
    %v875 = vpop.f32.mrf.mxu0
    %876 = vmatprep.mubr.f32.mxu0 0.0
    %v877 = vand.u32 %v266, 4294901760
    %878 = vmatmul.mubr.f32.gmra.mxu0 %v877
    %v879 = vpop.f32.mrf.mxu0
    %v880 = vadd.f32 %v483, %v879
    %v881 = vpop.f32.mrf.mxu0
    %882 = vmatprep.mubr.f32.mxu0 0.0
    %v883 = vand.u32 %v269, 4294901760
    %884 = vmatmul.mubr.f32.gmra.mxu0 %v883
    %v885 = vpop.f32.mrf.mxu0
    %v886 = vadd.f32 %v493, %v885
    %v887 = vpop.f32.mrf.mxu0
    %888 = vmatprep.mubr.f32.mxu0 0.0
    %v889 = vand.u32 %v272, 4294901760
    %890 = vmatmul.mubr.f32.gmra.mxu0 %v889
    %v891 = vpop.f32.mrf.mxu0
    %v892 = vadd.f32 %v503, %v891
    %v893 = vpop.f32.mrf.mxu0
    %894 = vmatprep.mubr.f32.mxu0 0.0
    %v895 = vand.u32 %v275, 4294901760
    %896 = vmatmul.mubr.f32.gmra.mxu0 %v895
    %v897 = vpop.f32.mrf.mxu0
    %v898 = vadd.f32 %v513, %v897
    %v899 = vpop.f32.mrf.mxu0
    %900 = vmatprep.mubr.f32.mxu0 0.0
    %v901 = vand.u32 %v278, 4294901760
    %902 = vmatmul.mubr.f32.gmra.mxu0 %v901
    %v903 = vpop.f32.mrf.mxu0
    %v904 = vadd.f32 %v523, %v903
    %v905 = vpop.f32.mrf.mxu0
    %906 = vmatprep.mubr.f32.mxu0 0.0
    %v907 = vand.u32 %v281, 4294901760
    %908 = vmatmul.mubr.f32.gmra.mxu0 %v907
    %v909 = vpop.f32.mrf.mxu0
    %v910 = vadd.f32 %v533, %v909
    %v911 = vpop.f32.mrf.mxu0
    %912 = vmatprep.mubr.f32.mxu0 0.0
    %v913 = vand.u32 %v284, 4294901760
    %914 = vmatmul.mubr.f32.gmra.mxu0 %v913
    %v915 = vpop.f32.mrf.mxu0
    %v916 = vadd.f32 %v543, %v915
    %v917 = vpop.f32.mrf.mxu0
    %918 = vmatprep.mubr.f32.mxu0 0.0
    %v919 = vand.u32 %v287, 4294901760
    %920 = vmatmul.mubr.f32.gmra.mxu0 %v919
    %v921 = vpop.f32.mrf.mxu0
    %v922 = vadd.f32 %v553, %v921
    %v923 = vpop.f32.mrf.mxu0
    %924 = vmatprep.mubr.f32.mxu0 0.0
    %v925 = vand.u32 %v290, 4294901760
    %926 = vmatmul.mubr.f32.gmra.mxu0 %v925
    %v927 = vpop.f32.mrf.mxu0
    %v928 = vadd.f32 %v563, %v927
    %v929 = vpop.f32.mrf.mxu0
    %930 = vmatprep.mubr.f32.mxu0 0.0
    %v931 = vand.u32 %v293, 4294901760
    %932 = vmatmul.mubr.f32.gmra.mxu0 %v931
    %v933 = vpop.f32.mrf.mxu0
    %v934 = vadd.f32 %v573, %v933
    %v935 = vpop.f32.mrf.mxu0
    %936 = vmatprep.mubr.f32.mxu0 0.0
    %v937 = vand.u32 %v296, 4294901760
    %938 = vmatmul.mubr.f32.gmra.mxu0 %v937
    %v939 = vpop.f32.mrf.mxu0
    %v940 = vadd.f32 %v583, %v939
    %v941 = vpop.f32.mrf.mxu0
    %942 = vmatprep.mubr.f32.mxu0 0.0
    %v943 = vand.u32 %v299, 4294901760
    %944 = vmatmul.mubr.f32.gmra.mxu0 %v943
    %v945 = vpop.f32.mrf.mxu0
    %v946 = vadd.f32 %v593, %v945
    %v947 = vpop.f32.mrf.mxu0
    %948 = vmatprep.mubr.f32.mxu0 0.0
    %v949 = vand.u32 %v302, 4294901760
    %950 = vmatmul.mubr.f32.gmra.mxu0 %v949
    %v951 = vpop.f32.mrf.mxu0
    %v952 = vadd.f32 %v603, %v951
    %v953 = vpop.f32.mrf.mxu0
    %954 = vmatprep.mubr.f32.mxu0 0.0
    %v955 = vand.u32 %v305, 4294901760
    %956 = vmatmul.mubr.f32.gmra.mxu0 %v955
    %v957 = vpop.f32.mrf.mxu0
    %v958 = vadd.f32 %v613, %v957
    %v959 = vpop.f32.mrf.mxu0
    %960 = vmatprep.mubr.f32.mxu0 0.0
    %v961 = vand.u32 %v308, 4294901760
    %962 = vmatmul.mubr.f32.gmra.mxu0 %v961
    %v963 = vpop.f32.mrf.mxu0
    %v964 = vadd.f32 %v623, %v963
    %v965 = vpop.f32.mrf.mxu0
    %966 = vmatprep.mubr.f32.mxu0 0.0
    %v967 = vand.u32 %v311, 4294901760
    %968 = vmatmul.mubr.f32.gmra.mxu0 %v967
    %v969 = vpop.f32.mrf.mxu0
    %v970 = vadd.f32 %v633, %v969
    %v971 = vpop.f32.mrf.mxu0
    %972 = vmatprep.mubr.f32.mxu0 0.0
    %v973 = vand.u32 %v314, 4294901760
    %974 = vmatmul.mubr.f32.gmra.mxu0 %v973
    %v975 = vpop.f32.mrf.mxu0
    %v976 = vadd.f32 %v643, %v975
    %v977 = vpop.f32.mrf.mxu0
    %978 = vmatprep.mubr.f32.mxu0 0.0
    %v979 = vand.u32 %v317, 4294901760
    %980 = vmatmul.mubr.f32.gmra.mxu0 %v979
    %v981 = vpop.f32.mrf.mxu0
    %v982 = vadd.f32 %v653, %v981
    %v983 = vpop.f32.mrf.mxu0
    %984 = vmatprep.mubr.f32.mxu0 0.0
    %v985 = vand.u32 %v320, 4294901760
    %986 = vmatmul.mubr.f32.gmra.mxu0 %v985
    %v987 = vpop.f32.mrf.mxu0
    %v988 = vadd.f32 %v663, %v987
    %v989 = vpop.f32.mrf.mxu0
    %990 = vmatprep.mubr.f32.mxu0 0.0
    %v991 = vand.u32 %v323, 4294901760
    %992 = vmatmul.mubr.f32.gmra.mxu0 %v991
    %v993 = vpop.f32.mrf.mxu0
    %v994 = vadd.f32 %v673, %v993
    %v995 = vpop.f32.mrf.mxu0
    %996 = vmatprep.mubr.f32.mxu0 0.0
    %v997 = vand.u32 %v326, 4294901760
    %998 = vmatmul.mubr.f32.gmra.mxu0 %v997
    %v999 = vpop.f32.mrf.mxu0
    %v1000 = vadd.f32 %v683, %v999
    %v1001 = vpop.f32.mrf.mxu0
    %1002 = vmatprep.mubr.f32.mxu0 0.0
    %v1003 = vand.u32 %v329, 4294901760
    %1004 = vmatmul.mubr.f32.gmra.mxu0 %v1003
    %v1005 = vpop.f32.mrf.mxu0
    %v1006 = vadd.f32 %v693, %v1005
    %v1007 = vpop.f32.mrf.mxu0
    %1008 = vmatprep.mubr.f32.mxu0 0.0
    %v1009 = vand.u32 %v332, 4294901760
    %1010 = vmatmul.mubr.f32.gmra.mxu0 %v1009
    %v1011 = vpop.f32.mrf.mxu0
    %v1012 = vadd.f32 %v703, %v1011
    %v1013 = vpop.f32.mrf.mxu0
    %1014 = vmatprep.mubr.f32.mxu0 0.0
    %v1015 = vand.u32 %v335, 4294901760
    %1016 = vmatmul.mubr.f32.gmra.mxu0 %v1015
    %v1017 = vpop.f32.mrf.mxu0
    %v1018 = vadd.f32 %v713, %v1017
    %v1019 = vpop.f32.mrf.mxu0
    %1020 = vmatprep.mubr.f32.mxu0 0.0
    %v1021 = vand.u32 %v338, 4294901760
    %1022 = vmatmul.mubr.f32.gmra.mxu0 %v1021
    %v1023 = vpop.f32.mrf.mxu0
    %v1024 = vadd.f32 %v723, %v1023
    %v1025 = vpop.f32.mrf.mxu0
    %1026 = vmatprep.mubr.f32.mxu0 0.0
    %v1027 = vand.u32 %v341, 4294901760
    %1028 = vmatmul.mubr.f32.gmra.mxu0 %v1027
    %v1029 = vpop.f32.mrf.mxu0
    %v1030 = vadd.f32 %v733, %v1029
    %v1031 = vpop.f32.mrf.mxu0
    %1032 = vdwg.mxu0
    %1033 = vmatprep.subr.mxu0 0.0
    %1034 = vmatpush1.msra.mxu0 0.0
    %1035 = vmatprep.subr.mxu0 0.0
    %1036 = vmatpush1.msra.mxu0 0.0
    %1037 = vmatprep.subr.mxu0 0.0
    %1038 = vmatpush1.msra.mxu0 0.0
    %1039 = vmatprep.subr.mxu0 0.0
    %1040 = vmatpush1.msra.mxu0 0.0
    %1041 = vmatprep.subr.mxu0 0.0
    %1042 = vmatpush1.msra.mxu0 0.0
    %1043 = vmatprep.subr.mxu0 0.0
    %1044 = vmatpush1.msra.mxu0 0.0
    %1045 = vmatprep.subr.mxu0 0.0
    %1046 = vmatpush1.msra.mxu0 0.0
    %1047 = vmatprep.subr.mxu0 0.0
    %1048 = vmatpush1.msra.mxu0 0.0
    %1049 = vmatprep.subr.mxu0 0.0
    %v1050 = vand.u32 %v245, 4294901760
    %v1051 = vsub.f32 %v245, %v1050
    %1052 = vmatpush1.msra.mxu0 %v1051
    %1053 = vmatprep.subr.mxu0 0.0
    %v1054 = vand.u32 %v244, 4294901760
    %v1055 = vsub.f32 %v244, %v1054
    %1056 = vmatpush1.msra.mxu0 %v1055
    %1057 = vmatprep.subr.mxu0 0.0
    %v1058 = vand.u32 %v243, 4294901760
    %v1059 = vsub.f32 %v243, %v1058
    %1060 = vmatpush1.msra.mxu0 %v1059
    %1061 = vmatprep.subr.mxu0 0.0
    %v1062 = vand.u32 %v242, 4294901760
    %v1063 = vsub.f32 %v242, %v1062
    %1064 = vmatpush1.msra.mxu0 %v1063
    %1065 = vmatprep.subr.mxu0 0.0
    %v1066 = vand.u32 %v241, 4294901760
    %v1067 = vsub.f32 %v241, %v1066
    %1068 = vmatpush1.msra.mxu0 %v1067
    %1069 = vmatprep.subr.mxu0 0.0
    %v1070 = vand.u32 %v240, 4294901760
    %v1071 = vsub.f32 %v240, %v1070
    %1072 = vmatpush1.msra.mxu0 %v1071
    %1073 = vmatprep.subr.mxu0 0.0
    %v1074 = vand.u32 %v239, 4294901760
    %v1075 = vsub.f32 %v239, %v1074
    %1076 = vmatpush1.msra.mxu0 %v1075
    %1077 = vmatprep.subr.mxu0 0.0
    %v1078 = vand.u32 %v238, 4294901760
    %v1079 = vsub.f32 %v238, %v1078
    %1080 = vmatpush1.msra.mxu0 %v1079
    %1081 = vmatprep.subr.mxu0 0.0
    %1082 = vmatpush2.msra.mxu0 0.0
    %1083 = vmatprep.subr.mxu0 0.0
    %1084 = vmatpush2.msra.mxu0 0.0
    %1085 = vmatprep.subr.mxu0 0.0
    %1086 = vmatpush2.msra.mxu0 0.0
    %1087 = vmatprep.subr.mxu0 0.0
    %1088 = vmatpush2.msra.mxu0 0.0
    %1089 = vmatprep.subr.mxu0 0.0
    %1090 = vmatpush2.msra.mxu0 0.0
    %1091 = vmatprep.subr.mxu0 0.0
    %1092 = vmatpush2.msra.mxu0 0.0
    %1093 = vmatprep.subr.mxu0 0.0
    %1094 = vmatpush2.msra.mxu0 0.0
    %1095 = vmatprep.subr.mxu0 0.0
    %1096 = vmatpush2.msra.mxu0 0.0
    %1097 = vmatprep.subr.mxu0 0.0
    %1098 = vmatpush2.msra.mxu0 0.0
    %1099 = vmatprep.subr.mxu0 0.0
    %1100 = vmatpush2.msra.mxu0 0.0
    %1101 = vmatprep.subr.mxu0 0.0
    %1102 = vmatpush2.msra.mxu0 0.0
    %1103 = vmatprep.subr.mxu0 0.0
    %1104 = vmatpush2.msra.mxu0 0.0
    %1105 = vmatprep.subr.mxu0 0.0
    %1106 = vmatpush2.msra.mxu0 0.0
    %1107 = vmatprep.subr.mxu0 0.0
    %1108 = vmatpush2.msra.mxu0 0.0
    %1109 = vmatprep.subr.mxu0 0.0
    %1110 = vmatpush2.msra.mxu0 0.0
    %1111 = vmatprep.subr.mxu0 0.0
    %1112 = vmatpush2.msra.mxu0 0.0
    %1113 = vmatprep.mubr.f32.mxu0 0.0
    %v1114 = vand.u32 %v248, 4294901760
    %v1115 = vsub.f32 %v248, %v1114
    %1116 = vmatmul.mubr.f32.gmra.mxu0 %v1115
    %v1117 = vpop.f32.mrf.mxu0
    %v1118 = vadd.f32 %v844, %v1117
    %v1119 = vpop.f32.mrf.mxu0
    %1120 = vmatprep.mubr.f32.mxu0 0.0
    %v1121 = vand.u32 %v251, 4294901760
    %v1122 = vsub.f32 %v251, %v1121
    %1123 = vmatmul.mubr.f32.gmra.mxu0 %v1122
    %v1124 = vpop.f32.mrf.mxu0
    %v1125 = vadd.f32 %v850, %v1124
    %v1126 = vpop.f32.mrf.mxu0
    %1127 = vmatprep.mubr.f32.mxu0 0.0
    %v1128 = vand.u32 %v254, 4294901760
    %v1129 = vsub.f32 %v254, %v1128
    %1130 = vmatmul.mubr.f32.gmra.mxu0 %v1129
    %v1131 = vpop.f32.mrf.mxu0
    %v1132 = vadd.f32 %v856, %v1131
    %v1133 = vpop.f32.mrf.mxu0
    %1134 = vmatprep.mubr.f32.mxu0 0.0
    %v1135 = vand.u32 %v257, 4294901760
    %v1136 = vsub.f32 %v257, %v1135
    %1137 = vmatmul.mubr.f32.gmra.mxu0 %v1136
    %v1138 = vpop.f32.mrf.mxu0
    %v1139 = vadd.f32 %v862, %v1138
    %v1140 = vpop.f32.mrf.mxu0
    %1141 = vmatprep.mubr.f32.mxu0 0.0
    %v1142 = vand.u32 %v260, 4294901760
    %v1143 = vsub.f32 %v260, %v1142
    %1144 = vmatmul.mubr.f32.gmra.mxu0 %v1143
    %v1145 = vpop.f32.mrf.mxu0
    %v1146 = vadd.f32 %v868, %v1145
    %v1147 = vpop.f32.mrf.mxu0
    %1148 = vmatprep.mubr.f32.mxu0 0.0
    %v1149 = vand.u32 %v263, 4294901760
    %v1150 = vsub.f32 %v263, %v1149
    %1151 = vmatmul.mubr.f32.gmra.mxu0 %v1150
    %v1152 = vpop.f32.mrf.mxu0
    %v1153 = vadd.f32 %v874, %v1152
    %v1154 = vpop.f32.mrf.mxu0
    %1155 = vmatprep.mubr.f32.mxu0 0.0
    %v1156 = vand.u32 %v266, 4294901760
    %v1157 = vsub.f32 %v266, %v1156
    %1158 = vmatmul.mubr.f32.gmra.mxu0 %v1157
    %v1159 = vpop.f32.mrf.mxu0
    %v1160 = vadd.f32 %v880, %v1159
    %v1161 = vpop.f32.mrf.mxu0
    %1162 = vmatprep.mubr.f32.mxu0 0.0
    %v1163 = vand.u32 %v269, 4294901760
    %v1164 = vsub.f32 %v269, %v1163
    %1165 = vmatmul.mubr.f32.gmra.mxu0 %v1164
    %v1166 = vpop.f32.mrf.mxu0
    %v1167 = vadd.f32 %v886, %v1166
    %v1168 = vpop.f32.mrf.mxu0
    %1169 = vmatprep.mubr.f32.mxu0 0.0
    %v1170 = vand.u32 %v272, 4294901760
    %v1171 = vsub.f32 %v272, %v1170
    %1172 = vmatmul.mubr.f32.gmra.mxu0 %v1171
    %v1173 = vpop.f32.mrf.mxu0
    %v1174 = vadd.f32 %v892, %v1173
    %v1175 = vpop.f32.mrf.mxu0
    %1176 = vmatprep.mubr.f32.mxu0 0.0
    %v1177 = vand.u32 %v275, 4294901760
    %v1178 = vsub.f32 %v275, %v1177
    %1179 = vmatmul.mubr.f32.gmra.mxu0 %v1178
    %v1180 = vpop.f32.mrf.mxu0
    %v1181 = vadd.f32 %v898, %v1180
    %v1182 = vpop.f32.mrf.mxu0
    %1183 = vmatprep.mubr.f32.mxu0 0.0
    %v1184 = vand.u32 %v278, 4294901760
    %v1185 = vsub.f32 %v278, %v1184
    %1186 = vmatmul.mubr.f32.gmra.mxu0 %v1185
    %v1187 = vpop.f32.mrf.mxu0
    %v1188 = vadd.f32 %v904, %v1187
    %v1189 = vpop.f32.mrf.mxu0
    %1190 = vmatprep.mubr.f32.mxu0 0.0
    %v1191 = vand.u32 %v281, 4294901760
    %v1192 = vsub.f32 %v281, %v1191
    %1193 = vmatmul.mubr.f32.gmra.mxu0 %v1192
    %v1194 = vpop.f32.mrf.mxu0
    %v1195 = vadd.f32 %v910, %v1194
    %v1196 = vpop.f32.mrf.mxu0
    %1197 = vmatprep.mubr.f32.mxu0 0.0
    %v1198 = vand.u32 %v284, 4294901760
    %v1199 = vsub.f32 %v284, %v1198
    %1200 = vmatmul.mubr.f32.gmra.mxu0 %v1199
    %v1201 = vpop.f32.mrf.mxu0
    %v1202 = vadd.f32 %v916, %v1201
    %v1203 = vpop.f32.mrf.mxu0
    %1204 = vmatprep.mubr.f32.mxu0 0.0
    %v1205 = vand.u32 %v287, 4294901760
    %v1206 = vsub.f32 %v287, %v1205
    %1207 = vmatmul.mubr.f32.gmra.mxu0 %v1206
    %v1208 = vpop.f32.mrf.mxu0
    %v1209 = vadd.f32 %v922, %v1208
    %v1210 = vpop.f32.mrf.mxu0
    %1211 = vmatprep.mubr.f32.mxu0 0.0
    %v1212 = vand.u32 %v290, 4294901760
    %v1213 = vsub.f32 %v290, %v1212
    %1214 = vmatmul.mubr.f32.gmra.mxu0 %v1213
    %v1215 = vpop.f32.mrf.mxu0
    %v1216 = vadd.f32 %v928, %v1215
    %v1217 = vpop.f32.mrf.mxu0
    %1218 = vmatprep.mubr.f32.mxu0 0.0
    %v1219 = vand.u32 %v293, 4294901760
    %v1220 = vsub.f32 %v293, %v1219
    %1221 = vmatmul.mubr.f32.gmra.mxu0 %v1220
    %v1222 = vpop.f32.mrf.mxu0
    %v1223 = vadd.f32 %v934, %v1222
    %v1224 = vpop.f32.mrf.mxu0
    %1225 = vmatprep.mubr.f32.mxu0 0.0
    %v1226 = vand.u32 %v296, 4294901760
    %v1227 = vsub.f32 %v296, %v1226
    %1228 = vmatmul.mubr.f32.gmra.mxu0 %v1227
    %v1229 = vpop.f32.mrf.mxu0
    %v1230 = vadd.f32 %v940, %v1229
    %v1231 = vpop.f32.mrf.mxu0
    %1232 = vmatprep.mubr.f32.mxu0 0.0
    %v1233 = vand.u32 %v299, 4294901760
    %v1234 = vsub.f32 %v299, %v1233
    %1235 = vmatmul.mubr.f32.gmra.mxu0 %v1234
    %v1236 = vpop.f32.mrf.mxu0
    %v1237 = vadd.f32 %v946, %v1236
    %v1238 = vpop.f32.mrf.mxu0
    %1239 = vmatprep.mubr.f32.mxu0 0.0
    %v1240 = vand.u32 %v302, 4294901760
    %v1241 = vsub.f32 %v302, %v1240
    %1242 = vmatmul.mubr.f32.gmra.mxu0 %v1241
    %v1243 = vpop.f32.mrf.mxu0
    %v1244 = vadd.f32 %v952, %v1243
    %v1245 = vpop.f32.mrf.mxu0
    %1246 = vmatprep.mubr.f32.mxu0 0.0
    %v1247 = vand.u32 %v305, 4294901760
    %v1248 = vsub.f32 %v305, %v1247
    %1249 = vmatmul.mubr.f32.gmra.mxu0 %v1248
    %v1250 = vpop.f32.mrf.mxu0
    %v1251 = vadd.f32 %v958, %v1250
    %v1252 = vpop.f32.mrf.mxu0
    %1253 = vmatprep.mubr.f32.mxu0 0.0
    %v1254 = vand.u32 %v308, 4294901760
    %v1255 = vsub.f32 %v308, %v1254
    %1256 = vmatmul.mubr.f32.gmra.mxu0 %v1255
    %v1257 = vpop.f32.mrf.mxu0
    %v1258 = vadd.f32 %v964, %v1257
    %v1259 = vpop.f32.mrf.mxu0
    %1260 = vmatprep.mubr.f32.mxu0 0.0
    %v1261 = vand.u32 %v311, 4294901760
    %v1262 = vsub.f32 %v311, %v1261
    %1263 = vmatmul.mubr.f32.gmra.mxu0 %v1262
    %v1264 = vpop.f32.mrf.mxu0
    %v1265 = vadd.f32 %v970, %v1264
    %v1266 = vpop.f32.mrf.mxu0
    %1267 = vmatprep.mubr.f32.mxu0 0.0
    %v1268 = vand.u32 %v314, 4294901760
    %v1269 = vsub.f32 %v314, %v1268
    %1270 = vmatmul.mubr.f32.gmra.mxu0 %v1269
    %v1271 = vpop.f32.mrf.mxu0
    %v1272 = vadd.f32 %v976, %v1271
    %v1273 = vpop.f32.mrf.mxu0
    %1274 = vmatprep.mubr.f32.mxu0 0.0
    %v1275 = vand.u32 %v317, 4294901760
    %v1276 = vsub.f32 %v317, %v1275
    %1277 = vmatmul.mubr.f32.gmra.mxu0 %v1276
    %v1278 = vpop.f32.mrf.mxu0
    %v1279 = vadd.f32 %v982, %v1278
    %v1280 = vpop.f32.mrf.mxu0
    %1281 = vmatprep.mubr.f32.mxu0 0.0
    %v1282 = vand.u32 %v320, 4294901760
    %v1283 = vsub.f32 %v320, %v1282
    %1284 = vmatmul.mubr.f32.gmra.mxu0 %v1283
    %v1285 = vpop.f32.mrf.mxu0
    %v1286 = vadd.f32 %v988, %v1285
    %v1287 = vpop.f32.mrf.mxu0
    %1288 = vmatprep.mubr.f32.mxu0 0.0
    %v1289 = vand.u32 %v323, 4294901760
    %v1290 = vsub.f32 %v323, %v1289
    %1291 = vmatmul.mubr.f32.gmra.mxu0 %v1290
    %v1292 = vpop.f32.mrf.mxu0
    %v1293 = vadd.f32 %v994, %v1292
    %v1294 = vpop.f32.mrf.mxu0
    %1295 = vmatprep.mubr.f32.mxu0 0.0
    %v1296 = vand.u32 %v326, 4294901760
    %v1297 = vsub.f32 %v326, %v1296
    %1298 = vmatmul.mubr.f32.gmra.mxu0 %v1297
    %v1299 = vpop.f32.mrf.mxu0
    %v1300 = vadd.f32 %v1000, %v1299
    %v1301 = vpop.f32.mrf.mxu0
    %1302 = vmatprep.mubr.f32.mxu0 0.0
    %v1303 = vand.u32 %v329, 4294901760
    %v1304 = vsub.f32 %v329, %v1303
    %1305 = vmatmul.mubr.f32.gmra.mxu0 %v1304
    %v1306 = vpop.f32.mrf.mxu0
    %v1307 = vadd.f32 %v1006, %v1306
    %v1308 = vpop.f32.mrf.mxu0
    %1309 = vmatprep.mubr.f32.mxu0 0.0
    %v1310 = vand.u32 %v332, 4294901760
    %v1311 = vsub.f32 %v332, %v1310
    %1312 = vmatmul.mubr.f32.gmra.mxu0 %v1311
    %v1313 = vpop.f32.mrf.mxu0
    %v1314 = vadd.f32 %v1012, %v1313
    %v1315 = vpop.f32.mrf.mxu0
    %1316 = vmatprep.mubr.f32.mxu0 0.0
    %v1317 = vand.u32 %v335, 4294901760
    %v1318 = vsub.f32 %v335, %v1317
    %1319 = vmatmul.mubr.f32.gmra.mxu0 %v1318
    %v1320 = vpop.f32.mrf.mxu0
    %v1321 = vadd.f32 %v1018, %v1320
    %v1322 = vpop.f32.mrf.mxu0
    %1323 = vmatprep.mubr.f32.mxu0 0.0
    %v1324 = vand.u32 %v338, 4294901760
    %v1325 = vsub.f32 %v338, %v1324
    %1326 = vmatmul.mubr.f32.gmra.mxu0 %v1325
    %v1327 = vpop.f32.mrf.mxu0
    %v1328 = vadd.f32 %v1024, %v1327
    %v1329 = vpop.f32.mrf.mxu0
    %1330 = vmatprep.mubr.f32.mxu0 0.0
    %v1331 = vand.u32 %v341, 4294901760
    %v1332 = vsub.f32 %v341, %v1331
    %1333 = vmatmul.mubr.f32.gmra.mxu0 %v1332
    %v1334 = vpop.f32.mrf.mxu0
    %v1335 = vadd.f32 %v1030, %v1334
    %v1336 = vpop.f32.mrf.mxu0
    %1337 = vdwg.mxu0
    %1338 = vmatprep.subr.mxu0 0.0
    %1339 = vmatpush1.msra.mxu0 0.0
    %1340 = vmatprep.subr.mxu0 0.0
    %1341 = vmatpush1.msra.mxu0 0.0
    %1342 = vmatprep.subr.mxu0 0.0
    %1343 = vmatpush1.msra.mxu0 0.0
    %1344 = vmatprep.subr.mxu0 0.0
    %1345 = vmatpush1.msra.mxu0 0.0
    %1346 = vmatprep.subr.mxu0 0.0
    %1347 = vmatpush1.msra.mxu0 0.0
    %1348 = vmatprep.subr.mxu0 0.0
    %1349 = vmatpush1.msra.mxu0 0.0
    %1350 = vmatprep.subr.mxu0 0.0
    %1351 = vmatpush1.msra.mxu0 0.0
    %1352 = vmatprep.subr.mxu0 0.0
    %1353 = vmatpush1.msra.mxu0 0.0
    %1354 = vmatprep.subr.mxu0 0.0
    %v1355 = vand.u32 %v245, 4294901760
    %1356 = vmatpush1.msra.mxu0 %v1355
    %1357 = vmatprep.subr.mxu0 0.0
    %v1358 = vand.u32 %v244, 4294901760
    %1359 = vmatpush1.msra.mxu0 %v1358
    %1360 = vmatprep.subr.mxu0 0.0
    %v1361 = vand.u32 %v243, 4294901760
    %1362 = vmatpush1.msra.mxu0 %v1361
    %1363 = vmatprep.subr.mxu0 0.0
    %v1364 = vand.u32 %v242, 4294901760
    %1365 = vmatpush1.msra.mxu0 %v1364
    %1366 = vmatprep.subr.mxu0 0.0
    %v1367 = vand.u32 %v241, 4294901760
    %1368 = vmatpush1.msra.mxu0 %v1367
    %1369 = vmatprep.subr.mxu0 0.0
    %v1370 = vand.u32 %v240, 4294901760
    %1371 = vmatpush1.msra.mxu0 %v1370
    %1372 = vmatprep.subr.mxu0 0.0
    %v1373 = vand.u32 %v239, 4294901760
    %1374 = vmatpush1.msra.mxu0 %v1373
    %1375 = vmatprep.subr.mxu0 0.0
    %v1376 = vand.u32 %v238, 4294901760
    %1377 = vmatpush1.msra.mxu0 %v1376
    %1378 = vmatprep.subr.mxu0 0.0
    %1379 = vmatpush2.msra.mxu0 0.0
    %1380 = vmatprep.subr.mxu0 0.0
    %1381 = vmatpush2.msra.mxu0 0.0
    %1382 = vmatprep.subr.mxu0 0.0
    %1383 = vmatpush2.msra.mxu0 0.0
    %1384 = vmatprep.subr.mxu0 0.0
    %1385 = vmatpush2.msra.mxu0 0.0
    %1386 = vmatprep.subr.mxu0 0.0
    %1387 = vmatpush2.msra.mxu0 0.0
    %1388 = vmatprep.subr.mxu0 0.0
    %1389 = vmatpush2.msra.mxu0 0.0
    %1390 = vmatprep.subr.mxu0 0.0
    %1391 = vmatpush2.msra.mxu0 0.0
    %1392 = vmatprep.subr.mxu0 0.0
    %1393 = vmatpush2.msra.mxu0 0.0
    %1394 = vmatprep.subr.mxu0 0.0
    %1395 = vmatpush2.msra.mxu0 0.0
    %1396 = vmatprep.subr.mxu0 0.0
    %1397 = vmatpush2.msra.mxu0 0.0
    %1398 = vmatprep.subr.mxu0 0.0
    %1399 = vmatpush2.msra.mxu0 0.0
    %1400 = vmatprep.subr.mxu0 0.0
    %1401 = vmatpush2.msra.mxu0 0.0
    %1402 = vmatprep.subr.mxu0 0.0
    %1403 = vmatpush2.msra.mxu0 0.0
    %1404 = vmatprep.subr.mxu0 0.0
    %1405 = vmatpush2.msra.mxu0 0.0
    %1406 = vmatprep.subr.mxu0 0.0
    %1407 = vmatpush2.msra.mxu0 0.0
    %1408 = vmatprep.subr.mxu0 0.0
    %1409 = vmatpush2.msra.mxu0 0.0
    %1410 = vmatprep.mubr.f32.mxu0 0.0
    %v1411 = vand.u32 %v248, 4294901760
    %v1412 = vsub.f32 %v248, %v1411
    %v1413 = vand.u32 %v1412, 4294901760
    %1414 = vmatmul.mubr.f32.gmra.mxu0 %v1413
    %v1415 = vpop.f32.mrf.mxu0
    %v1416 = vadd.f32 %v1118, %v1415
    %v1417 = vpop.f32.mrf.mxu0
    %1418 = vmatprep.mubr.f32.mxu0 0.0
    %v1419 = vand.u32 %v251, 4294901760
    %v1420 = vsub.f32 %v251, %v1419
    %v1421 = vand.u32 %v1420, 4294901760
    %1422 = vmatmul.mubr.f32.gmra.mxu0 %v1421
    %v1423 = vpop.f32.mrf.mxu0
    %v1424 = vadd.f32 %v1125, %v1423
    %v1425 = vpop.f32.mrf.mxu0
    %1426 = vmatprep.mubr.f32.mxu0 0.0
    %v1427 = vand.u32 %v254, 4294901760
    %v1428 = vsub.f32 %v254, %v1427
    %v1429 = vand.u32 %v1428, 4294901760
    %1430 = vmatmul.mubr.f32.gmra.mxu0 %v1429
    %v1431 = vpop.f32.mrf.mxu0
    %v1432 = vadd.f32 %v1132, %v1431
    %v1433 = vpop.f32.mrf.mxu0
    %1434 = vmatprep.mubr.f32.mxu0 0.0
    %v1435 = vand.u32 %v257, 4294901760
    %v1436 = vsub.f32 %v257, %v1435
    %v1437 = vand.u32 %v1436, 4294901760
    %1438 = vmatmul.mubr.f32.gmra.mxu0 %v1437
    %v1439 = vpop.f32.mrf.mxu0
    %v1440 = vadd.f32 %v1139, %v1439
    %v1441 = vpop.f32.mrf.mxu0
    %1442 = vmatprep.mubr.f32.mxu0 0.0
    %v1443 = vand.u32 %v260, 4294901760
    %v1444 = vsub.f32 %v260, %v1443
    %v1445 = vand.u32 %v1444, 4294901760
    %1446 = vmatmul.mubr.f32.gmra.mxu0 %v1445
    %v1447 = vpop.f32.mrf.mxu0
    %v1448 = vadd.f32 %v1146, %v1447
    %v1449 = vpop.f32.mrf.mxu0
    %1450 = vmatprep.mubr.f32.mxu0 0.0
    %v1451 = vand.u32 %v263, 4294901760
    %v1452 = vsub.f32 %v263, %v1451
    %v1453 = vand.u32 %v1452, 4294901760
    %1454 = vmatmul.mubr.f32.gmra.mxu0 %v1453
    %v1455 = vpop.f32.mrf.mxu0
    %v1456 = vadd.f32 %v1153, %v1455
    %v1457 = vpop.f32.mrf.mxu0
    %1458 = vmatprep.mubr.f32.mxu0 0.0
    %v1459 = vand.u32 %v266, 4294901760
    %v1460 = vsub.f32 %v266, %v1459
    %v1461 = vand.u32 %v1460, 4294901760
    %1462 = vmatmul.mubr.f32.gmra.mxu0 %v1461
    %v1463 = vpop.f32.mrf.mxu0
    %v1464 = vadd.f32 %v1160, %v1463
    %v1465 = vpop.f32.mrf.mxu0
    %1466 = vmatprep.mubr.f32.mxu0 0.0
    %v1467 = vand.u32 %v269, 4294901760
    %v1468 = vsub.f32 %v269, %v1467
    %v1469 = vand.u32 %v1468, 4294901760
    %1470 = vmatmul.mubr.f32.gmra.mxu0 %v1469
    %v1471 = vpop.f32.mrf.mxu0
    %v1472 = vadd.f32 %v1167, %v1471
    %v1473 = vpop.f32.mrf.mxu0
    %1474 = vmatprep.mubr.f32.mxu0 0.0
    %v1475 = vand.u32 %v272, 4294901760
    %v1476 = vsub.f32 %v272, %v1475
    %v1477 = vand.u32 %v1476, 4294901760
    %1478 = vmatmul.mubr.f32.gmra.mxu0 %v1477
    %v1479 = vpop.f32.mrf.mxu0
    %v1480 = vadd.f32 %v1174, %v1479
    %v1481 = vpop.f32.mrf.mxu0
    %1482 = vmatprep.mubr.f32.mxu0 0.0
    %v1483 = vand.u32 %v275, 4294901760
    %v1484 = vsub.f32 %v275, %v1483
    %v1485 = vand.u32 %v1484, 4294901760
    %1486 = vmatmul.mubr.f32.gmra.mxu0 %v1485
    %v1487 = vpop.f32.mrf.mxu0
    %v1488 = vadd.f32 %v1181, %v1487
    %v1489 = vpop.f32.mrf.mxu0
    %1490 = vmatprep.mubr.f32.mxu0 0.0
    %v1491 = vand.u32 %v278, 4294901760
    %v1492 = vsub.f32 %v278, %v1491
    %v1493 = vand.u32 %v1492, 4294901760
    %1494 = vmatmul.mubr.f32.gmra.mxu0 %v1493
    %v1495 = vpop.f32.mrf.mxu0
    %v1496 = vadd.f32 %v1188, %v1495
    %v1497 = vpop.f32.mrf.mxu0
    %1498 = vmatprep.mubr.f32.mxu0 0.0
    %v1499 = vand.u32 %v281, 4294901760
    %v1500 = vsub.f32 %v281, %v1499
    %v1501 = vand.u32 %v1500, 4294901760
    %1502 = vmatmul.mubr.f32.gmra.mxu0 %v1501
    %v1503 = vpop.f32.mrf.mxu0
    %v1504 = vadd.f32 %v1195, %v1503
    %v1505 = vpop.f32.mrf.mxu0
    %1506 = vmatprep.mubr.f32.mxu0 0.0
    %v1507 = vand.u32 %v284, 4294901760
    %v1508 = vsub.f32 %v284, %v1507
    %v1509 = vand.u32 %v1508, 4294901760
    %1510 = vmatmul.mubr.f32.gmra.mxu0 %v1509
    %v1511 = vpop.f32.mrf.mxu0
    %v1512 = vadd.f32 %v1202, %v1511
    %v1513 = vpop.f32.mrf.mxu0
    %1514 = vmatprep.mubr.f32.mxu0 0.0
    %v1515 = vand.u32 %v287, 4294901760
    %v1516 = vsub.f32 %v287, %v1515
    %v1517 = vand.u32 %v1516, 4294901760
    %1518 = vmatmul.mubr.f32.gmra.mxu0 %v1517
    %v1519 = vpop.f32.mrf.mxu0
    %v1520 = vadd.f32 %v1209, %v1519
    %v1521 = vpop.f32.mrf.mxu0
    %1522 = vmatprep.mubr.f32.mxu0 0.0
    %v1523 = vand.u32 %v290, 4294901760
    %v1524 = vsub.f32 %v290, %v1523
    %v1525 = vand.u32 %v1524, 4294901760
    %1526 = vmatmul.mubr.f32.gmra.mxu0 %v1525
    %v1527 = vpop.f32.mrf.mxu0
    %v1528 = vadd.f32 %v1216, %v1527
    %v1529 = vpop.f32.mrf.mxu0
    %1530 = vmatprep.mubr.f32.mxu0 0.0
    %v1531 = vand.u32 %v293, 4294901760
    %v1532 = vsub.f32 %v293, %v1531
    %v1533 = vand.u32 %v1532, 4294901760
    %1534 = vmatmul.mubr.f32.gmra.mxu0 %v1533
    %v1535 = vpop.f32.mrf.mxu0
    %v1536 = vadd.f32 %v1223, %v1535
    %v1537 = vpop.f32.mrf.mxu0
    %1538 = vmatprep.mubr.f32.mxu0 0.0
    %v1539 = vand.u32 %v296, 4294901760
    %v1540 = vsub.f32 %v296, %v1539
    %v1541 = vand.u32 %v1540, 4294901760
    %1542 = vmatmul.mubr.f32.gmra.mxu0 %v1541
    %v1543 = vpop.f32.mrf.mxu0
    %v1544 = vadd.f32 %v1230, %v1543
    %v1545 = vpop.f32.mrf.mxu0
    %1546 = vmatprep.mubr.f32.mxu0 0.0
    %v1547 = vand.u32 %v299, 4294901760
    %v1548 = vsub.f32 %v299, %v1547
    %v1549 = vand.u32 %v1548, 4294901760
    %1550 = vmatmul.mubr.f32.gmra.mxu0 %v1549
    %v1551 = vpop.f32.mrf.mxu0
    %v1552 = vadd.f32 %v1237, %v1551
    %v1553 = vpop.f32.mrf.mxu0
    %1554 = vmatprep.mubr.f32.mxu0 0.0
    %v1555 = vand.u32 %v302, 4294901760
    %v1556 = vsub.f32 %v302, %v1555
    %v1557 = vand.u32 %v1556, 4294901760
    %1558 = vmatmul.mubr.f32.gmra.mxu0 %v1557
    %v1559 = vpop.f32.mrf.mxu0
    %v1560 = vadd.f32 %v1244, %v1559
    %v1561 = vpop.f32.mrf.mxu0
    %1562 = vmatprep.mubr.f32.mxu0 0.0
    %v1563 = vand.u32 %v305, 4294901760
    %v1564 = vsub.f32 %v305, %v1563
    %v1565 = vand.u32 %v1564, 4294901760
    %1566 = vmatmul.mubr.f32.gmra.mxu0 %v1565
    %v1567 = vpop.f32.mrf.mxu0
    %v1568 = vadd.f32 %v1251, %v1567
    %v1569 = vpop.f32.mrf.mxu0
    %1570 = vmatprep.mubr.f32.mxu0 0.0
    %v1571 = vand.u32 %v308, 4294901760
    %v1572 = vsub.f32 %v308, %v1571
    %v1573 = vand.u32 %v1572, 4294901760
    %1574 = vmatmul.mubr.f32.gmra.mxu0 %v1573
    %v1575 = vpop.f32.mrf.mxu0
    %v1576 = vadd.f32 %v1258, %v1575
    %v1577 = vpop.f32.mrf.mxu0
    %1578 = vmatprep.mubr.f32.mxu0 0.0
    %v1579 = vand.u32 %v311, 4294901760
    %v1580 = vsub.f32 %v311, %v1579
    %v1581 = vand.u32 %v1580, 4294901760
    %1582 = vmatmul.mubr.f32.gmra.mxu0 %v1581
    %v1583 = vpop.f32.mrf.mxu0
    %v1584 = vadd.f32 %v1265, %v1583
    %v1585 = vpop.f32.mrf.mxu0
    %1586 = vmatprep.mubr.f32.mxu0 0.0
    %v1587 = vand.u32 %v314, 4294901760
    %v1588 = vsub.f32 %v314, %v1587
    %v1589 = vand.u32 %v1588, 4294901760
    %1590 = vmatmul.mubr.f32.gmra.mxu0 %v1589
    %v1591 = vpop.f32.mrf.mxu0
    %v1592 = vadd.f32 %v1272, %v1591
    %v1593 = vpop.f32.mrf.mxu0
    %1594 = vmatprep.mubr.f32.mxu0 0.0
    %v1595 = vand.u32 %v317, 4294901760
    %v1596 = vsub.f32 %v317, %v1595
    %v1597 = vand.u32 %v1596, 4294901760
    %1598 = vmatmul.mubr.f32.gmra.mxu0 %v1597
    %v1599 = vpop.f32.mrf.mxu0
    %v1600 = vadd.f32 %v1279, %v1599
    %v1601 = vpop.f32.mrf.mxu0
    %1602 = vmatprep.mubr.f32.mxu0 0.0
    %v1603 = vand.u32 %v320, 4294901760
    %v1604 = vsub.f32 %v320, %v1603
    %v1605 = vand.u32 %v1604, 4294901760
    %1606 = vmatmul.mubr.f32.gmra.mxu0 %v1605
    %v1607 = vpop.f32.mrf.mxu0
    %v1608 = vadd.f32 %v1286, %v1607
    %v1609 = vpop.f32.mrf.mxu0
    %1610 = vmatprep.mubr.f32.mxu0 0.0
    %v1611 = vand.u32 %v323, 4294901760
    %v1612 = vsub.f32 %v323, %v1611
    %v1613 = vand.u32 %v1612, 4294901760
    %1614 = vmatmul.mubr.f32.gmra.mxu0 %v1613
    %v1615 = vpop.f32.mrf.mxu0
    %v1616 = vadd.f32 %v1293, %v1615
    %v1617 = vpop.f32.mrf.mxu0
    %1618 = vmatprep.mubr.f32.mxu0 0.0
    %v1619 = vand.u32 %v326, 4294901760
    %v1620 = vsub.f32 %v326, %v1619
    %v1621 = vand.u32 %v1620, 4294901760
    %1622 = vmatmul.mubr.f32.gmra.mxu0 %v1621
    %v1623 = vpop.f32.mrf.mxu0
    %v1624 = vadd.f32 %v1300, %v1623
    %v1625 = vpop.f32.mrf.mxu0
    %1626 = vmatprep.mubr.f32.mxu0 0.0
    %v1627 = vand.u32 %v329, 4294901760
    %v1628 = vsub.f32 %v329, %v1627
    %v1629 = vand.u32 %v1628, 4294901760
    %1630 = vmatmul.mubr.f32.gmra.mxu0 %v1629
    %v1631 = vpop.f32.mrf.mxu0
    %v1632 = vadd.f32 %v1307, %v1631
    %v1633 = vpop.f32.mrf.mxu0
    %1634 = vmatprep.mubr.f32.mxu0 0.0
    %v1635 = vand.u32 %v332, 4294901760
    %v1636 = vsub.f32 %v332, %v1635
    %v1637 = vand.u32 %v1636, 4294901760
    %1638 = vmatmul.mubr.f32.gmra.mxu0 %v1637
    %v1639 = vpop.f32.mrf.mxu0
    %v1640 = vadd.f32 %v1314, %v1639
    %v1641 = vpop.f32.mrf.mxu0
    %1642 = vmatprep.mubr.f32.mxu0 0.0
    %v1643 = vand.u32 %v335, 4294901760
    %v1644 = vsub.f32 %v335, %v1643
    %v1645 = vand.u32 %v1644, 4294901760
    %1646 = vmatmul.mubr.f32.gmra.mxu0 %v1645
    %v1647 = vpop.f32.mrf.mxu0
    %v1648 = vadd.f32 %v1321, %v1647
    %v1649 = vpop.f32.mrf.mxu0
    %1650 = vmatprep.mubr.f32.mxu0 0.0
    %v1651 = vand.u32 %v338, 4294901760
    %v1652 = vsub.f32 %v338, %v1651
    %v1653 = vand.u32 %v1652, 4294901760
    %1654 = vmatmul.mubr.f32.gmra.mxu0 %v1653
    %v1655 = vpop.f32.mrf.mxu0
    %v1656 = vadd.f32 %v1328, %v1655
    %v1657 = vpop.f32.mrf.mxu0
    %1658 = vmatprep.mubr.f32.mxu0 0.0
    %v1659 = vand.u32 %v341, 4294901760
    %v1660 = vsub.f32 %v341, %v1659
    %v1661 = vand.u32 %v1660, 4294901760
    %1662 = vmatmul.mubr.f32.gmra.mxu0 %v1661
    %v1663 = vpop.f32.mrf.mxu0
    %v1664 = vadd.f32 %v1335, %v1663
    %v1665 = vpop.f32.mrf.mxu0
    %1666 = vdwg.mxu0
    %1667 = vmatprep.subr.mxu0 0.0
    %1668 = vmatpush1.msra.mxu0 0.0
    %1669 = vmatprep.subr.mxu0 0.0
    %1670 = vmatpush1.msra.mxu0 0.0
    %1671 = vmatprep.subr.mxu0 0.0
    %1672 = vmatpush1.msra.mxu0 0.0
    %1673 = vmatprep.subr.mxu0 0.0
    %1674 = vmatpush1.msra.mxu0 0.0
    %1675 = vmatprep.subr.mxu0 0.0
    %1676 = vmatpush1.msra.mxu0 0.0
    %1677 = vmatprep.subr.mxu0 0.0
    %1678 = vmatpush1.msra.mxu0 0.0
    %1679 = vmatprep.subr.mxu0 0.0
    %1680 = vmatpush1.msra.mxu0 0.0
    %1681 = vmatprep.subr.mxu0 0.0
    %1682 = vmatpush1.msra.mxu0 0.0
    %1683 = vmatprep.subr.mxu0 0.0
    %v1684 = vand.u32 %v245, 4294901760
    %v1685 = vsub.f32 %v245, %v1684
    %v1686 = vand.u32 %v1685, 4294901760
    %1687 = vmatpush1.msra.mxu0 %v1686
    %1688 = vmatprep.subr.mxu0 0.0
    %v1689 = vand.u32 %v244, 4294901760
    %v1690 = vsub.f32 %v244, %v1689
    %v1691 = vand.u32 %v1690, 4294901760
    %1692 = vmatpush1.msra.mxu0 %v1691
    %1693 = vmatprep.subr.mxu0 0.0
    %v1694 = vand.u32 %v243, 4294901760
    %v1695 = vsub.f32 %v243, %v1694
    %v1696 = vand.u32 %v1695, 4294901760
    %1697 = vmatpush1.msra.mxu0 %v1696
    %1698 = vmatprep.subr.mxu0 0.0
    %v1699 = vand.u32 %v242, 4294901760
    %v1700 = vsub.f32 %v242, %v1699
    %v1701 = vand.u32 %v1700, 4294901760
    %1702 = vmatpush1.msra.mxu0 %v1701
    %1703 = vmatprep.subr.mxu0 0.0
    %v1704 = vand.u32 %v241, 4294901760
    %v1705 = vsub.f32 %v241, %v1704
    %v1706 = vand.u32 %v1705, 4294901760
    %1707 = vmatpush1.msra.mxu0 %v1706
    %1708 = vmatprep.subr.mxu0 0.0
    %v1709 = vand.u32 %v240, 4294901760
    %v1710 = vsub.f32 %v240, %v1709
    %v1711 = vand.u32 %v1710, 4294901760
    %1712 = vmatpush1.msra.mxu0 %v1711
    %1713 = vmatprep.subr.mxu0 0.0
    %v1714 = vand.u32 %v239, 4294901760
    %v1715 = vsub.f32 %v239, %v1714
    %v1716 = vand.u32 %v1715, 4294901760
    %1717 = vmatpush1.msra.mxu0 %v1716
    %1718 = vmatprep.subr.mxu0 0.0
    %v1719 = vand.u32 %v238, 4294901760
    %v1720 = vsub.f32 %v238, %v1719
    %v1721 = vand.u32 %v1720, 4294901760
    %1722 = vmatpush1.msra.mxu0 %v1721
    %1723 = vmatprep.subr.mxu0 0.0
    %1724 = vmatpush2.msra.mxu0 0.0
    %1725 = vmatprep.subr.mxu0 0.0
    %1726 = vmatpush2.msra.mxu0 0.0
    %1727 = vmatprep.subr.mxu0 0.0
    %1728 = vmatpush2.msra.mxu0 0.0
    %1729 = vmatprep.subr.mxu0 0.0
    %1730 = vmatpush2.msra.mxu0 0.0
    %1731 = vmatprep.subr.mxu0 0.0
    %1732 = vmatpush2.msra.mxu0 0.0
    %1733 = vmatprep.subr.mxu0 0.0
    %1734 = vmatpush2.msra.mxu0 0.0
    %1735 = vmatprep.subr.mxu0 0.0
    %1736 = vmatpush2.msra.mxu0 0.0
    %1737 = vmatprep.subr.mxu0 0.0
    %1738 = vmatpush2.msra.mxu0 0.0
    %1739 = vmatprep.subr.mxu0 0.0
    %1740 = vmatpush2.msra.mxu0 0.0
    %1741 = vmatprep.subr.mxu0 0.0
    %1742 = vmatpush2.msra.mxu0 0.0
    %1743 = vmatprep.subr.mxu0 0.0
    %1744 = vmatpush2.msra.mxu0 0.0
    %1745 = vmatprep.subr.mxu0 0.0
    %1746 = vmatpush2.msra.mxu0 0.0
    %1747 = vmatprep.subr.mxu0 0.0
    %1748 = vmatpush2.msra.mxu0 0.0
    %1749 = vmatprep.subr.mxu0 0.0
    %1750 = vmatpush2.msra.mxu0 0.0
    %1751 = vmatprep.subr.mxu0 0.0
    %1752 = vmatpush2.msra.mxu0 0.0
    %1753 = vmatprep.subr.mxu0 0.0
    %1754 = vmatpush2.msra.mxu0 0.0
    %1755 = vmatprep.mubr.f32.mxu0 0.0
    %v1756 = vand.u32 %v248, 4294901760
    %1757 = vmatmul.mubr.f32.gmra.mxu0 %v1756
    %v1758 = vpop.f32.mrf.mxu0
    %v1759 = vadd.f32 %v1416, %v1758
    %v1760 = vpop.f32.mrf.mxu0
    %1761 = vmatprep.mubr.f32.mxu0 0.0
    %v1762 = vand.u32 %v251, 4294901760
    %1763 = vmatmul.mubr.f32.gmra.mxu0 %v1762
    %v1764 = vpop.f32.mrf.mxu0
    %v1765 = vadd.f32 %v1424, %v1764
    %v1766 = vpop.f32.mrf.mxu0
    %1767 = vmatprep.mubr.f32.mxu0 0.0
    %v1768 = vand.u32 %v254, 4294901760
    %1769 = vmatmul.mubr.f32.gmra.mxu0 %v1768
    %v1770 = vpop.f32.mrf.mxu0
    %v1771 = vadd.f32 %v1432, %v1770
    %v1772 = vpop.f32.mrf.mxu0
    %1773 = vmatprep.mubr.f32.mxu0 0.0
    %v1774 = vand.u32 %v257, 4294901760
    %1775 = vmatmul.mubr.f32.gmra.mxu0 %v1774
    %v1776 = vpop.f32.mrf.mxu0
    %v1777 = vadd.f32 %v1440, %v1776
    %v1778 = vpop.f32.mrf.mxu0
    %1779 = vmatprep.mubr.f32.mxu0 0.0
    %v1780 = vand.u32 %v260, 4294901760
    %1781 = vmatmul.mubr.f32.gmra.mxu0 %v1780
    %v1782 = vpop.f32.mrf.mxu0
    %v1783 = vadd.f32 %v1448, %v1782
    %v1784 = vpop.f32.mrf.mxu0
    %1785 = vmatprep.mubr.f32.mxu0 0.0
    %v1786 = vand.u32 %v263, 4294901760
    %1787 = vmatmul.mubr.f32.gmra.mxu0 %v1786
    %v1788 = vpop.f32.mrf.mxu0
    %v1789 = vadd.f32 %v1456, %v1788
    %v1790 = vpop.f32.mrf.mxu0
    %1791 = vmatprep.mubr.f32.mxu0 0.0
    %v1792 = vand.u32 %v266, 4294901760
    %1793 = vmatmul.mubr.f32.gmra.mxu0 %v1792
    %v1794 = vpop.f32.mrf.mxu0
    %v1795 = vadd.f32 %v1464, %v1794
    %v1796 = vpop.f32.mrf.mxu0
    %1797 = vmatprep.mubr.f32.mxu0 0.0
    %v1798 = vand.u32 %v269, 4294901760
    %1799 = vmatmul.mubr.f32.gmra.mxu0 %v1798
    %v1800 = vpop.f32.mrf.mxu0
    %v1801 = vadd.f32 %v1472, %v1800
    %v1802 = vpop.f32.mrf.mxu0
    %1803 = vmatprep.mubr.f32.mxu0 0.0
    %v1804 = vand.u32 %v272, 4294901760
    %1805 = vmatmul.mubr.f32.gmra.mxu0 %v1804
    %v1806 = vpop.f32.mrf.mxu0
    %v1807 = vadd.f32 %v1480, %v1806
    %v1808 = vpop.f32.mrf.mxu0
    %1809 = vmatprep.mubr.f32.mxu0 0.0
    %v1810 = vand.u32 %v275, 4294901760
    %1811 = vmatmul.mubr.f32.gmra.mxu0 %v1810
    %v1812 = vpop.f32.mrf.mxu0
    %v1813 = vadd.f32 %v1488, %v1812
    %v1814 = vpop.f32.mrf.mxu0
    %1815 = vmatprep.mubr.f32.mxu0 0.0
    %v1816 = vand.u32 %v278, 4294901760
    %1817 = vmatmul.mubr.f32.gmra.mxu0 %v1816
    %v1818 = vpop.f32.mrf.mxu0
    %v1819 = vadd.f32 %v1496, %v1818
    %v1820 = vpop.f32.mrf.mxu0
    %1821 = vmatprep.mubr.f32.mxu0 0.0
    %v1822 = vand.u32 %v281, 4294901760
    %1823 = vmatmul.mubr.f32.gmra.mxu0 %v1822
    %v1824 = vpop.f32.mrf.mxu0
    %v1825 = vadd.f32 %v1504, %v1824
    %v1826 = vpop.f32.mrf.mxu0
    %1827 = vmatprep.mubr.f32.mxu0 0.0
    %v1828 = vand.u32 %v284, 4294901760
    %1829 = vmatmul.mubr.f32.gmra.mxu0 %v1828
    %v1830 = vpop.f32.mrf.mxu0
    %v1831 = vadd.f32 %v1512, %v1830
    %v1832 = vpop.f32.mrf.mxu0
    %1833 = vmatprep.mubr.f32.mxu0 0.0
    %v1834 = vand.u32 %v287, 4294901760
    %1835 = vmatmul.mubr.f32.gmra.mxu0 %v1834
    %v1836 = vpop.f32.mrf.mxu0
    %v1837 = vadd.f32 %v1520, %v1836
    %v1838 = vpop.f32.mrf.mxu0
    %1839 = vmatprep.mubr.f32.mxu0 0.0
    %v1840 = vand.u32 %v290, 4294901760
    %1841 = vmatmul.mubr.f32.gmra.mxu0 %v1840
    %v1842 = vpop.f32.mrf.mxu0
    %v1843 = vadd.f32 %v1528, %v1842
    %v1844 = vpop.f32.mrf.mxu0
    %1845 = vmatprep.mubr.f32.mxu0 0.0
    %v1846 = vand.u32 %v293, 4294901760
    %1847 = vmatmul.mubr.f32.gmra.mxu0 %v1846
    %v1848 = vpop.f32.mrf.mxu0
    %v1849 = vadd.f32 %v1536, %v1848
    %v1850 = vpop.f32.mrf.mxu0
    %1851 = vmatprep.mubr.f32.mxu0 0.0
    %v1852 = vand.u32 %v296, 4294901760
    %1853 = vmatmul.mubr.f32.gmra.mxu0 %v1852
    %v1854 = vpop.f32.mrf.mxu0
    %v1855 = vadd.f32 %v1544, %v1854
    %v1856 = vpop.f32.mrf.mxu0
    %1857 = vmatprep.mubr.f32.mxu0 0.0
    %v1858 = vand.u32 %v299, 4294901760
    %1859 = vmatmul.mubr.f32.gmra.mxu0 %v1858
    %v1860 = vpop.f32.mrf.mxu0
    %v1861 = vadd.f32 %v1552, %v1860
    %v1862 = vpop.f32.mrf.mxu0
    %1863 = vmatprep.mubr.f32.mxu0 0.0
    %v1864 = vand.u32 %v302, 4294901760
    %1865 = vmatmul.mubr.f32.gmra.mxu0 %v1864
    %v1866 = vpop.f32.mrf.mxu0
    %v1867 = vadd.f32 %v1560, %v1866
    %v1868 = vpop.f32.mrf.mxu0
    %1869 = vmatprep.mubr.f32.mxu0 0.0
    %v1870 = vand.u32 %v305, 4294901760
    %1871 = vmatmul.mubr.f32.gmra.mxu0 %v1870
    %v1872 = vpop.f32.mrf.mxu0
    %v1873 = vadd.f32 %v1568, %v1872
    %v1874 = vpop.f32.mrf.mxu0
    %1875 = vmatprep.mubr.f32.mxu0 0.0
    %v1876 = vand.u32 %v308, 4294901760
    %1877 = vmatmul.mubr.f32.gmra.mxu0 %v1876
    %v1878 = vpop.f32.mrf.mxu0
    %v1879 = vadd.f32 %v1576, %v1878
    %v1880 = vpop.f32.mrf.mxu0
    %1881 = vmatprep.mubr.f32.mxu0 0.0
    %v1882 = vand.u32 %v311, 4294901760
    %1883 = vmatmul.mubr.f32.gmra.mxu0 %v1882
    %v1884 = vpop.f32.mrf.mxu0
    %v1885 = vadd.f32 %v1584, %v1884
    %v1886 = vpop.f32.mrf.mxu0
    %1887 = vmatprep.mubr.f32.mxu0 0.0
    %v1888 = vand.u32 %v314, 4294901760
    %1889 = vmatmul.mubr.f32.gmra.mxu0 %v1888
    %v1890 = vpop.f32.mrf.mxu0
    %v1891 = vadd.f32 %v1592, %v1890
    %v1892 = vpop.f32.mrf.mxu0
    %1893 = vmatprep.mubr.f32.mxu0 0.0
    %v1894 = vand.u32 %v317, 4294901760
    %1895 = vmatmul.mubr.f32.gmra.mxu0 %v1894
    %v1896 = vpop.f32.mrf.mxu0
    %v1897 = vadd.f32 %v1600, %v1896
    %v1898 = vpop.f32.mrf.mxu0
    %1899 = vmatprep.mubr.f32.mxu0 0.0
    %v1900 = vand.u32 %v320, 4294901760
    %1901 = vmatmul.mubr.f32.gmra.mxu0 %v1900
    %v1902 = vpop.f32.mrf.mxu0
    %v1903 = vadd.f32 %v1608, %v1902
    %v1904 = vpop.f32.mrf.mxu0
    %1905 = vmatprep.mubr.f32.mxu0 0.0
    %v1906 = vand.u32 %v323, 4294901760
    %1907 = vmatmul.mubr.f32.gmra.mxu0 %v1906
    %v1908 = vpop.f32.mrf.mxu0
    %v1909 = vadd.f32 %v1616, %v1908
    %v1910 = vpop.f32.mrf.mxu0
    %1911 = vmatprep.mubr.f32.mxu0 0.0
    %v1912 = vand.u32 %v326, 4294901760
    %1913 = vmatmul.mubr.f32.gmra.mxu0 %v1912
    %v1914 = vpop.f32.mrf.mxu0
    %v1915 = vadd.f32 %v1624, %v1914
    %v1916 = vpop.f32.mrf.mxu0
    %1917 = vmatprep.mubr.f32.mxu0 0.0
    %v1918 = vand.u32 %v329, 4294901760
    %1919 = vmatmul.mubr.f32.gmra.mxu0 %v1918
    %v1920 = vpop.f32.mrf.mxu0
    %v1921 = vadd.f32 %v1632, %v1920
    %v1922 = vpop.f32.mrf.mxu0
    %1923 = vmatprep.mubr.f32.mxu0 0.0
    %v1924 = vand.u32 %v332, 4294901760
    %1925 = vmatmul.mubr.f32.gmra.mxu0 %v1924
    %v1926 = vpop.f32.mrf.mxu0
    %v1927 = vadd.f32 %v1640, %v1926
    %v1928 = vpop.f32.mrf.mxu0
    %1929 = vmatprep.mubr.f32.mxu0 0.0
    %v1930 = vand.u32 %v335, 4294901760
    %1931 = vmatmul.mubr.f32.gmra.mxu0 %v1930
    %v1932 = vpop.f32.mrf.mxu0
    %v1933 = vadd.f32 %v1648, %v1932
    %v1934 = vpop.f32.mrf.mxu0
    %1935 = vmatprep.mubr.f32.mxu0 0.0
    %v1936 = vand.u32 %v338, 4294901760
    %1937 = vmatmul.mubr.f32.gmra.mxu0 %v1936
    %v1938 = vpop.f32.mrf.mxu0
    %v1939 = vadd.f32 %v1656, %v1938
    %v1940 = vpop.f32.mrf.mxu0
    %1941 = vmatprep.mubr.f32.mxu0 0.0
    %v1942 = vand.u32 %v341, 4294901760
    %1943 = vmatmul.mubr.f32.gmra.mxu0 %v1942
    %v1944 = vpop.f32.mrf.mxu0
    %v1945 = vadd.f32 %v1664, %v1944
    %v1946 = vpop.f32.mrf.mxu0
    %1947 = vdwg.mxu0
    %1948 = vmatprep.subr.mxu0 0.0
    %1949 = vmatpush1.msra.mxu0 0.0
    %1950 = vmatprep.subr.mxu0 0.0
    %1951 = vmatpush1.msra.mxu0 0.0
    %1952 = vmatprep.subr.mxu0 0.0
    %1953 = vmatpush1.msra.mxu0 0.0
    %1954 = vmatprep.subr.mxu0 0.0
    %1955 = vmatpush1.msra.mxu0 0.0
    %1956 = vmatprep.subr.mxu0 0.0
    %1957 = vmatpush1.msra.mxu0 0.0
    %1958 = vmatprep.subr.mxu0 0.0
    %1959 = vmatpush1.msra.mxu0 0.0
    %1960 = vmatprep.subr.mxu0 0.0
    %1961 = vmatpush1.msra.mxu0 0.0
    %1962 = vmatprep.subr.mxu0 0.0
    %1963 = vmatpush1.msra.mxu0 0.0
    %1964 = vmatprep.subr.mxu0 0.0
    %v1965 = vand.u32 %v245, 4294901760
    %1966 = vmatpush1.msra.mxu0 %v1965
    %1967 = vmatprep.subr.mxu0 0.0
    %v1968 = vand.u32 %v244, 4294901760
    %1969 = vmatpush1.msra.mxu0 %v1968
    %1970 = vmatprep.subr.mxu0 0.0
    %v1971 = vand.u32 %v243, 4294901760
    %1972 = vmatpush1.msra.mxu0 %v1971
    %1973 = vmatprep.subr.mxu0 0.0
    %v1974 = vand.u32 %v242, 4294901760
    %1975 = vmatpush1.msra.mxu0 %v1974
    %1976 = vmatprep.subr.mxu0 0.0
    %v1977 = vand.u32 %v241, 4294901760
    %1978 = vmatpush1.msra.mxu0 %v1977
    %1979 = vmatprep.subr.mxu0 0.0
    %v1980 = vand.u32 %v240, 4294901760
    %1981 = vmatpush1.msra.mxu0 %v1980
    %1982 = vmatprep.subr.mxu0 0.0
    %v1983 = vand.u32 %v239, 4294901760
    %1984 = vmatpush1.msra.mxu0 %v1983
    %1985 = vmatprep.subr.mxu0 0.0
    %v1986 = vand.u32 %v238, 4294901760
    %1987 = vmatpush1.msra.mxu0 %v1986
    %1988 = vmatprep.subr.mxu0 0.0
    %1989 = vmatpush2.msra.mxu0 0.0
    %1990 = vmatprep.subr.mxu0 0.0
    %1991 = vmatpush2.msra.mxu0 0.0
    %1992 = vmatprep.subr.mxu0 0.0
    %1993 = vmatpush2.msra.mxu0 0.0
    %1994 = vmatprep.subr.mxu0 0.0
    %1995 = vmatpush2.msra.mxu0 0.0
    %1996 = vmatprep.subr.mxu0 0.0
    %1997 = vmatpush2.msra.mxu0 0.0
    %1998 = vmatprep.subr.mxu0 0.0
    %1999 = vmatpush2.msra.mxu0 0.0
    %2000 = vmatprep.subr.mxu0 0.0
    %2001 = vmatpush2.msra.mxu0 0.0
    %2002 = vmatprep.subr.mxu0 0.0
    %2003 = vmatpush2.msra.mxu0 0.0
    %2004 = vmatprep.subr.mxu0 0.0
    %2005 = vmatpush2.msra.mxu0 0.0
    %2006 = vmatprep.subr.mxu0 0.0
    %2007 = vmatpush2.msra.mxu0 0.0
    %2008 = vmatprep.subr.mxu0 0.0
    %2009 = vmatpush2.msra.mxu0 0.0
    %2010 = vmatprep.subr.mxu0 0.0
    %2011 = vmatpush2.msra.mxu0 0.0
    %2012 = vmatprep.subr.mxu0 0.0
    %2013 = vmatpush2.msra.mxu0 0.0
    %2014 = vmatprep.subr.mxu0 0.0
    %2015 = vmatpush2.msra.mxu0 0.0
    %2016 = vmatprep.subr.mxu0 0.0
    %2017 = vmatpush2.msra.mxu0 0.0
    %2018 = vmatprep.subr.mxu0 0.0
    %2019 = vmatpush2.msra.mxu0 0.0
    %2020 = vmatprep.mubr.f32.mxu0 0.0
    %v2021 = vand.u32 %v248, 4294901760
    %2022 = vmatmul.mubr.f32.gmra.mxu0 %v2021
    %v2023 = vpop.f32.mrf.mxu0
    %v2024 = vadd.f32 %v1759, %v2023
    %v2025 = vpop.f32.mrf.mxu0
    %2026 = vmatprep.mubr.f32.mxu0 0.0
    %v2027 = vand.u32 %v251, 4294901760
    %2028 = vmatmul.mubr.f32.gmra.mxu0 %v2027
    %v2029 = vpop.f32.mrf.mxu0
    %v2030 = vadd.f32 %v1765, %v2029
    %v2031 = vpop.f32.mrf.mxu0
    %2032 = vmatprep.mubr.f32.mxu0 0.0
    %v2033 = vand.u32 %v254, 4294901760
    %2034 = vmatmul.mubr.f32.gmra.mxu0 %v2033
    %v2035 = vpop.f32.mrf.mxu0
    %v2036 = vadd.f32 %v1771, %v2035
    %v2037 = vpop.f32.mrf.mxu0
    %2038 = vmatprep.mubr.f32.mxu0 0.0
    %v2039 = vand.u32 %v257, 4294901760
    %2040 = vmatmul.mubr.f32.gmra.mxu0 %v2039
    %v2041 = vpop.f32.mrf.mxu0
    %v2042 = vadd.f32 %v1777, %v2041
    %v2043 = vpop.f32.mrf.mxu0
    %2044 = vmatprep.mubr.f32.mxu0 0.0
    %v2045 = vand.u32 %v260, 4294901760
    %2046 = vmatmul.mubr.f32.gmra.mxu0 %v2045
    %v2047 = vpop.f32.mrf.mxu0
    %v2048 = vadd.f32 %v1783, %v2047
    %v2049 = vpop.f32.mrf.mxu0
    %2050 = vmatprep.mubr.f32.mxu0 0.0
    %v2051 = vand.u32 %v263, 4294901760
    %2052 = vmatmul.mubr.f32.gmra.mxu0 %v2051
    %v2053 = vpop.f32.mrf.mxu0
    %v2054 = vadd.f32 %v1789, %v2053
    %v2055 = vpop.f32.mrf.mxu0
    %2056 = vmatprep.mubr.f32.mxu0 0.0
    %v2057 = vand.u32 %v266, 4294901760
    %2058 = vmatmul.mubr.f32.gmra.mxu0 %v2057
    %v2059 = vpop.f32.mrf.mxu0
    %v2060 = vadd.f32 %v1795, %v2059
    %v2061 = vpop.f32.mrf.mxu0
    %2062 = vmatprep.mubr.f32.mxu0 0.0
    %v2063 = vand.u32 %v269, 4294901760
    %2064 = vmatmul.mubr.f32.gmra.mxu0 %v2063
    %v2065 = vpop.f32.mrf.mxu0
    %v2066 = vadd.f32 %v1801, %v2065
    %v2067 = vpop.f32.mrf.mxu0
    %2068 = vmatprep.mubr.f32.mxu0 0.0
    %v2069 = vand.u32 %v272, 4294901760
    %2070 = vmatmul.mubr.f32.gmra.mxu0 %v2069
    %v2071 = vpop.f32.mrf.mxu0
    %v2072 = vadd.f32 %v1807, %v2071
    %v2073 = vpop.f32.mrf.mxu0
    %2074 = vmatprep.mubr.f32.mxu0 0.0
    %v2075 = vand.u32 %v275, 4294901760
    %2076 = vmatmul.mubr.f32.gmra.mxu0 %v2075
    %v2077 = vpop.f32.mrf.mxu0
    %v2078 = vadd.f32 %v1813, %v2077
    %v2079 = vpop.f32.mrf.mxu0
    %2080 = vmatprep.mubr.f32.mxu0 0.0
    %v2081 = vand.u32 %v278, 4294901760
    %2082 = vmatmul.mubr.f32.gmra.mxu0 %v2081
    %v2083 = vpop.f32.mrf.mxu0
    %v2084 = vadd.f32 %v1819, %v2083
    %v2085 = vpop.f32.mrf.mxu0
    %2086 = vmatprep.mubr.f32.mxu0 0.0
    %v2087 = vand.u32 %v281, 4294901760
    %2088 = vmatmul.mubr.f32.gmra.mxu0 %v2087
    %v2089 = vpop.f32.mrf.mxu0
    %v2090 = vadd.f32 %v1825, %v2089
    %v2091 = vpop.f32.mrf.mxu0
    %2092 = vmatprep.mubr.f32.mxu0 0.0
    %v2093 = vand.u32 %v284, 4294901760
    %2094 = vmatmul.mubr.f32.gmra.mxu0 %v2093
    %v2095 = vpop.f32.mrf.mxu0
    %v2096 = vadd.f32 %v1831, %v2095
    %v2097 = vpop.f32.mrf.mxu0
    %2098 = vmatprep.mubr.f32.mxu0 0.0
    %v2099 = vand.u32 %v287, 4294901760
    %2100 = vmatmul.mubr.f32.gmra.mxu0 %v2099
    %v2101 = vpop.f32.mrf.mxu0
    %v2102 = vadd.f32 %v1837, %v2101
    %v2103 = vpop.f32.mrf.mxu0
    %2104 = vmatprep.mubr.f32.mxu0 0.0
    %v2105 = vand.u32 %v290, 4294901760
    %2106 = vmatmul.mubr.f32.gmra.mxu0 %v2105
    %v2107 = vpop.f32.mrf.mxu0
    %v2108 = vadd.f32 %v1843, %v2107
    %v2109 = vpop.f32.mrf.mxu0
    %2110 = vmatprep.mubr.f32.mxu0 0.0
    %v2111 = vand.u32 %v293, 4294901760
    %2112 = vmatmul.mubr.f32.gmra.mxu0 %v2111
    %v2113 = vpop.f32.mrf.mxu0
    %v2114 = vadd.f32 %v1849, %v2113
    %v2115 = vpop.f32.mrf.mxu0
    %2116 = vmatprep.mubr.f32.mxu0 0.0
    %v2117 = vand.u32 %v296, 4294901760
    %2118 = vmatmul.mubr.f32.gmra.mxu0 %v2117
    %v2119 = vpop.f32.mrf.mxu0
    %v2120 = vadd.f32 %v1855, %v2119
    %v2121 = vpop.f32.mrf.mxu0
    %2122 = vmatprep.mubr.f32.mxu0 0.0
    %v2123 = vand.u32 %v299, 4294901760
    %2124 = vmatmul.mubr.f32.gmra.mxu0 %v2123
    %v2125 = vpop.f32.mrf.mxu0
    %v2126 = vadd.f32 %v1861, %v2125
    %v2127 = vpop.f32.mrf.mxu0
    %2128 = vmatprep.mubr.f32.mxu0 0.0
    %v2129 = vand.u32 %v302, 4294901760
    %2130 = vmatmul.mubr.f32.gmra.mxu0 %v2129
    %v2131 = vpop.f32.mrf.mxu0
    %v2132 = vadd.f32 %v1867, %v2131
    %v2133 = vpop.f32.mrf.mxu0
    %2134 = vmatprep.mubr.f32.mxu0 0.0
    %v2135 = vand.u32 %v305, 4294901760
    %2136 = vmatmul.mubr.f32.gmra.mxu0 %v2135
    %v2137 = vpop.f32.mrf.mxu0
    %v2138 = vadd.f32 %v1873, %v2137
    %v2139 = vpop.f32.mrf.mxu0
    %2140 = vmatprep.mubr.f32.mxu0 0.0
    %v2141 = vand.u32 %v308, 4294901760
    %2142 = vmatmul.mubr.f32.gmra.mxu0 %v2141
    %v2143 = vpop.f32.mrf.mxu0
    %v2144 = vadd.f32 %v1879, %v2143
    %v2145 = vpop.f32.mrf.mxu0
    %2146 = vmatprep.mubr.f32.mxu0 0.0
    %v2147 = vand.u32 %v311, 4294901760
    %2148 = vmatmul.mubr.f32.gmra.mxu0 %v2147
    %v2149 = vpop.f32.mrf.mxu0
    %v2150 = vadd.f32 %v1885, %v2149
    %v2151 = vpop.f32.mrf.mxu0
    %2152 = vmatprep.mubr.f32.mxu0 0.0
    %v2153 = vand.u32 %v314, 4294901760
    %2154 = vmatmul.mubr.f32.gmra.mxu0 %v2153
    %v2155 = vpop.f32.mrf.mxu0
    %v2156 = vadd.f32 %v1891, %v2155
    %v2157 = vpop.f32.mrf.mxu0
    %2158 = vmatprep.mubr.f32.mxu0 0.0
    %v2159 = vand.u32 %v317, 4294901760
    %2160 = vmatmul.mubr.f32.gmra.mxu0 %v2159
    %v2161 = vpop.f32.mrf.mxu0
    %v2162 = vadd.f32 %v1897, %v2161
    %v2163 = vpop.f32.mrf.mxu0
    %2164 = vmatprep.mubr.f32.mxu0 0.0
    %v2165 = vand.u32 %v320, 4294901760
    %2166 = vmatmul.mubr.f32.gmra.mxu0 %v2165
    %v2167 = vpop.f32.mrf.mxu0
    %v2168 = vadd.f32 %v1903, %v2167
    %v2169 = vpop.f32.mrf.mxu0
    %2170 = vmatprep.mubr.f32.mxu0 0.0
    %v2171 = vand.u32 %v323, 4294901760
    %2172 = vmatmul.mubr.f32.gmra.mxu0 %v2171
    %v2173 = vpop.f32.mrf.mxu0
    %v2174 = vadd.f32 %v1909, %v2173
    %v2175 = vpop.f32.mrf.mxu0
    %2176 = vmatprep.mubr.f32.mxu0 0.0
    %v2177 = vand.u32 %v326, 4294901760
    %2178 = vmatmul.mubr.f32.gmra.mxu0 %v2177
    %v2179 = vpop.f32.mrf.mxu0
    %v2180 = vadd.f32 %v1915, %v2179
    %v2181 = vpop.f32.mrf.mxu0
    %2182 = vmatprep.mubr.f32.mxu0 0.0
    %v2183 = vand.u32 %v329, 4294901760
    %2184 = vmatmul.mubr.f32.gmra.mxu0 %v2183
    %v2185 = vpop.f32.mrf.mxu0
    %v2186 = vadd.f32 %v1921, %v2185
    %v2187 = vpop.f32.mrf.mxu0
    %2188 = vmatprep.mubr.f32.mxu0 0.0
    %v2189 = vand.u32 %v332, 4294901760
    %2190 = vmatmul.mubr.f32.gmra.mxu0 %v2189
    %v2191 = vpop.f32.mrf.mxu0
    %v2192 = vadd.f32 %v1927, %v2191
    %v2193 = vpop.f32.mrf.mxu0
    %2194 = vmatprep.mubr.f32.mxu0 0.0
    %v2195 = vand.u32 %v335, 4294901760
    %2196 = vmatmul.mubr.f32.gmra.mxu0 %v2195
    %v2197 = vpop.f32.mrf.mxu0
    %v2198 = vadd.f32 %v1933, %v2197
    %v2199 = vpop.f32.mrf.mxu0
    %2200 = vmatprep.mubr.f32.mxu0 0.0
    %v2201 = vand.u32 %v338, 4294901760
    %2202 = vmatmul.mubr.f32.gmra.mxu0 %v2201
    %v2203 = vpop.f32.mrf.mxu0
    %v2204 = vadd.f32 %v1939, %v2203
    %v2205 = vpop.f32.mrf.mxu0
    %2206 = vmatprep.mubr.f32.mxu0 0.0
    %v2207 = vand.u32 %v341, 4294901760
    %2208 = vmatmul.mubr.f32.gmra.mxu0 %v2207
    %v2209 = vpop.f32.mrf.mxu0
    %v2210 = vadd.f32 %v1945, %v2209
    %v2211 = vpop.f32.mrf.mxu0
    %2212 = vdwg.mxu0
    %2213 = vst [vmem:[#allocation2] sm:$0xff] %v2024
    %2214 = vst [vmem:[#allocation2 + $0x8] sm:$0xff] %v2030
    %2215 = vst [vmem:[#allocation2 + $0x10] sm:$0xff] %v2036
    %2216 = vst [vmem:[#allocation2 + $0x18] sm:$0xff] %v2042
    %2217 = vst [vmem:[#allocation2 + $0x20] sm:$0xff] %v2048
    %2218 = vst [vmem:[#allocation2 + $0x28] sm:$0xff] %v2054
    %2219 = vst [vmem:[#allocation2 + $0x30] sm:$0xff] %v2060
    %2220 = vst [vmem:[#allocation2 + $0x38] sm:$0xff] %v2066
    %2221 = vst [vmem:[#allocation2 + $0x40] sm:$0xff] %v2072
    %2222 = vst [vmem:[#allocation2 + $0x48] sm:$0xff] %v2078
    %2223 = vst [vmem:[#allocation2 + $0x50] sm:$0xff] %v2084
    %2224 = vst [vmem:[#allocation2 + $0x58] sm:$0xff] %v2090
    %2225 = vst [vmem:[#allocation2 + $0x60] sm:$0xff] %v2096
    %2226 = vst [vmem:[#allocation2 + $0x68] sm:$0xff] %v2102
    %2227 = vst [vmem:[#allocation2 + $0x70] sm:$0xff] %v2108
    %2228 = vst [vmem:[#allocation2 + $0x78] sm:$0xff] %v2114
    %2229 = vst [vmem:[#allocation2 + $0x80] sm:$0xff] %v2120
    %2230 = vst [vmem:[#allocation2 + $0x88] sm:$0xff] %v2126
    %2231 = vst [vmem:[#allocation2 + $0x90] sm:$0xff] %v2132
    %2232 = vst [vmem:[#allocation2 + $0x98] sm:$0xff] %v2138
    %2233 = vst [vmem:[#allocation2 + $0xa0] sm:$0xff] %v2144
    %2234 = vst [vmem:[#allocation2 + $0xa8] sm:$0xff] %v2150
    %2235 = vst [vmem:[#allocation2 + $0xb0] sm:$0xff] %v2156
    %2236 = vst [vmem:[#allocation2 + $0xb8] sm:$0xff] %v2162
    %2237 = vst [vmem:[#allocation2 + $0xc0] sm:$0xff] %v2168
    %2238 = vst [vmem:[#allocation2 + $0xc8] sm:$0xff] %v2174
    %2239 = vst [vmem:[#allocation2 + $0xd0] sm:$0xff] %v2180
    %2240 = vst [vmem:[#allocation2 + $0xd8] sm:$0xff] %v2186
    %2241 = vst [vmem:[#allocation2 + $0xe0] sm:$0xff] %v2192
    %2242 = vst [vmem:[#allocation2 + $0xe8] sm:$0xff] %v2198
    %2243 = vst [vmem:[#allocation2 + $0xf0] sm:$0xff] %v2204
    %2244 = vst [vmem:[#allocation2 + $0xf8] sm:$0xff] %v2210
    // Predicated region
    $region10: #{tpu_custom_call.1} parent=1 // pred_check
      _
    $region11: #{tpu_custom_call.1} parent=1 // pred_check_branch
      %2246 = sbr.rel (0) target = $region13
    $region12: #{tpu_custom_call.1} parent=1 // pred_region
      %s2248 = ssub.s32 4096, 4096
      %2249 = vsyncadd [#allocation3], %s2248
      %s2250 = sshll.u32 [#allocation2], 4
      %s2251 = int_to_ptr.vmem [resolvable:$true] %s2250
      %2256 = dma.vmem_to_hbm [thread:$0]  %s2251, 4096, %s2, [#allocation3], 128, 128, 8
    $region13: #{tpu_custom_call.1} parent=1 // pred_fallthru
      _
    // Predicated region
    $region14: #{tpu_custom_call.1} parent=1 // pred_check
      _
    $region15: #{tpu_custom_call.1} parent=1 // pred_check_branch
      %2258 = sbr.rel (0) target = $region17
    $region16: #{tpu_custom_call.1} parent=1 // pred_region
      %2259 = dma.done [#allocation3], 4096
    $region17: #{tpu_custom_call.1} parent=1 // pred_fallthru
      _
    %2260 = vsyncpa [#allocation3], 1

// kernel: tpu_custom_call.1
$region0: #{tpu_custom_call.1}
  #allocation0 [shape = 'u32[]', space=smem, size = 0x4, offset = 0x4, fixed_abs, tag = 'smem constant byte address 0x4 - core index']
  #allocation1 [shape = 'u32[144,128]{1,0:T(1,128)}', space=vmem, size = 0x12000, scoped, tag = 'internal scratch']
  %s0 = inlined_call_operand.vmem [shape: s32[256,1], index: 0, kind: input, shape index: {}]
  %s1 = inlined_call_operand.vmem [shape: f32[64,128], index: 1, kind: input, shape index: {}]
  %s2 = inlined_call_operand.hbm [shape: f32[256,128], index: 2, kind: output, shape index: {}]
  %s3 = sld [smem:[#allocation0]]
  $region18: #{tpu_custom_call.1} parent=0
    _
  %s5 = ssub.s32 1, %s3
  %s6 = scalar_select 0, %s5, %s3
  $region1: #{tpu_custom_call.1} parent=0
    #allocation2 [shape = 'u8[131072]{0}', space=vmem, size = 0x20000, scoped, tag = 'output window, operand 0, single buffered']
    #allocation3 [shape = 's32[1]{0}', space=sflag, size = 0x4, scoped, tag = 'scoped memory for tpu_custom_call.1']
    %7 = vsyncpa [#allocation3], 0
    // Predicated region
    $region2: #{tpu_custom_call.1} parent=1 // pred_check
      _
    $region3: #{tpu_custom_call.1} parent=1 // pred_check_branch
      %9 = sbr.rel (0) target = $region5
    $region4: #{tpu_custom_call.1} parent=1 // pred_region
      _
    $region5: #{tpu_custom_call.1} parent=1 // pred_fallthru
      _
    // Predicated region
    $region6: #{tpu_custom_call.1} parent=1 // pred_check
      _
    $region7: #{tpu_custom_call.1} parent=1 // pred_check_branch
      %11 = sbr.rel (0) target = $region9
    $region8: #{tpu_custom_call.1} parent=1 // pred_region
      _
    $region9: #{tpu_custom_call.1} parent=1 // pred_fallthru
      _
    %v12 = vld [vmem:[%s0] sm:$0xff]
    %v13 = vld [vmem:[%s0 + $0x8] sm:$0xff]
    %v14 = vld [vmem:[%s0 + $0x10] sm:$0xff]
    %v15 = vld [vmem:[%s0 + $0x18] sm:$0xff]
    %v16 = vld [vmem:[%s0 + $0x20] sm:$0xff]
    %v17 = vld [vmem:[%s0 + $0x28] sm:$0xff]
    %v18 = vld [vmem:[%s0 + $0x30] sm:$0xff]
    %v19 = vld [vmem:[%s0 + $0x38] sm:$0xff]
    %v20 = vld [vmem:[%s0 + $0x40] sm:$0xff]
    %v21 = vld [vmem:[%s0 + $0x48] sm:$0xff]
    %v22 = vld [vmem:[%s0 + $0x50] sm:$0xff]
    %v23 = vld [vmem:[%s0 + $0x58] sm:$0xff]
    %v24 = vld [vmem:[%s0 + $0x60] sm:$0xff]
    %v25 = vld [vmem:[%s0 + $0x68] sm:$0xff]
    %v26 = vld [vmem:[%s0 + $0x70] sm:$0xff]
    %v27 = vld [vmem:[%s0 + $0x78] sm:$0xff]
    %v28 = vld [vmem:[%s0 + $0x80] sm:$0xff]
    %v29 = vld [vmem:[%s0 + $0x88] sm:$0xff]
    %v30 = vld [vmem:[%s0 + $0x90] sm:$0xff]
    %v31 = vld [vmem:[%s0 + $0x98] sm:$0xff]
    %v32 = vld [vmem:[%s0 + $0xa0] sm:$0xff]
    %v33 = vld [vmem:[%s0 + $0xa8] sm:$0xff]
    %v34 = vld [vmem:[%s0 + $0xb0] sm:$0xff]
    %v35 = vld [vmem:[%s0 + $0xb8] sm:$0xff]
    %v36 = vld [vmem:[%s0 + $0xc0] sm:$0xff]
    %v37 = vld [vmem:[%s0 + $0xc8] sm:$0xff]
    %v38 = vld [vmem:[%s0 + $0xd0] sm:$0xff]
    %v39 = vld [vmem:[%s0 + $0xd8] sm:$0xff]
    %v40 = vld [vmem:[%s0 + $0xe0] sm:$0xff]
    %v41 = vld [vmem:[%s0 + $0xe8] sm:$0xff]
    %v42 = vld [vmem:[%s0 + $0xf0] sm:$0xff]
    %v43 = vld [vmem:[%s0 + $0xf8] sm:$0xff]
    %v44 = vlaneseq
    %v45 = vand.u32 %v44, 127
    %46 = vset.pattern.permute.xlu0 0
    %47 = vperm.xlu0 %46, %v12
    %v48 = vpop.permute.xlu0 %47
    %49 = vset.pattern.permute.xlu0 0
    %50 = vperm.xlu0 %49, %v13
    %v51 = vpop.permute.xlu0 %50
    %52 = vset.pattern.permute.xlu0 0
    %53 = vperm.xlu0 %52, %v14
    %v54 = vpop.permute.xlu0 %53
    %55 = vset.pattern.permute.xlu0 0
    %56 = vperm.xlu0 %55, %v15
    %v57 = vpop.permute.xlu0 %56
    %58 = vset.pattern.permute.xlu0 0
    %59 = vperm.xlu0 %58, %v16
    %v60 = vpop.permute.xlu0 %59
    %61 = vset.pattern.permute.xlu0 0
    %62 = vperm.xlu0 %61, %v17
    %v63 = vpop.permute.xlu0 %62
    %64 = vset.pattern.permute.xlu0 0
    %65 = vperm.xlu0 %64, %v18
    %v66 = vpop.permute.xlu0 %65
    %67 = vset.pattern.permute.xlu0 0
    %68 = vperm.xlu0 %67, %v19
    %v69 = vpop.permute.xlu0 %68
    %70 = vset.pattern.permute.xlu0 0
    %71 = vperm.xlu0 %70, %v20
    %v72 = vpop.permute.xlu0 %71
    %73 = vset.pattern.permute.xlu0 0
    %74 = vperm.xlu0 %73, %v21
    %v75 = vpop.permute.xlu0 %74
    %76 = vset.pattern.permute.xlu0 0
    %77 = vperm.xlu0 %76, %v22
    %v78 = vpop.permute.xlu0 %77
    %79 = vset.pattern.permute.xlu0 0
    %80 = vperm.xlu0 %79, %v23
    %v81 = vpop.permute.xlu0 %80
    %82 = vset.pattern.permute.xlu0 0
    %83 = vperm.xlu0 %82, %v24
    %v84 = vpop.permute.xlu0 %83
    %85 = vset.pattern.permute.xlu0 0
    %86 = vperm.xlu0 %85, %v25
    %v87 = vpop.permute.xlu0 %86
    %88 = vset.pattern.permute.xlu0 0
    %89 = vperm.xlu0 %88, %v26
    %v90 = vpop.permute.xlu0 %89
    %91 = vset.pattern.permute.xlu0 0
    %92 = vperm.xlu0 %91, %v27
    %v93 = vpop.permute.xlu0 %92
    %94 = vset.pattern.permute.xlu0 0
    %95 = vperm.xlu0 %94, %v28
    %v96 = vpop.permute.xlu0 %95
    %97 = vset.pattern.permute.xlu0 0
    %98 = vperm.xlu0 %97, %v29
    %v99 = vpop.permute.xlu0 %98
    %100 = vset.pattern.permute.xlu0 0
    %101 = vperm.xlu0 %100, %v30
    %v102 = vpop.permute.xlu0 %101
    %103 = vset.pattern.permute.xlu0 0
    %104 = vperm.xlu0 %103, %v31
    %v105 = vpop.permute.xlu0 %104
    %106 = vset.pattern.permute.xlu0 0
    %107 = vperm.xlu0 %106, %v32
    %v108 = vpop.permute.xlu0 %107
    %109 = vset.pattern.permute.xlu0 0
    %110 = vperm.xlu0 %109, %v33
    %v111 = vpop.permute.xlu0 %110
    %112 = vset.pattern.permute.xlu0 0
    %113 = vperm.xlu0 %112, %v34
    %v114 = vpop.permute.xlu0 %113
    %115 = vset.pattern.permute.xlu0 0
    %116 = vperm.xlu0 %115, %v35
    %v117 = vpop.permute.xlu0 %116
    %118 = vset.pattern.permute.xlu0 0
    %119 = vperm.xlu0 %118, %v36
    %v120 = vpop.permute.xlu0 %119
    %121 = vset.pattern.permute.xlu0 0
    %122 = vperm.xlu0 %121, %v37
    %v123 = vpop.permute.xlu0 %122
    %124 = vset.pattern.permute.xlu0 0
    %125 = vperm.xlu0 %124, %v38
    %v126 = vpop.permute.xlu0 %125
    %127 = vset.pattern.permute.xlu0 0
    %128 = vperm.xlu0 %127, %v39
    %v129 = vpop.permute.xlu0 %128
    %130 = vset.pattern.permute.xlu0 0
    %131 = vperm.xlu0 %130, %v40
    %v132 = vpop.permute.xlu0 %131
    %133 = vset.pattern.permute.xlu0 0
    %134 = vperm.xlu0 %133, %v41
    %v135 = vpop.permute.xlu0 %134
    %136 = vset.pattern.permute.xlu0 0
    %137 = vperm.xlu0 %136, %v42
    %v138 = vpop.permute.xlu0 %137
    %139 = vset.pattern.permute.xlu0 0
    %140 = vperm.xlu0 %139, %v43
    %v141 = vpop.permute.xlu0 %140
    %vm142 = vcmp.eq.s32.totalorder %v45, %v48
    %vm143 = vcmp.eq.s32.totalorder %v45, %v51
    %vm144 = vcmp.eq.s32.totalorder %v45, %v54
    %vm145 = vcmp.eq.s32.totalorder %v45, %v57
    %vm146 = vcmp.eq.s32.totalorder %v45, %v60
    %vm147 = vcmp.eq.s32.totalorder %v45, %v63
    %vm148 = vcmp.eq.s32.totalorder %v45, %v66
    %vm149 = vcmp.eq.s32.totalorder %v45, %v69
    %vm150 = vcmp.eq.s32.totalorder %v45, %v72
    %vm151 = vcmp.eq.s32.totalorder %v45, %v75
    %vm152 = vcmp.eq.s32.totalorder %v45, %v78
    %vm153 = vcmp.eq.s32.totalorder %v45, %v81
    %vm154 = vcmp.eq.s32.totalorder %v45, %v84
    %vm155 = vcmp.eq.s32.totalorder %v45, %v87
    %vm156 = vcmp.eq.s32.totalorder %v45, %v90
    %vm157 = vcmp.eq.s32.totalorder %v45, %v93
    %vm158 = vcmp.eq.s32.totalorder %v45, %v96
    %vm159 = vcmp.eq.s32.totalorder %v45, %v99
    %vm160 = vcmp.eq.s32.totalorder %v45, %v102
    %vm161 = vcmp.eq.s32.totalorder %v45, %v105
    %vm162 = vcmp.eq.s32.totalorder %v45, %v108
    %vm163 = vcmp.eq.s32.totalorder %v45, %v111
    %vm164 = vcmp.eq.s32.totalorder %v45, %v114
    %vm165 = vcmp.eq.s32.totalorder %v45, %v117
    %vm166 = vcmp.eq.s32.totalorder %v45, %v120
    %vm167 = vcmp.eq.s32.totalorder %v45, %v123
    %vm168 = vcmp.eq.s32.totalorder %v45, %v126
    %vm169 = vcmp.eq.s32.totalorder %v45, %v129
    %vm170 = vcmp.eq.s32.totalorder %v45, %v132
    %vm171 = vcmp.eq.s32.totalorder %v45, %v135
    %vm172 = vcmp.eq.s32.totalorder %v45, %v138
    %vm173 = vcmp.eq.s32.totalorder %v45, %v141
    %v174 = vsel %vm142, 1, 0
    %v175 = vsel %vm143, 1, 0
    %v176 = vsel %vm144, 1, 0
    %v177 = vsel %vm145, 1, 0
    %v178 = vsel %vm146, 1, 0
    %v179 = vsel %vm147, 1, 0
    %v180 = vsel %vm148, 1, 0
    %v181 = vsel %vm149, 1, 0
    %v182 = vsel %vm150, 1, 0
    %v183 = vsel %vm151, 1, 0
    %v184 = vsel %vm152, 1, 0
    %v185 = vsel %vm153, 1, 0
    %v186 = vsel %vm154, 1, 0
    %v187 = vsel %vm155, 1, 0
    %v188 = vsel %vm156, 1, 0
    %v189 = vsel %vm157, 1, 0
    %v190 = vsel %vm158, 1, 0
    %v191 = vsel %vm159, 1, 0
    %v192 = vsel %vm160, 1, 0
    %v193 = vsel %vm161, 1, 0
    %v194 = vsel %vm162, 1, 0
    %v195 = vsel %vm163, 1, 0
    %v196 = vsel %vm164, 1, 0
    %v197 = vsel %vm165, 1, 0
    %v198 = vsel %vm166, 1, 0
    %v199 = vsel %vm167, 1, 0
    %v200 = vsel %vm168, 1, 0
    %v201 = vsel %vm169, 1, 0
    %v202 = vsel %vm170, 1, 0
    %v203 = vsel %vm171, 1, 0
    %v204 = vsel %vm172, 1, 0
    %v205 = vsel %vm173, 1, 0
    %v206 = vcvt.s32.f32 %v174
    %v207 = vcvt.s32.f32 %v175
    %v208 = vcvt.s32.f32 %v176
    %v209 = vcvt.s32.f32 %v177
    %v210 = vcvt.s32.f32 %v178
    %v211 = vcvt.s32.f32 %v179
    %v212 = vcvt.s32.f32 %v180
    %v213 = vcvt.s32.f32 %v181
    %v214 = vcvt.s32.f32 %v182
    %v215 = vcvt.s32.f32 %v183
    %v216 = vcvt.s32.f32 %v184
    %v217 = vcvt.s32.f32 %v185
    %v218 = vcvt.s32.f32 %v186
    %v219 = vcvt.s32.f32 %v187
    %v220 = vcvt.s32.f32 %v188
    %v221 = vcvt.s32.f32 %v189
    %v222 = vcvt.s32.f32 %v190
    %v223 = vcvt.s32.f32 %v191
    %v224 = vcvt.s32.f32 %v192
    %v225 = vcvt.s32.f32 %v193
    %v226 = vcvt.s32.f32 %v194
    %v227 = vcvt.s32.f32 %v195
    %v228 = vcvt.s32.f32 %v196
    %v229 = vcvt.s32.f32 %v197
    %v230 = vcvt.s32.f32 %v198
    %v231 = vcvt.s32.f32 %v199
    %v232 = vcvt.s32.f32 %v200
    %v233 = vcvt.s32.f32 %v201
    %v234 = vcvt.s32.f32 %v202
    %v235 = vcvt.s32.f32 %v203
    %v236 = vcvt.s32.f32 %v204
    %v237 = vcvt.s32.f32 %v205
    %v238 = vld [vmem:[%s1] sm:$0xff]
    %v239 = vld [vmem:[%s1 + $0x8] sm:$0xff]
    %v240 = vld [vmem:[%s1 + $0x10] sm:$0xff]
    %v241 = vld [vmem:[%s1 + $0x18] sm:$0xff]
    %v242 = vld [vmem:[%s1 + $0x20] sm:$0xff]
    %v243 = vld [vmem:[%s1 + $0x28] sm:$0xff]
    %v244 = vld [vmem:[%s1 + $0x30] sm:$0xff]
    %v245 = vld [vmem:[%s1 + $0x38] sm:$0xff]
    %vm246 = vcmask 523264
    %v248 = vsel %vm246, %v206, 0
    %v251 = vsel %vm246, %v207, 0
    %v254 = vsel %vm246, %v208, 0
    %v257 = vsel %vm246, %v209, 0
    %v260 = vsel %vm246, %v210, 0
    %v263 = vsel %vm246, %v211, 0
    %v266 = vsel %vm246, %v212, 0
    %v269 = vsel %vm246, %v213, 0
    %v272 = vsel %vm246, %v214, 0
    %v275 = vsel %vm246, %v215, 0
    %v278 = vsel %vm246, %v216, 0
    %v281 = vsel %vm246, %v217, 0
    %v284 = vsel %vm246, %v218, 0
    %v287 = vsel %vm246, %v219, 0
    %v290 = vsel %vm246, %v220, 0
    %v293 = vsel %vm246, %v221, 0
    %v296 = vsel %vm246, %v222, 0
    %v299 = vsel %vm246, %v223, 0
    %v302 = vsel %vm246, %v224, 0
    %v305 = vsel %vm246, %v225, 0
    %v308 = vsel %vm246, %v226, 0
    %v311 = vsel %vm246, %v227, 0
    %v314 = vsel %vm246, %v228, 0
    %v317 = vsel %vm246, %v229, 0
    %v320 = vsel %vm246, %v230, 0
    %v323 = vsel %vm246, %v231, 0
    %v326 = vsel %vm246, %v232, 0
    %v329 = vsel %vm246, %v233, 0
    %v332 = vsel %vm246, %v234, 0
    %v335 = vsel %vm246, %v235, 0
    %v338 = vsel %vm246, %v236, 0
    %v341 = vsel %vm246, %v237, 0
    %343 = vmatprep.subr.mxu0 0.0
    %344 = vmatpush1.msra.mxu0 0.0
    %345 = vmatprep.subr.mxu0 0.0
    %346 = vmatpush1.msra.mxu0 0.0
    %347 = vmatprep.subr.mxu0 0.0
    %348 = vmatpush1.msra.mxu0 0.0
    %349 = vmatprep.subr.mxu0 0.0
    %350 = vmatpush1.msra.mxu0 0.0
    %351 = vmatprep.subr.mxu0 0.0
    %352 = vmatpush1.msra.mxu0 0.0
    %353 = vmatprep.subr.mxu0 0.0
    %354 = vmatpush1.msra.mxu0 0.0
    %355 = vmatprep.subr.mxu0 0.0
    %356 = vmatpush1.msra.mxu0 0.0
    %357 = vmatprep.subr.mxu0 0.0
    %358 = vmatpush1.msra.mxu0 0.0
    %359 = vmatprep.subr.mxu0 0.0
    %v360 = vand.u32 %v245, 4294901760
    %361 = vmatpush1.msra.mxu0 %v360
    %362 = vmatprep.subr.mxu0 0.0
    %v363 = vand.u32 %v244, 4294901760
    %364 = vmatpush1.msra.mxu0 %v363
    %365 = vmatprep.subr.mxu0 0.0
    %v366 = vand.u32 %v243, 4294901760
    %367 = vmatpush1.msra.mxu0 %v366
    %368 = vmatprep.subr.mxu0 0.0
    %v369 = vand.u32 %v242, 4294901760
    %370 = vmatpush1.msra.mxu0 %v369
    %371 = vmatprep.subr.mxu0 0.0
    %v372 = vand.u32 %v241, 4294901760
    %373 = vmatpush1.msra.mxu0 %v372
    %374 = vmatprep.subr.mxu0 0.0
    %v375 = vand.u32 %v240, 4294901760
    %376 = vmatpush1.msra.mxu0 %v375
    %377 = vmatprep.subr.mxu0 0.0
    %v378 = vand.u32 %v239, 4294901760
    %379 = vmatpush1.msra.mxu0 %v378
    %380 = vmatprep.subr.mxu0 0.0
    %v381 = vand.u32 %v238, 4294901760
    %382 = vmatpush1.msra.mxu0 %v381
    %383 = vmatprep.subr.mxu0 0.0
    %384 = vmatpush2.msra.mxu0 0.0
    %385 = vmatprep.subr.mxu0 0.0
    %386 = vmatpush2.msra.mxu0 0.0
    %387 = vmatprep.subr.mxu0 0.0
    %388 = vmatpush2.msra.mxu0 0.0
    %389 = vmatprep.subr.mxu0 0.0
    %390 = vmatpush2.msra.mxu0 0.0
    %391 = vmatprep.subr.mxu0 0.0
    %392 = vmatpush2.msra.mxu0 0.0
    %393 = vmatprep.subr.mxu0 0.0
    %394 = vmatpush2.msra.mxu0 0.0
    %395 = vmatprep.subr.mxu0 0.0
    %396 = vmatpush2.msra.mxu0 0.0
    %397 = vmatprep.subr.mxu0 0.0
    %398 = vmatpush2.msra.mxu0 0.0
    %399 = vmatprep.subr.mxu0 0.0
    %400 = vmatpush2.msra.mxu0 0.0
    %401 = vmatprep.subr.mxu0 0.0
    %402 = vmatpush2.msra.mxu0 0.0
    %403 = vmatprep.subr.mxu0 0.0
    %404 = vmatpush2.msra.mxu0 0.0
    %405 = vmatprep.subr.mxu0 0.0
    %406 = vmatpush2.msra.mxu0 0.0
    %407 = vmatprep.subr.mxu0 0.0
    %408 = vmatpush2.msra.mxu0 0.0
    %409 = vmatprep.subr.mxu0 0.0
    %410 = vmatpush2.msra.mxu0 0.0
    %411 = vmatprep.subr.mxu0 0.0
    %412 = vmatpush2.msra.mxu0 0.0
    %413 = vmatprep.subr.mxu0 0.0
    %414 = vmatpush2.msra.mxu0 0.0
    %415 = vmatprep.mubr.f32.mxu0 0.0
    %v416 = vand.u32 %v248, 4294901760
    %v417 = vsub.f32 %v248, %v416
    %v418 = vand.u32 %v417, 4294901760
    %v419 = vsub.f32 %v417, %v418
    %v420 = vand.u32 %v419, 4294901760
    %421 = vmatmul.mubr.f32.gmra.mxu0 %v420
    %v422 = vpop.f32.mrf.mxu0
    %v423 = vadd.f32 0.0, %v422
    %v424 = vpop.f32.mrf.mxu0
    %425 = vmatprep.mubr.f32.mxu0 0.0
    %v426 = vand.u32 %v251, 4294901760
    %v427 = vsub.f32 %v251, %v426
    %v428 = vand.u32 %v427, 4294901760
    %v429 = vsub.f32 %v427, %v428
    %v430 = vand.u32 %v429, 4294901760
    %431 = vmatmul.mubr.f32.gmra.mxu0 %v430
    %v432 = vpop.f32.mrf.mxu0
    %v433 = vadd.f32 0.0, %v432
    %v434 = vpop.f32.mrf.mxu0
    %435 = vmatprep.mubr.f32.mxu0 0.0
    %v436 = vand.u32 %v254, 4294901760
    %v437 = vsub.f32 %v254, %v436
    %v438 = vand.u32 %v437, 4294901760
    %v439 = vsub.f32 %v437, %v438
    %v440 = vand.u32 %v439, 4294901760
    %441 = vmatmul.mubr.f32.gmra.mxu0 %v440
    %v442 = vpop.f32.mrf.mxu0
    %v443 = vadd.f32 0.0, %v442
    %v444 = vpop.f32.mrf.mxu0
    %445 = vmatprep.mubr.f32.mxu0 0.0
    %v446 = vand.u32 %v257, 4294901760
    %v447 = vsub.f32 %v257, %v446
    %v448 = vand.u32 %v447, 4294901760
    %v449 = vsub.f32 %v447, %v448
    %v450 = vand.u32 %v449, 4294901760
    %451 = vmatmul.mubr.f32.gmra.mxu0 %v450
    %v452 = vpop.f32.mrf.mxu0
    %v453 = vadd.f32 0.0, %v452
    %v454 = vpop.f32.mrf.mxu0
    %455 = vmatprep.mubr.f32.mxu0 0.0
    %v456 = vand.u32 %v260, 4294901760
    %v457 = vsub.f32 %v260, %v456
    %v458 = vand.u32 %v457, 4294901760
    %v459 = vsub.f32 %v457, %v458
    %v460 = vand.u32 %v459, 4294901760
    %461 = vmatmul.mubr.f32.gmra.mxu0 %v460
    %v462 = vpop.f32.mrf.mxu0
    %v463 = vadd.f32 0.0, %v462
    %v464 = vpop.f32.mrf.mxu0
    %465 = vmatprep.mubr.f32.mxu0 0.0
    %v466 = vand.u32 %v263, 4294901760
    %v467 = vsub.f32 %v263, %v466
    %v468 = vand.u32 %v467, 4294901760
    %v469 = vsub.f32 %v467, %v468
    %v470 = vand.u32 %v469, 4294901760
    %471 = vmatmul.mubr.f32.gmra.mxu0 %v470
    %v472 = vpop.f32.mrf.mxu0
    %v473 = vadd.f32 0.0, %v472
    %v474 = vpop.f32.mrf.mxu0
    %475 = vmatprep.mubr.f32.mxu0 0.0
    %v476 = vand.u32 %v266, 4294901760
    %v477 = vsub.f32 %v266, %v476
    %v478 = vand.u32 %v477, 4294901760
    %v479 = vsub.f32 %v477, %v478
    %v480 = vand.u32 %v479, 4294901760
    %481 = vmatmul.mubr.f32.gmra.mxu0 %v480
    %v482 = vpop.f32.mrf.mxu0
    %v483 = vadd.f32 0.0, %v482
    %v484 = vpop.f32.mrf.mxu0
    %485 = vmatprep.mubr.f32.mxu0 0.0
    %v486 = vand.u32 %v269, 4294901760
    %v487 = vsub.f32 %v269, %v486
    %v488 = vand.u32 %v487, 4294901760
    %v489 = vsub.f32 %v487, %v488
    %v490 = vand.u32 %v489, 4294901760
    %491 = vmatmul.mubr.f32.gmra.mxu0 %v490
    %v492 = vpop.f32.mrf.mxu0
    %v493 = vadd.f32 0.0, %v492
    %v494 = vpop.f32.mrf.mxu0
    %495 = vmatprep.mubr.f32.mxu0 0.0
    %v496 = vand.u32 %v272, 4294901760
    %v497 = vsub.f32 %v272, %v496
    %v498 = vand.u32 %v497, 4294901760
    %v499 = vsub.f32 %v497, %v498
    %v500 = vand.u32 %v499, 4294901760
    %501 = vmatmul.mubr.f32.gmra.mxu0 %v500
    %v502 = vpop.f32.mrf.mxu0
    %v503 = vadd.f32 0.0, %v502
    %v504 = vpop.f32.mrf.mxu0
    %505 = vmatprep.mubr.f32.mxu0 0.0
    %v506 = vand.u32 %v275, 4294901760
    %v507 = vsub.f32 %v275, %v506
    %v508 = vand.u32 %v507, 4294901760
    %v509 = vsub.f32 %v507, %v508
    %v510 = vand.u32 %v509, 4294901760
    %511 = vmatmul.mubr.f32.gmra.mxu0 %v510
    %v512 = vpop.f32.mrf.mxu0
    %v513 = vadd.f32 0.0, %v512
    %v514 = vpop.f32.mrf.mxu0
    %515 = vmatprep.mubr.f32.mxu0 0.0
    %v516 = vand.u32 %v278, 4294901760
    %v517 = vsub.f32 %v278, %v516
    %v518 = vand.u32 %v517, 4294901760
    %v519 = vsub.f32 %v517, %v518
    %v520 = vand.u32 %v519, 4294901760
    %521 = vmatmul.mubr.f32.gmra.mxu0 %v520
    %v522 = vpop.f32.mrf.mxu0
    %v523 = vadd.f32 0.0, %v522
    %v524 = vpop.f32.mrf.mxu0
    %525 = vmatprep.mubr.f32.mxu0 0.0
    %v526 = vand.u32 %v281, 4294901760
    %v527 = vsub.f32 %v281, %v526
    %v528 = vand.u32 %v527, 4294901760
    %v529 = vsub.f32 %v527, %v528
    %v530 = vand.u32 %v529, 4294901760
    %531 = vmatmul.mubr.f32.gmra.mxu0 %v530
    %v532 = vpop.f32.mrf.mxu0
    %v533 = vadd.f32 0.0, %v532
    %v534 = vpop.f32.mrf.mxu0
    %535 = vmatprep.mubr.f32.mxu0 0.0
    %v536 = vand.u32 %v284, 4294901760
    %v537 = vsub.f32 %v284, %v536
    %v538 = vand.u32 %v537, 4294901760
    %v539 = vsub.f32 %v537, %v538
    %v540 = vand.u32 %v539, 4294901760
    %541 = vmatmul.mubr.f32.gmra.mxu0 %v540
    %v542 = vpop.f32.mrf.mxu0
    %v543 = vadd.f32 0.0, %v542
    %v544 = vpop.f32.mrf.mxu0
    %545 = vmatprep.mubr.f32.mxu0 0.0
    %v546 = vand.u32 %v287, 4294901760
    %v547 = vsub.f32 %v287, %v546
    %v548 = vand.u32 %v547, 4294901760
    %v549 = vsub.f32 %v547, %v548
    %v550 = vand.u32 %v549, 4294901760
    %551 = vmatmul.mubr.f32.gmra.mxu0 %v550
    %v552 = vpop.f32.mrf.mxu0
    %v553 = vadd.f32 0.0, %v552
    %v554 = vpop.f32.mrf.mxu0
    %555 = vmatprep.mubr.f32.mxu0 0.0
    %v556 = vand.u32 %v290, 4294901760
    %v557 = vsub.f32 %v290, %v556
    %v558 = vand.u32 %v557, 4294901760
    %v559 = vsub.f32 %v557, %v558
    %v560 = vand.u32 %v559, 4294901760
    %561 = vmatmul.mubr.f32.gmra.mxu0 %v560
    %v562 = vpop.f32.mrf.mxu0
    %v563 = vadd.f32 0.0, %v562
    %v564 = vpop.f32.mrf.mxu0
    %565 = vmatprep.mubr.f32.mxu0 0.0
    %v566 = vand.u32 %v293, 4294901760
    %v567 = vsub.f32 %v293, %v566
    %v568 = vand.u32 %v567, 4294901760
    %v569 = vsub.f32 %v567, %v568
    %v570 = vand.u32 %v569, 4294901760
    %571 = vmatmul.mubr.f32.gmra.mxu0 %v570
    %v572 = vpop.f32.mrf.mxu0
    %v573 = vadd.f32 0.0, %v572
    %v574 = vpop.f32.mrf.mxu0
    %575 = vmatprep.mubr.f32.mxu0 0.0
    %v576 = vand.u32 %v296, 4294901760
    %v577 = vsub.f32 %v296, %v576
    %v578 = vand.u32 %v577, 4294901760
    %v579 = vsub.f32 %v577, %v578
    %v580 = vand.u32 %v579, 4294901760
    %581 = vmatmul.mubr.f32.gmra.mxu0 %v580
    %v582 = vpop.f32.mrf.mxu0
    %v583 = vadd.f32 0.0, %v582
    %v584 = vpop.f32.mrf.mxu0
    %585 = vmatprep.mubr.f32.mxu0 0.0
    %v586 = vand.u32 %v299, 4294901760
    %v587 = vsub.f32 %v299, %v586
    %v588 = vand.u32 %v587, 4294901760
    %v589 = vsub.f32 %v587, %v588
    %v590 = vand.u32 %v589, 4294901760
    %591 = vmatmul.mubr.f32.gmra.mxu0 %v590
    %v592 = vpop.f32.mrf.mxu0
    %v593 = vadd.f32 0.0, %v592
    %v594 = vpop.f32.mrf.mxu0
    %595 = vmatprep.mubr.f32.mxu0 0.0
    %v596 = vand.u32 %v302, 4294901760
    %v597 = vsub.f32 %v302, %v596
    %v598 = vand.u32 %v597, 4294901760
    %v599 = vsub.f32 %v597, %v598
    %v600 = vand.u32 %v599, 4294901760
    %601 = vmatmul.mubr.f32.gmra.mxu0 %v600
    %v602 = vpop.f32.mrf.mxu0
    %v603 = vadd.f32 0.0, %v602
    %v604 = vpop.f32.mrf.mxu0
    %605 = vmatprep.mubr.f32.mxu0 0.0
    %v606 = vand.u32 %v305, 4294901760
    %v607 = vsub.f32 %v305, %v606
    %v608 = vand.u32 %v607, 4294901760
    %v609 = vsub.f32 %v607, %v608
    %v610 = vand.u32 %v609, 4294901760
    %611 = vmatmul.mubr.f32.gmra.mxu0 %v610
    %v612 = vpop.f32.mrf.mxu0
    %v613 = vadd.f32 0.0, %v612
    %v614 = vpop.f32.mrf.mxu0
    %615 = vmatprep.mubr.f32.mxu0 0.0
    %v616 = vand.u32 %v308, 4294901760
    %v617 = vsub.f32 %v308, %v616
    %v618 = vand.u32 %v617, 4294901760
    %v619 = vsub.f32 %v617, %v618
    %v620 = vand.u32 %v619, 4294901760
    %621 = vmatmul.mubr.f32.gmra.mxu0 %v620
    %v622 = vpop.f32.mrf.mxu0
    %v623 = vadd.f32 0.0, %v622
    %v624 = vpop.f32.mrf.mxu0
    %625 = vmatprep.mubr.f32.mxu0 0.0
    %v626 = vand.u32 %v311, 4294901760
    %v627 = vsub.f32 %v311, %v626
    %v628 = vand.u32 %v627, 4294901760
    %v629 = vsub.f32 %v627, %v628
    %v630 = vand.u32 %v629, 4294901760
    %631 = vmatmul.mubr.f32.gmra.mxu0 %v630
    %v632 = vpop.f32.mrf.mxu0
    %v633 = vadd.f32 0.0, %v632
    %v634 = vpop.f32.mrf.mxu0
    %635 = vmatprep.mubr.f32.mxu0 0.0
    %v636 = vand.u32 %v314, 4294901760
    %v637 = vsub.f32 %v314, %v636
    %v638 = vand.u32 %v637, 4294901760
    %v639 = vsub.f32 %v637, %v638
    %v640 = vand.u32 %v639, 4294901760
    %641 = vmatmul.mubr.f32.gmra.mxu0 %v640
    %v642 = vpop.f32.mrf.mxu0
    %v643 = vadd.f32 0.0, %v642
    %v644 = vpop.f32.mrf.mxu0
    %645 = vmatprep.mubr.f32.mxu0 0.0
    %v646 = vand.u32 %v317, 4294901760
    %v647 = vsub.f32 %v317, %v646
    %v648 = vand.u32 %v647, 4294901760
    %v649 = vsub.f32 %v647, %v648
    %v650 = vand.u32 %v649, 4294901760
    %651 = vmatmul.mubr.f32.gmra.mxu0 %v650
    %v652 = vpop.f32.mrf.mxu0
    %v653 = vadd.f32 0.0, %v652
    %v654 = vpop.f32.mrf.mxu0
    %655 = vmatprep.mubr.f32.mxu0 0.0
    %v656 = vand.u32 %v320, 4294901760
    %v657 = vsub.f32 %v320, %v656
    %v658 = vand.u32 %v657, 4294901760
    %v659 = vsub.f32 %v657, %v658
    %v660 = vand.u32 %v659, 4294901760
    %661 = vmatmul.mubr.f32.gmra.mxu0 %v660
    %v662 = vpop.f32.mrf.mxu0
    %v663 = vadd.f32 0.0, %v662
    %v664 = vpop.f32.mrf.mxu0
    %665 = vmatprep.mubr.f32.mxu0 0.0
    %v666 = vand.u32 %v323, 4294901760
    %v667 = vsub.f32 %v323, %v666
    %v668 = vand.u32 %v667, 4294901760
    %v669 = vsub.f32 %v667, %v668
    %v670 = vand.u32 %v669, 4294901760
    %671 = vmatmul.mubr.f32.gmra.mxu0 %v670
    %v672 = vpop.f32.mrf.mxu0
    %v673 = vadd.f32 0.0, %v672
    %v674 = vpop.f32.mrf.mxu0
    %675 = vmatprep.mubr.f32.mxu0 0.0
    %v676 = vand.u32 %v326, 4294901760
    %v677 = vsub.f32 %v326, %v676
    %v678 = vand.u32 %v677, 4294901760
    %v679 = vsub.f32 %v677, %v678
    %v680 = vand.u32 %v679, 4294901760
    %681 = vmatmul.mubr.f32.gmra.mxu0 %v680
    %v682 = vpop.f32.mrf.mxu0
    %v683 = vadd.f32 0.0, %v682
    %v684 = vpop.f32.mrf.mxu0
    %685 = vmatprep.mubr.f32.mxu0 0.0
    %v686 = vand.u32 %v329, 4294901760
    %v687 = vsub.f32 %v329, %v686
    %v688 = vand.u32 %v687, 4294901760
    %v689 = vsub.f32 %v687, %v688
    %v690 = vand.u32 %v689, 4294901760
    %691 = vmatmul.mubr.f32.gmra.mxu0 %v690
    %v692 = vpop.f32.mrf.mxu0
    %v693 = vadd.f32 0.0, %v692
    %v694 = vpop.f32.mrf.mxu0
    %695 = vmatprep.mubr.f32.mxu0 0.0
    %v696 = vand.u32 %v332, 4294901760
    %v697 = vsub.f32 %v332, %v696
    %v698 = vand.u32 %v697, 4294901760
    %v699 = vsub.f32 %v697, %v698
    %v700 = vand.u32 %v699, 4294901760
    %701 = vmatmul.mubr.f32.gmra.mxu0 %v700
    %v702 = vpop.f32.mrf.mxu0
    %v703 = vadd.f32 0.0, %v702
    %v704 = vpop.f32.mrf.mxu0
    %705 = vmatprep.mubr.f32.mxu0 0.0
    %v706 = vand.u32 %v335, 4294901760
    %v707 = vsub.f32 %v335, %v706
    %v708 = vand.u32 %v707, 4294901760
    %v709 = vsub.f32 %v707, %v708
    %v710 = vand.u32 %v709, 4294901760
    %711 = vmatmul.mubr.f32.gmra.mxu0 %v710
    %v712 = vpop.f32.mrf.mxu0
    %v713 = vadd.f32 0.0, %v712
    %v714 = vpop.f32.mrf.mxu0
    %715 = vmatprep.mubr.f32.mxu0 0.0
    %v716 = vand.u32 %v338, 4294901760
    %v717 = vsub.f32 %v338, %v716
    %v718 = vand.u32 %v717, 4294901760
    %v719 = vsub.f32 %v717, %v718
    %v720 = vand.u32 %v719, 4294901760
    %721 = vmatmul.mubr.f32.gmra.mxu0 %v720
    %v722 = vpop.f32.mrf.mxu0
    %v723 = vadd.f32 0.0, %v722
    %v724 = vpop.f32.mrf.mxu0
    %725 = vmatprep.mubr.f32.mxu0 0.0
    %v726 = vand.u32 %v341, 4294901760
    %v727 = vsub.f32 %v341, %v726
    %v728 = vand.u32 %v727, 4294901760
    %v729 = vsub.f32 %v727, %v728
    %v730 = vand.u32 %v729, 4294901760
    %731 = vmatmul.mubr.f32.gmra.mxu0 %v730
    %v732 = vpop.f32.mrf.mxu0
    %v733 = vadd.f32 0.0, %v732
    %v734 = vpop.f32.mrf.mxu0
    %735 = vdwg.mxu0
    %736 = vmatprep.subr.mxu0 0.0
    %737 = vmatpush1.msra.mxu0 0.0
    %738 = vmatprep.subr.mxu0 0.0
    %739 = vmatpush1.msra.mxu0 0.0
    %740 = vmatprep.subr.mxu0 0.0
    %741 = vmatpush1.msra.mxu0 0.0
    %742 = vmatprep.subr.mxu0 0.0
    %743 = vmatpush1.msra.mxu0 0.0
    %744 = vmatprep.subr.mxu0 0.0
    %745 = vmatpush1.msra.mxu0 0.0
    %746 = vmatprep.subr.mxu0 0.0
    %747 = vmatpush1.msra.mxu0 0.0
    %748 = vmatprep.subr.mxu0 0.0
    %749 = vmatpush1.msra.mxu0 0.0
    %750 = vmatprep.subr.mxu0 0.0
    %751 = vmatpush1.msra.mxu0 0.0
    %752 = vmatprep.subr.mxu0 0.0
    %v753 = vand.u32 %v245, 4294901760
    %v754 = vsub.f32 %v245, %v753
    %v755 = vand.u32 %v754, 4294901760
    %v756 = vsub.f32 %v754, %v755
    %v757 = vand.u32 %v756, 4294901760
    %758 = vmatpush1.msra.mxu0 %v757
    %759 = vmatprep.subr.mxu0 0.0
    %v760 = vand.u32 %v244, 4294901760
    %v761 = vsub.f32 %v244, %v760
    %v762 = vand.u32 %v761, 4294901760
    %v763 = vsub.f32 %v761, %v762
    %v764 = vand.u32 %v763, 4294901760
    %765 = vmatpush1.msra.mxu0 %v764
    %766 = vmatprep.subr.mxu0 0.0
    %v767 = vand.u32 %v243, 4294901760
    %v768 = vsub.f32 %v243, %v767
    %v769 = vand.u32 %v768, 4294901760
    %v770 = vsub.f32 %v768, %v769
    %v771 = vand.u32 %v770, 4294901760
    %772 = vmatpush1.msra.mxu0 %v771
    %773 = vmatprep.subr.mxu0 0.0
    %v774 = vand.u32 %v242, 4294901760
    %v775 = vsub.f32 %v242, %v774
    %v776 = vand.u32 %v775, 4294901760
    %v777 = vsub.f32 %v775, %v776
    %v778 = vand.u32 %v777, 4294901760
    %779 = vmatpush1.msra.mxu0 %v778
    %780 = vmatprep.subr.mxu0 0.0
    %v781 = vand.u32 %v241, 4294901760
    %v782 = vsub.f32 %v241, %v781
    %v783 = vand.u32 %v782, 4294901760
    %v784 = vsub.f32 %v782, %v783
    %v785 = vand.u32 %v784, 4294901760
    %786 = vmatpush1.msra.mxu0 %v785
    %787 = vmatprep.subr.mxu0 0.0
    %v788 = vand.u32 %v240, 4294901760
    %v789 = vsub.f32 %v240, %v788
    %v790 = vand.u32 %v789, 4294901760
    %v791 = vsub.f32 %v789, %v790
    %v792 = vand.u32 %v791, 4294901760
    %793 = vmatpush1.msra.mxu0 %v792
    %794 = vmatprep.subr.mxu0 0.0
    %v795 = vand.u32 %v239, 4294901760
    %v796 = vsub.f32 %v239, %v795
    %v797 = vand.u32 %v796, 4294901760
    %v798 = vsub.f32 %v796, %v797
    %v799 = vand.u32 %v798, 4294901760
    %800 = vmatpush1.msra.mxu0 %v799
    %801 = vmatprep.subr.mxu0 0.0
    %v802 = vand.u32 %v238, 4294901760
    %v803 = vsub.f32 %v238, %v802
    %v804 = vand.u32 %v803, 4294901760
    %v805 = vsub.f32 %v803, %v804
    %v806 = vand.u32 %v805, 4294901760
    %807 = vmatpush1.msra.mxu0 %v806
    %808 = vmatprep.subr.mxu0 0.0
    %809 = vmatpush2.msra.mxu0 0.0
    %810 = vmatprep.subr.mxu0 0.0
    %811 = vmatpush2.msra.mxu0 0.0
    %812 = vmatprep.subr.mxu0 0.0
    %813 = vmatpush2.msra.mxu0 0.0
    %814 = vmatprep.subr.mxu0 0.0
    %815 = vmatpush2.msra.mxu0 0.0
    %816 = vmatprep.subr.mxu0 0.0
    %817 = vmatpush2.msra.mxu0 0.0
    %818 = vmatprep.subr.mxu0 0.0
    %819 = vmatpush2.msra.mxu0 0.0
    %820 = vmatprep.subr.mxu0 0.0
    %821 = vmatpush2.msra.mxu0 0.0
    %822 = vmatprep.subr.mxu0 0.0
    %823 = vmatpush2.msra.mxu0 0.0
    %824 = vmatprep.subr.mxu0 0.0
    %825 = vmatpush2.msra.mxu0 0.0
    %826 = vmatprep.subr.mxu0 0.0
    %827 = vmatpush2.msra.mxu0 0.0
    %828 = vmatprep.subr.mxu0 0.0
    %829 = vmatpush2.msra.mxu0 0.0
    %830 = vmatprep.subr.mxu0 0.0
    %831 = vmatpush2.msra.mxu0 0.0
    %832 = vmatprep.subr.mxu0 0.0
    %833 = vmatpush2.msra.mxu0 0.0
    %834 = vmatprep.subr.mxu0 0.0
    %835 = vmatpush2.msra.mxu0 0.0
    %836 = vmatprep.subr.mxu0 0.0
    %837 = vmatpush2.msra.mxu0 0.0
    %838 = vmatprep.subr.mxu0 0.0
    %839 = vmatpush2.msra.mxu0 0.0
    %840 = vmatprep.mubr.f32.mxu0 0.0
    %v841 = vand.u32 %v248, 4294901760
    %842 = vmatmul.mubr.f32.gmra.mxu0 %v841
    %v843 = vpop.f32.mrf.mxu0
    %v844 = vadd.f32 %v423, %v843
    %v845 = vpop.f32.mrf.mxu0
    %846 = vmatprep.mubr.f32.mxu0 0.0
    %v847 = vand.u32 %v251, 4294901760
    %848 = vmatmul.mubr.f32.gmra.mxu0 %v847
    %v849 = vpop.f32.mrf.mxu0
    %v850 = vadd.f32 %v433, %v849
    %v851 = vpop.f32.mrf.mxu0
    %852 = vmatprep.mubr.f32.mxu0 0.0
    %v853 = vand.u32 %v254, 4294901760
    %854 = vmatmul.mubr.f32.gmra.mxu0 %v853
    %v855 = vpop.f32.mrf.mxu0
    %v856 = vadd.f32 %v443, %v855
    %v857 = vpop.f32.mrf.mxu0
    %858 = vmatprep.mubr.f32.mxu0 0.0
    %v859 = vand.u32 %v257, 4294901760
    %860 = vmatmul.mubr.f32.gmra.mxu0 %v859
    %v861 = vpop.f32.mrf.mxu0
    %v862 = vadd.f32 %v453, %v861
    %v863 = vpop.f32.mrf.mxu0
    %864 = vmatprep.mubr.f32.mxu0 0.0
    %v865 = vand.u32 %v260, 4294901760
    %866 = vmatmul.mubr.f32.gmra.mxu0 %v865
    %v867 = vpop.f32.mrf.mxu0
    %v868 = vadd.f32 %v463, %v867
    %v869 = vpop.f32.mrf.mxu0
    %870 = vmatprep.mubr.f32.mxu0 0.0
    %v871 = vand.u32 %v263, 4294901760
    %872 = vmatmul.mubr.f32.gmra.mxu0 %v871
    %v873 = vpop.f32.mrf.mxu0
    %v874 = vadd.f32 %v473, %v873
    %v875 = vpop.f32.mrf.mxu0
    %876 = vmatprep.mubr.f32.mxu0 0.0
    %v877 = vand.u32 %v266, 4294901760
    %878 = vmatmul.mubr.f32.gmra.mxu0 %v877
    %v879 = vpop.f32.mrf.mxu0
    %v880 = vadd.f32 %v483, %v879
    %v881 = vpop.f32.mrf.mxu0
    %882 = vmatprep.mubr.f32.mxu0 0.0
    %v883 = vand.u32 %v269, 4294901760
    %884 = vmatmul.mubr.f32.gmra.mxu0 %v883
    %v885 = vpop.f32.mrf.mxu0
    %v886 = vadd.f32 %v493, %v885
    %v887 = vpop.f32.mrf.mxu0
    %888 = vmatprep.mubr.f32.mxu0 0.0
    %v889 = vand.u32 %v272, 4294901760
    %890 = vmatmul.mubr.f32.gmra.mxu0 %v889
    %v891 = vpop.f32.mrf.mxu0
    %v892 = vadd.f32 %v503, %v891
    %v893 = vpop.f32.mrf.mxu0
    %894 = vmatprep.mubr.f32.mxu0 0.0
    %v895 = vand.u32 %v275, 4294901760
    %896 = vmatmul.mubr.f32.gmra.mxu0 %v895
    %v897 = vpop.f32.mrf.mxu0
    %v898 = vadd.f32 %v513, %v897
    %v899 = vpop.f32.mrf.mxu0
    %900 = vmatprep.mubr.f32.mxu0 0.0
    %v901 = vand.u32 %v278, 4294901760
    %902 = vmatmul.mubr.f32.gmra.mxu0 %v901
    %v903 = vpop.f32.mrf.mxu0
    %v904 = vadd.f32 %v523, %v903
    %v905 = vpop.f32.mrf.mxu0
    %906 = vmatprep.mubr.f32.mxu0 0.0
    %v907 = vand.u32 %v281, 4294901760
    %908 = vmatmul.mubr.f32.gmra.mxu0 %v907
    %v909 = vpop.f32.mrf.mxu0
    %v910 = vadd.f32 %v533, %v909
    %v911 = vpop.f32.mrf.mxu0
    %912 = vmatprep.mubr.f32.mxu0 0.0
    %v913 = vand.u32 %v284, 4294901760
    %914 = vmatmul.mubr.f32.gmra.mxu0 %v913
    %v915 = vpop.f32.mrf.mxu0
    %v916 = vadd.f32 %v543, %v915
    %v917 = vpop.f32.mrf.mxu0
    %918 = vmatprep.mubr.f32.mxu0 0.0
    %v919 = vand.u32 %v287, 4294901760
    %920 = vmatmul.mubr.f32.gmra.mxu0 %v919
    %v921 = vpop.f32.mrf.mxu0
    %v922 = vadd.f32 %v553, %v921
    %v923 = vpop.f32.mrf.mxu0
    %924 = vmatprep.mubr.f32.mxu0 0.0
    %v925 = vand.u32 %v290, 4294901760
    %926 = vmatmul.mubr.f32.gmra.mxu0 %v925
    %v927 = vpop.f32.mrf.mxu0
    %v928 = vadd.f32 %v563, %v927
    %v929 = vpop.f32.mrf.mxu0
    %930 = vmatprep.mubr.f32.mxu0 0.0
    %v931 = vand.u32 %v293, 4294901760
    %932 = vmatmul.mubr.f32.gmra.mxu0 %v931
    %v933 = vpop.f32.mrf.mxu0
    %v934 = vadd.f32 %v573, %v933
    %v935 = vpop.f32.mrf.mxu0
    %936 = vmatprep.mubr.f32.mxu0 0.0
    %v937 = vand.u32 %v296, 4294901760
    %938 = vmatmul.mubr.f32.gmra.mxu0 %v937
    %v939 = vpop.f32.mrf.mxu0
    %v940 = vadd.f32 %v583, %v939
    %v941 = vpop.f32.mrf.mxu0
    %942 = vmatprep.mubr.f32.mxu0 0.0
    %v943 = vand.u32 %v299, 4294901760
    %944 = vmatmul.mubr.f32.gmra.mxu0 %v943
    %v945 = vpop.f32.mrf.mxu0
    %v946 = vadd.f32 %v593, %v945
    %v947 = vpop.f32.mrf.mxu0
    %948 = vmatprep.mubr.f32.mxu0 0.0
    %v949 = vand.u32 %v302, 4294901760
    %950 = vmatmul.mubr.f32.gmra.mxu0 %v949
    %v951 = vpop.f32.mrf.mxu0
    %v952 = vadd.f32 %v603, %v951
    %v953 = vpop.f32.mrf.mxu0
    %954 = vmatprep.mubr.f32.mxu0 0.0
    %v955 = vand.u32 %v305, 4294901760
    %956 = vmatmul.mubr.f32.gmra.mxu0 %v955
    %v957 = vpop.f32.mrf.mxu0
    %v958 = vadd.f32 %v613, %v957
    %v959 = vpop.f32.mrf.mxu0
    %960 = vmatprep.mubr.f32.mxu0 0.0
    %v961 = vand.u32 %v308, 4294901760
    %962 = vmatmul.mubr.f32.gmra.mxu0 %v961
    %v963 = vpop.f32.mrf.mxu0
    %v964 = vadd.f32 %v623, %v963
    %v965 = vpop.f32.mrf.mxu0
    %966 = vmatprep.mubr.f32.mxu0 0.0
    %v967 = vand.u32 %v311, 4294901760
    %968 = vmatmul.mubr.f32.gmra.mxu0 %v967
    %v969 = vpop.f32.mrf.mxu0
    %v970 = vadd.f32 %v633, %v969
    %v971 = vpop.f32.mrf.mxu0
    %972 = vmatprep.mubr.f32.mxu0 0.0
    %v973 = vand.u32 %v314, 4294901760
    %974 = vmatmul.mubr.f32.gmra.mxu0 %v973
    %v975 = vpop.f32.mrf.mxu0
    %v976 = vadd.f32 %v643, %v975
    %v977 = vpop.f32.mrf.mxu0
    %978 = vmatprep.mubr.f32.mxu0 0.0
    %v979 = vand.u32 %v317, 4294901760
    %980 = vmatmul.mubr.f32.gmra.mxu0 %v979
    %v981 = vpop.f32.mrf.mxu0
    %v982 = vadd.f32 %v653, %v981
    %v983 = vpop.f32.mrf.mxu0
    %984 = vmatprep.mubr.f32.mxu0 0.0
    %v985 = vand.u32 %v320, 4294901760
    %986 = vmatmul.mubr.f32.gmra.mxu0 %v985
    %v987 = vpop.f32.mrf.mxu0
    %v988 = vadd.f32 %v663, %v987
    %v989 = vpop.f32.mrf.mxu0
    %990 = vmatprep.mubr.f32.mxu0 0.0
    %v991 = vand.u32 %v323, 4294901760
    %992 = vmatmul.mubr.f32.gmra.mxu0 %v991
    %v993 = vpop.f32.mrf.mxu0
    %v994 = vadd.f32 %v673, %v993
    %v995 = vpop.f32.mrf.mxu0
    %996 = vmatprep.mubr.f32.mxu0 0.0
    %v997 = vand.u32 %v326, 4294901760
    %998 = vmatmul.mubr.f32.gmra.mxu0 %v997
    %v999 = vpop.f32.mrf.mxu0
    %v1000 = vadd.f32 %v683, %v999
    %v1001 = vpop.f32.mrf.mxu0
    %1002 = vmatprep.mubr.f32.mxu0 0.0
    %v1003 = vand.u32 %v329, 4294901760
    %1004 = vmatmul.mubr.f32.gmra.mxu0 %v1003
    %v1005 = vpop.f32.mrf.mxu0
    %v1006 = vadd.f32 %v693, %v1005
    %v1007 = vpop.f32.mrf.mxu0
    %1008 = vmatprep.mubr.f32.mxu0 0.0
    %v1009 = vand.u32 %v332, 4294901760
    %1010 = vmatmul.mubr.f32.gmra.mxu0 %v1009
    %v1011 = vpop.f32.mrf.mxu0
    %v1012 = vadd.f32 %v703, %v1011
    %v1013 = vpop.f32.mrf.mxu0
    %1014 = vmatprep.mubr.f32.mxu0 0.0
    %v1015 = vand.u32 %v335, 4294901760
    %1016 = vmatmul.mubr.f32.gmra.mxu0 %v1015
    %v1017 = vpop.f32.mrf.mxu0
    %v1018 = vadd.f32 %v713, %v1017
    %v1019 = vpop.f32.mrf.mxu0
    %1020 = vmatprep.mubr.f32.mxu0 0.0
    %v1021 = vand.u32 %v338, 4294901760
    %1022 = vmatmul.mubr.f32.gmra.mxu0 %v1021
    %v1023 = vpop.f32.mrf.mxu0
    %v1024 = vadd.f32 %v723, %v1023
    %v1025 = vpop.f32.mrf.mxu0
    %1026 = vmatprep.mubr.f32.mxu0 0.0
    %v1027 = vand.u32 %v341, 4294901760
    %1028 = vmatmul.mubr.f32.gmra.mxu0 %v1027
    %v1029 = vpop.f32.mrf.mxu0
    %v1030 = vadd.f32 %v733, %v1029
    %v1031 = vpop.f32.mrf.mxu0
    %1032 = vdwg.mxu0
    %1033 = vmatprep.subr.mxu0 0.0
    %1034 = vmatpush1.msra.mxu0 0.0
    %1035 = vmatprep.subr.mxu0 0.0
    %1036 = vmatpush1.msra.mxu0 0.0
    %1037 = vmatprep.subr.mxu0 0.0
    %1038 = vmatpush1.msra.mxu0 0.0
    %1039 = vmatprep.subr.mxu0 0.0
    %1040 = vmatpush1.msra.mxu0 0.0
    %1041 = vmatprep.subr.mxu0 0.0
    %1042 = vmatpush1.msra.mxu0 0.0
    %1043 = vmatprep.subr.mxu0 0.0
    %1044 = vmatpush1.msra.mxu0 0.0
    %1045 = vmatprep.subr.mxu0 0.0
    %1046 = vmatpush1.msra.mxu0 0.0
    %1047 = vmatprep.subr.mxu0 0.0
    %1048 = vmatpush1.msra.mxu0 0.0
    %1049 = vmatprep.subr.mxu0 0.0
    %v1050 = vand.u32 %v245, 4294901760
    %v1051 = vsub.f32 %v245, %v1050
    %1052 = vmatpush1.msra.mxu0 %v1051
    %1053 = vmatprep.subr.mxu0 0.0
    %v1054 = vand.u32 %v244, 4294901760
    %v1055 = vsub.f32 %v244, %v1054
    %1056 = vmatpush1.msra.mxu0 %v1055
    %1057 = vmatprep.subr.mxu0 0.0
    %v1058 = vand.u32 %v243, 4294901760
    %v1059 = vsub.f32 %v243, %v1058
    %1060 = vmatpush1.msra.mxu0 %v1059
    %1061 = vmatprep.subr.mxu0 0.0
    %v1062 = vand.u32 %v242, 4294901760
    %v1063 = vsub.f32 %v242, %v1062
    %1064 = vmatpush1.msra.mxu0 %v1063
    %1065 = vmatprep.subr.mxu0 0.0
    %v1066 = vand.u32 %v241, 4294901760
    %v1067 = vsub.f32 %v241, %v1066
    %1068 = vmatpush1.msra.mxu0 %v1067
    %1069 = vmatprep.subr.mxu0 0.0
    %v1070 = vand.u32 %v240, 4294901760
    %v1071 = vsub.f32 %v240, %v1070
    %1072 = vmatpush1.msra.mxu0 %v1071
    %1073 = vmatprep.subr.mxu0 0.0
    %v1074 = vand.u32 %v239, 4294901760
    %v1075 = vsub.f32 %v239, %v1074
    %1076 = vmatpush1.msra.mxu0 %v1075
    %1077 = vmatprep.subr.mxu0 0.0
    %v1078 = vand.u32 %v238, 4294901760
    %v1079 = vsub.f32 %v238, %v1078
    %1080 = vmatpush1.msra.mxu0 %v1079
    %1081 = vmatprep.subr.mxu0 0.0
    %1082 = vmatpush2.msra.mxu0 0.0
    %1083 = vmatprep.subr.mxu0 0.0
    %1084 = vmatpush2.msra.mxu0 0.0
    %1085 = vmatprep.subr.mxu0 0.0
    %1086 = vmatpush2.msra.mxu0 0.0
    %1087 = vmatprep.subr.mxu0 0.0
    %1088 = vmatpush2.msra.mxu0 0.0
    %1089 = vmatprep.subr.mxu0 0.0
    %1090 = vmatpush2.msra.mxu0 0.0
    %1091 = vmatprep.subr.mxu0 0.0
    %1092 = vmatpush2.msra.mxu0 0.0
    %1093 = vmatprep.subr.mxu0 0.0
    %1094 = vmatpush2.msra.mxu0 0.0
    %1095 = vmatprep.subr.mxu0 0.0
    %1096 = vmatpush2.msra.mxu0 0.0
    %1097 = vmatprep.subr.mxu0 0.0
    %1098 = vmatpush2.msra.mxu0 0.0
    %1099 = vmatprep.subr.mxu0 0.0
    %1100 = vmatpush2.msra.mxu0 0.0
    %1101 = vmatprep.subr.mxu0 0.0
    %1102 = vmatpush2.msra.mxu0 0.0
    %1103 = vmatprep.subr.mxu0 0.0
    %1104 = vmatpush2.msra.mxu0 0.0
    %1105 = vmatprep.subr.mxu0 0.0
    %1106 = vmatpush2.msra.mxu0 0.0
    %1107 = vmatprep.subr.mxu0 0.0
    %1108 = vmatpush2.msra.mxu0 0.0
    %1109 = vmatprep.subr.mxu0 0.0
    %1110 = vmatpush2.msra.mxu0 0.0
    %1111 = vmatprep.subr.mxu0 0.0
    %1112 = vmatpush2.msra.mxu0 0.0
    %1113 = vmatprep.mubr.f32.mxu0 0.0
    %v1114 = vand.u32 %v248, 4294901760
    %v1115 = vsub.f32 %v248, %v1114
    %1116 = vmatmul.mubr.f32.gmra.mxu0 %v1115
    %v1117 = vpop.f32.mrf.mxu0
    %v1118 = vadd.f32 %v844, %v1117
    %v1119 = vpop.f32.mrf.mxu0
    %1120 = vmatprep.mubr.f32.mxu0 0.0
    %v1121 = vand.u32 %v251, 4294901760
    %v1122 = vsub.f32 %v251, %v1121
    %1123 = vmatmul.mubr.f32.gmra.mxu0 %v1122
    %v1124 = vpop.f32.mrf.mxu0
    %v1125 = vadd.f32 %v850, %v1124
    %v1126 = vpop.f32.mrf.mxu0
    %1127 = vmatprep.mubr.f32.mxu0 0.0
    %v1128 = vand.u32 %v254, 4294901760
    %v1129 = vsub.f32 %v254, %v1128
    %1130 = vmatmul.mubr.f32.gmra.mxu0 %v1129
    %v1131 = vpop.f32.mrf.mxu0
    %v1132 = vadd.f32 %v856, %v1131
    %v1133 = vpop.f32.mrf.mxu0
    %1134 = vmatprep.mubr.f32.mxu0 0.0
    %v1135 = vand.u32 %v257, 4294901760
    %v1136 = vsub.f32 %v257, %v1135
    %1137 = vmatmul.mubr.f32.gmra.mxu0 %v1136
    %v1138 = vpop.f32.mrf.mxu0
    %v1139 = vadd.f32 %v862, %v1138
    %v1140 = vpop.f32.mrf.mxu0
    %1141 = vmatprep.mubr.f32.mxu0 0.0
    %v1142 = vand.u32 %v260, 4294901760
    %v1143 = vsub.f32 %v260, %v1142
    %1144 = vmatmul.mubr.f32.gmra.mxu0 %v1143
    %v1145 = vpop.f32.mrf.mxu0
    %v1146 = vadd.f32 %v868, %v1145
    %v1147 = vpop.f32.mrf.mxu0
    %1148 = vmatprep.mubr.f32.mxu0 0.0
    %v1149 = vand.u32 %v263, 4294901760
    %v1150 = vsub.f32 %v263, %v1149
    %1151 = vmatmul.mubr.f32.gmra.mxu0 %v1150
    %v1152 = vpop.f32.mrf.mxu0
    %v1153 = vadd.f32 %v874, %v1152
    %v1154 = vpop.f32.mrf.mxu0
    %1155 = vmatprep.mubr.f32.mxu0 0.0
    %v1156 = vand.u32 %v266, 4294901760
    %v1157 = vsub.f32 %v266, %v1156
    %1158 = vmatmul.mubr.f32.gmra.mxu0 %v1157
    %v1159 = vpop.f32.mrf.mxu0
    %v1160 = vadd.f32 %v880, %v1159
    %v1161 = vpop.f32.mrf.mxu0
    %1162 = vmatprep.mubr.f32.mxu0 0.0
    %v1163 = vand.u32 %v269, 4294901760
    %v1164 = vsub.f32 %v269, %v1163
    %1165 = vmatmul.mubr.f32.gmra.mxu0 %v1164
    %v1166 = vpop.f32.mrf.mxu0
    %v1167 = vadd.f32 %v886, %v1166
    %v1168 = vpop.f32.mrf.mxu0
    %1169 = vmatprep.mubr.f32.mxu0 0.0
    %v1170 = vand.u32 %v272, 4294901760
    %v1171 = vsub.f32 %v272, %v1170
    %1172 = vmatmul.mubr.f32.gmra.mxu0 %v1171
    %v1173 = vpop.f32.mrf.mxu0
    %v1174 = vadd.f32 %v892, %v1173
    %v1175 = vpop.f32.mrf.mxu0
    %1176 = vmatprep.mubr.f32.mxu0 0.0
    %v1177 = vand.u32 %v275, 4294901760
    %v1178 = vsub.f32 %v275, %v1177
    %1179 = vmatmul.mubr.f32.gmra.mxu0 %v1178
    %v1180 = vpop.f32.mrf.mxu0
    %v1181 = vadd.f32 %v898, %v1180
    %v1182 = vpop.f32.mrf.mxu0
    %1183 = vmatprep.mubr.f32.mxu0 0.0
    %v1184 = vand.u32 %v278, 4294901760
    %v1185 = vsub.f32 %v278, %v1184
    %1186 = vmatmul.mubr.f32.gmra.mxu0 %v1185
    %v1187 = vpop.f32.mrf.mxu0
    %v1188 = vadd.f32 %v904, %v1187
    %v1189 = vpop.f32.mrf.mxu0
    %1190 = vmatprep.mubr.f32.mxu0 0.0
    %v1191 = vand.u32 %v281, 4294901760
    %v1192 = vsub.f32 %v281, %v1191
    %1193 = vmatmul.mubr.f32.gmra.mxu0 %v1192
    %v1194 = vpop.f32.mrf.mxu0
    %v1195 = vadd.f32 %v910, %v1194
    %v1196 = vpop.f32.mrf.mxu0
    %1197 = vmatprep.mubr.f32.mxu0 0.0
    %v1198 = vand.u32 %v284, 4294901760
    %v1199 = vsub.f32 %v284, %v1198
    %1200 = vmatmul.mubr.f32.gmra.mxu0 %v1199
    %v1201 = vpop.f32.mrf.mxu0
    %v1202 = vadd.f32 %v916, %v1201
    %v1203 = vpop.f32.mrf.mxu0
    %1204 = vmatprep.mubr.f32.mxu0 0.0
    %v1205 = vand.u32 %v287, 4294901760
    %v1206 = vsub.f32 %v287, %v1205
    %1207 = vmatmul.mubr.f32.gmra.mxu0 %v1206
    %v1208 = vpop.f32.mrf.mxu0
    %v1209 = vadd.f32 %v922, %v1208
    %v1210 = vpop.f32.mrf.mxu0
    %1211 = vmatprep.mubr.f32.mxu0 0.0
    %v1212 = vand.u32 %v290, 4294901760
    %v1213 = vsub.f32 %v290, %v1212
    %1214 = vmatmul.mubr.f32.gmra.mxu0 %v1213
    %v1215 = vpop.f32.mrf.mxu0
    %v1216 = vadd.f32 %v928, %v1215
    %v1217 = vpop.f32.mrf.mxu0
    %1218 = vmatprep.mubr.f32.mxu0 0.0
    %v1219 = vand.u32 %v293, 4294901760
    %v1220 = vsub.f32 %v293, %v1219
    %1221 = vmatmul.mubr.f32.gmra.mxu0 %v1220
    %v1222 = vpop.f32.mrf.mxu0
    %v1223 = vadd.f32 %v934, %v1222
    %v1224 = vpop.f32.mrf.mxu0
    %1225 = vmatprep.mubr.f32.mxu0 0.0
    %v1226 = vand.u32 %v296, 4294901760
    %v1227 = vsub.f32 %v296, %v1226
    %1228 = vmatmul.mubr.f32.gmra.mxu0 %v1227
    %v1229 = vpop.f32.mrf.mxu0
    %v1230 = vadd.f32 %v940, %v1229
    %v1231 = vpop.f32.mrf.mxu0
    %1232 = vmatprep.mubr.f32.mxu0 0.0
    %v1233 = vand.u32 %v299, 4294901760
    %v1234 = vsub.f32 %v299, %v1233
    %1235 = vmatmul.mubr.f32.gmra.mxu0 %v1234
    %v1236 = vpop.f32.mrf.mxu0
    %v1237 = vadd.f32 %v946, %v1236
    %v1238 = vpop.f32.mrf.mxu0
    %1239 = vmatprep.mubr.f32.mxu0 0.0
    %v1240 = vand.u32 %v302, 4294901760
    %v1241 = vsub.f32 %v302, %v1240
    %1242 = vmatmul.mubr.f32.gmra.mxu0 %v1241
    %v1243 = vpop.f32.mrf.mxu0
    %v1244 = vadd.f32 %v952, %v1243
    %v1245 = vpop.f32.mrf.mxu0
    %1246 = vmatprep.mubr.f32.mxu0 0.0
    %v1247 = vand.u32 %v305, 4294901760
    %v1248 = vsub.f32 %v305, %v1247
    %1249 = vmatmul.mubr.f32.gmra.mxu0 %v1248
    %v1250 = vpop.f32.mrf.mxu0
    %v1251 = vadd.f32 %v958, %v1250
    %v1252 = vpop.f32.mrf.mxu0
    %1253 = vmatprep.mubr.f32.mxu0 0.0
    %v1254 = vand.u32 %v308, 4294901760
    %v1255 = vsub.f32 %v308, %v1254
    %1256 = vmatmul.mubr.f32.gmra.mxu0 %v1255
    %v1257 = vpop.f32.mrf.mxu0
    %v1258 = vadd.f32 %v964, %v1257
    %v1259 = vpop.f32.mrf.mxu0
    %1260 = vmatprep.mubr.f32.mxu0 0.0
    %v1261 = vand.u32 %v311, 4294901760
    %v1262 = vsub.f32 %v311, %v1261
    %1263 = vmatmul.mubr.f32.gmra.mxu0 %v1262
    %v1264 = vpop.f32.mrf.mxu0
    %v1265 = vadd.f32 %v970, %v1264
    %v1266 = vpop.f32.mrf.mxu0
    %1267 = vmatprep.mubr.f32.mxu0 0.0
    %v1268 = vand.u32 %v314, 4294901760
    %v1269 = vsub.f32 %v314, %v1268
    %1270 = vmatmul.mubr.f32.gmra.mxu0 %v1269
    %v1271 = vpop.f32.mrf.mxu0
    %v1272 = vadd.f32 %v976, %v1271
    %v1273 = vpop.f32.mrf.mxu0
    %1274 = vmatprep.mubr.f32.mxu0 0.0
    %v1275 = vand.u32 %v317, 4294901760
    %v1276 = vsub.f32 %v317, %v1275
    %1277 = vmatmul.mubr.f32.gmra.mxu0 %v1276
    %v1278 = vpop.f32.mrf.mxu0
    %v1279 = vadd.f32 %v982, %v1278
    %v1280 = vpop.f32.mrf.mxu0
    %1281 = vmatprep.mubr.f32.mxu0 0.0
    %v1282 = vand.u32 %v320, 4294901760
    %v1283 = vsub.f32 %v320, %v1282
    %1284 = vmatmul.mubr.f32.gmra.mxu0 %v1283
    %v1285 = vpop.f32.mrf.mxu0
    %v1286 = vadd.f32 %v988, %v1285
    %v1287 = vpop.f32.mrf.mxu0
    %1288 = vmatprep.mubr.f32.mxu0 0.0
    %v1289 = vand.u32 %v323, 4294901760
    %v1290 = vsub.f32 %v323, %v1289
    %1291 = vmatmul.mubr.f32.gmra.mxu0 %v1290
    %v1292 = vpop.f32.mrf.mxu0
    %v1293 = vadd.f32 %v994, %v1292
    %v1294 = vpop.f32.mrf.mxu0
    %1295 = vmatprep.mubr.f32.mxu0 0.0
    %v1296 = vand.u32 %v326, 4294901760
    %v1297 = vsub.f32 %v326, %v1296
    %1298 = vmatmul.mubr.f32.gmra.mxu0 %v1297
    %v1299 = vpop.f32.mrf.mxu0
    %v1300 = vadd.f32 %v1000, %v1299
    %v1301 = vpop.f32.mrf.mxu0
    %1302 = vmatprep.mubr.f32.mxu0 0.0
    %v1303 = vand.u32 %v329, 4294901760
    %v1304 = vsub.f32 %v329, %v1303
    %1305 = vmatmul.mubr.f32.gmra.mxu0 %v1304
    %v1306 = vpop.f32.mrf.mxu0
    %v1307 = vadd.f32 %v1006, %v1306
    %v1308 = vpop.f32.mrf.mxu0
    %1309 = vmatprep.mubr.f32.mxu0 0.0
    %v1310 = vand.u32 %v332, 4294901760
    %v1311 = vsub.f32 %v332, %v1310
    %1312 = vmatmul.mubr.f32.gmra.mxu0 %v1311
    %v1313 = vpop.f32.mrf.mxu0
    %v1314 = vadd.f32 %v1012, %v1313
    %v1315 = vpop.f32.mrf.mxu0
    %1316 = vmatprep.mubr.f32.mxu0 0.0
    %v1317 = vand.u32 %v335, 4294901760
    %v1318 = vsub.f32 %v335, %v1317
    %1319 = vmatmul.mubr.f32.gmra.mxu0 %v1318
    %v1320 = vpop.f32.mrf.mxu0
    %v1321 = vadd.f32 %v1018, %v1320
    %v1322 = vpop.f32.mrf.mxu0
    %1323 = vmatprep.mubr.f32.mxu0 0.0
    %v1324 = vand.u32 %v338, 4294901760
    %v1325 = vsub.f32 %v338, %v1324
    %1326 = vmatmul.mubr.f32.gmra.mxu0 %v1325
    %v1327 = vpop.f32.mrf.mxu0
    %v1328 = vadd.f32 %v1024, %v1327
    %v1329 = vpop.f32.mrf.mxu0
    %1330 = vmatprep.mubr.f32.mxu0 0.0
    %v1331 = vand.u32 %v341, 4294901760
    %v1332 = vsub.f32 %v341, %v1331
    %1333 = vmatmul.mubr.f32.gmra.mxu0 %v1332
    %v1334 = vpop.f32.mrf.mxu0
    %v1335 = vadd.f32 %v1030, %v1334
    %v1336 = vpop.f32.mrf.mxu0
    %1337 = vdwg.mxu0
    %1338 = vmatprep.subr.mxu0 0.0
    %1339 = vmatpush1.msra.mxu0 0.0
    %1340 = vmatprep.subr.mxu0 0.0
    %1341 = vmatpush1.msra.mxu0 0.0
    %1342 = vmatprep.subr.mxu0 0.0
    %1343 = vmatpush1.msra.mxu0 0.0
    %1344 = vmatprep.subr.mxu0 0.0
    %1345 = vmatpush1.msra.mxu0 0.0
    %1346 = vmatprep.subr.mxu0 0.0
    %1347 = vmatpush1.msra.mxu0 0.0
    %1348 = vmatprep.subr.mxu0 0.0
    %1349 = vmatpush1.msra.mxu0 0.0
    %1350 = vmatprep.subr.mxu0 0.0
    %1351 = vmatpush1.msra.mxu0 0.0
    %1352 = vmatprep.subr.mxu0 0.0
    %1353 = vmatpush1.msra.mxu0 0.0
    %1354 = vmatprep.subr.mxu0 0.0
    %v1355 = vand.u32 %v245, 4294901760
    %1356 = vmatpush1.msra.mxu0 %v1355
    %1357 = vmatprep.subr.mxu0 0.0
    %v1358 = vand.u32 %v244, 4294901760
    %1359 = vmatpush1.msra.mxu0 %v1358
    %1360 = vmatprep.subr.mxu0 0.0
    %v1361 = vand.u32 %v243, 4294901760
    %1362 = vmatpush1.msra.mxu0 %v1361
    %1363 = vmatprep.subr.mxu0 0.0
    %v1364 = vand.u32 %v242, 4294901760
    %1365 = vmatpush1.msra.mxu0 %v1364
    %1366 = vmatprep.subr.mxu0 0.0
    %v1367 = vand.u32 %v241, 4294901760
    %1368 = vmatpush1.msra.mxu0 %v1367
    %1369 = vmatprep.subr.mxu0 0.0
    %v1370 = vand.u32 %v240, 4294901760
    %1371 = vmatpush1.msra.mxu0 %v1370
    %1372 = vmatprep.subr.mxu0 0.0
    %v1373 = vand.u32 %v239, 4294901760
    %1374 = vmatpush1.msra.mxu0 %v1373
    %1375 = vmatprep.subr.mxu0 0.0
    %v1376 = vand.u32 %v238, 4294901760
    %1377 = vmatpush1.msra.mxu0 %v1376
    %1378 = vmatprep.subr.mxu0 0.0
    %1379 = vmatpush2.msra.mxu0 0.0
    %1380 = vmatprep.subr.mxu0 0.0
    %1381 = vmatpush2.msra.mxu0 0.0
    %1382 = vmatprep.subr.mxu0 0.0
    %1383 = vmatpush2.msra.mxu0 0.0
    %1384 = vmatprep.subr.mxu0 0.0
    %1385 = vmatpush2.msra.mxu0 0.0
    %1386 = vmatprep.subr.mxu0 0.0
    %1387 = vmatpush2.msra.mxu0 0.0
    %1388 = vmatprep.subr.mxu0 0.0
    %1389 = vmatpush2.msra.mxu0 0.0
    %1390 = vmatprep.subr.mxu0 0.0
    %1391 = vmatpush2.msra.mxu0 0.0
    %1392 = vmatprep.subr.mxu0 0.0
    %1393 = vmatpush2.msra.mxu0 0.0
    %1394 = vmatprep.subr.mxu0 0.0
    %1395 = vmatpush2.msra.mxu0 0.0
    %1396 = vmatprep.subr.mxu0 0.0
    %1397 = vmatpush2.msra.mxu0 0.0
    %1398 = vmatprep.subr.mxu0 0.0
    %1399 = vmatpush2.msra.mxu0 0.0
    %1400 = vmatprep.subr.mxu0 0.0
    %1401 = vmatpush2.msra.mxu0 0.0
    %1402 = vmatprep.subr.mxu0 0.0
    %1403 = vmatpush2.msra.mxu0 0.0
    %1404 = vmatprep.subr.mxu0 0.0
    %1405 = vmatpush2.msra.mxu0 0.0
    %1406 = vmatprep.subr.mxu0 0.0
    %1407 = vmatpush2.msra.mxu0 0.0
    %1408 = vmatprep.subr.mxu0 0.0
    %1409 = vmatpush2.msra.mxu0 0.0
    %1410 = vmatprep.mubr.f32.mxu0 0.0
    %v1411 = vand.u32 %v248, 4294901760
    %v1412 = vsub.f32 %v248, %v1411
    %v1413 = vand.u32 %v1412, 4294901760
    %1414 = vmatmul.mubr.f32.gmra.mxu0 %v1413
    %v1415 = vpop.f32.mrf.mxu0
    %v1416 = vadd.f32 %v1118, %v1415
    %v1417 = vpop.f32.mrf.mxu0
    %1418 = vmatprep.mubr.f32.mxu0 0.0
    %v1419 = vand.u32 %v251, 4294901760
    %v1420 = vsub.f32 %v251, %v1419
    %v1421 = vand.u32 %v1420, 4294901760
    %1422 = vmatmul.mubr.f32.gmra.mxu0 %v1421
    %v1423 = vpop.f32.mrf.mxu0
    %v1424 = vadd.f32 %v1125, %v1423
    %v1425 = vpop.f32.mrf.mxu0
    %1426 = vmatprep.mubr.f32.mxu0 0.0
    %v1427 = vand.u32 %v254, 4294901760
    %v1428 = vsub.f32 %v254, %v1427
    %v1429 = vand.u32 %v1428, 4294901760
    %1430 = vmatmul.mubr.f32.gmra.mxu0 %v1429
    %v1431 = vpop.f32.mrf.mxu0
    %v1432 = vadd.f32 %v1132, %v1431
    %v1433 = vpop.f32.mrf.mxu0
    %1434 = vmatprep.mubr.f32.mxu0 0.0
    %v1435 = vand.u32 %v257, 4294901760
    %v1436 = vsub.f32 %v257, %v1435
    %v1437 = vand.u32 %v1436, 4294901760
    %1438 = vmatmul.mubr.f32.gmra.mxu0 %v1437
    %v1439 = vpop.f32.mrf.mxu0
    %v1440 = vadd.f32 %v1139, %v1439
    %v1441 = vpop.f32.mrf.mxu0
    %1442 = vmatprep.mubr.f32.mxu0 0.0
    %v1443 = vand.u32 %v260, 4294901760
    %v1444 = vsub.f32 %v260, %v1443
    %v1445 = vand.u32 %v1444, 4294901760
    %1446 = vmatmul.mubr.f32.gmra.mxu0 %v1445
    %v1447 = vpop.f32.mrf.mxu0
    %v1448 = vadd.f32 %v1146, %v1447
    %v1449 = vpop.f32.mrf.mxu0
    %1450 = vmatprep.mubr.f32.mxu0 0.0
    %v1451 = vand.u32 %v263, 4294901760
    %v1452 = vsub.f32 %v263, %v1451
    %v1453 = vand.u32 %v1452, 4294901760
    %1454 = vmatmul.mubr.f32.gmra.mxu0 %v1453
    %v1455 = vpop.f32.mrf.mxu0
    %v1456 = vadd.f32 %v1153, %v1455
    %v1457 = vpop.f32.mrf.mxu0
    %1458 = vmatprep.mubr.f32.mxu0 0.0
    %v1459 = vand.u32 %v266, 4294901760
    %v1460 = vsub.f32 %v266, %v1459
    %v1461 = vand.u32 %v1460, 4294901760
    %1462 = vmatmul.mubr.f32.gmra.mxu0 %v1461
    %v1463 = vpop.f32.mrf.mxu0
    %v1464 = vadd.f32 %v1160, %v1463
    %v1465 = vpop.f32.mrf.mxu0
    %1466 = vmatprep.mubr.f32.mxu0 0.0
    %v1467 = vand.u32 %v269, 4294901760
    %v1468 = vsub.f32 %v269, %v1467
    %v1469 = vand.u32 %v1468, 4294901760
    %1470 = vmatmul.mubr.f32.gmra.mxu0 %v1469
    %v1471 = vpop.f32.mrf.mxu0
    %v1472 = vadd.f32 %v1167, %v1471
    %v1473 = vpop.f32.mrf.mxu0
    %1474 = vmatprep.mubr.f32.mxu0 0.0
    %v1475 = vand.u32 %v272, 4294901760
    %v1476 = vsub.f32 %v272, %v1475
    %v1477 = vand.u32 %v1476, 4294901760
    %1478 = vmatmul.mubr.f32.gmra.mxu0 %v1477
    %v1479 = vpop.f32.mrf.mxu0
    %v1480 = vadd.f32 %v1174, %v1479
    %v1481 = vpop.f32.mrf.mxu0
    %1482 = vmatprep.mubr.f32.mxu0 0.0
    %v1483 = vand.u32 %v275, 4294901760
    %v1484 = vsub.f32 %v275, %v1483
    %v1485 = vand.u32 %v1484, 4294901760
    %1486 = vmatmul.mubr.f32.gmra.mxu0 %v1485
    %v1487 = vpop.f32.mrf.mxu0
    %v1488 = vadd.f32 %v1181, %v1487
    %v1489 = vpop.f32.mrf.mxu0
    %1490 = vmatprep.mubr.f32.mxu0 0.0
    %v1491 = vand.u32 %v278, 4294901760
    %v1492 = vsub.f32 %v278, %v1491
    %v1493 = vand.u32 %v1492, 4294901760
    %1494 = vmatmul.mubr.f32.gmra.mxu0 %v1493
    %v1495 = vpop.f32.mrf.mxu0
    %v1496 = vadd.f32 %v1188, %v1495
    %v1497 = vpop.f32.mrf.mxu0
    %1498 = vmatprep.mubr.f32.mxu0 0.0
    %v1499 = vand.u32 %v281, 4294901760
    %v1500 = vsub.f32 %v281, %v1499
    %v1501 = vand.u32 %v1500, 4294901760
    %1502 = vmatmul.mubr.f32.gmra.mxu0 %v1501
    %v1503 = vpop.f32.mrf.mxu0
    %v1504 = vadd.f32 %v1195, %v1503
    %v1505 = vpop.f32.mrf.mxu0
    %1506 = vmatprep.mubr.f32.mxu0 0.0
    %v1507 = vand.u32 %v284, 4294901760
    %v1508 = vsub.f32 %v284, %v1507
    %v1509 = vand.u32 %v1508, 4294901760
    %1510 = vmatmul.mubr.f32.gmra.mxu0 %v1509
    %v1511 = vpop.f32.mrf.mxu0
    %v1512 = vadd.f32 %v1202, %v1511
    %v1513 = vpop.f32.mrf.mxu0
    %1514 = vmatprep.mubr.f32.mxu0 0.0
    %v1515 = vand.u32 %v287, 4294901760
    %v1516 = vsub.f32 %v287, %v1515
    %v1517 = vand.u32 %v1516, 4294901760
    %1518 = vmatmul.mubr.f32.gmra.mxu0 %v1517
    %v1519 = vpop.f32.mrf.mxu0
    %v1520 = vadd.f32 %v1209, %v1519
    %v1521 = vpop.f32.mrf.mxu0
    %1522 = vmatprep.mubr.f32.mxu0 0.0
    %v1523 = vand.u32 %v290, 4294901760
    %v1524 = vsub.f32 %v290, %v1523
    %v1525 = vand.u32 %v1524, 4294901760
    %1526 = vmatmul.mubr.f32.gmra.mxu0 %v1525
    %v1527 = vpop.f32.mrf.mxu0
    %v1528 = vadd.f32 %v1216, %v1527
    %v1529 = vpop.f32.mrf.mxu0
    %1530 = vmatprep.mubr.f32.mxu0 0.0
    %v1531 = vand.u32 %v293, 4294901760
    %v1532 = vsub.f32 %v293, %v1531
    %v1533 = vand.u32 %v1532, 4294901760
    %1534 = vmatmul.mubr.f32.gmra.mxu0 %v1533
    %v1535 = vpop.f32.mrf.mxu0
    %v1536 = vadd.f32 %v1223, %v1535
    %v1537 = vpop.f32.mrf.mxu0
    %1538 = vmatprep.mubr.f32.mxu0 0.0
    %v1539 = vand.u32 %v296, 4294901760
    %v1540 = vsub.f32 %v296, %v1539
    %v1541 = vand.u32 %v1540, 4294901760
    %1542 = vmatmul.mubr.f32.gmra.mxu0 %v1541
    %v1543 = vpop.f32.mrf.mxu0
    %v1544 = vadd.f32 %v1230, %v1543
    %v1545 = vpop.f32.mrf.mxu0
    %1546 = vmatprep.mubr.f32.mxu0 0.0
    %v1547 = vand.u32 %v299, 4294901760
    %v1548 = vsub.f32 %v299, %v1547
    %v1549 = vand.u32 %v1548, 4294901760
    %1550 = vmatmul.mubr.f32.gmra.mxu0 %v1549
    %v1551 = vpop.f32.mrf.mxu0
    %v1552 = vadd.f32 %v1237, %v1551
    %v1553 = vpop.f32.mrf.mxu0
    %1554 = vmatprep.mubr.f32.mxu0 0.0
    %v1555 = vand.u32 %v302, 4294901760
    %v1556 = vsub.f32 %v302, %v1555
    %v1557 = vand.u32 %v1556, 4294901760
    %1558 = vmatmul.mubr.f32.gmra.mxu0 %v1557
    %v1559 = vpop.f32.mrf.mxu0
    %v1560 = vadd.f32 %v1244, %v1559
    %v1561 = vpop.f32.mrf.mxu0
    %1562 = vmatprep.mubr.f32.mxu0 0.0
    %v1563 = vand.u32 %v305, 4294901760
    %v1564 = vsub.f32 %v305, %v1563
    %v1565 = vand.u32 %v1564, 4294901760
    %1566 = vmatmul.mubr.f32.gmra.mxu0 %v1565
    %v1567 = vpop.f32.mrf.mxu0
    %v1568 = vadd.f32 %v1251, %v1567
    %v1569 = vpop.f32.mrf.mxu0
    %1570 = vmatprep.mubr.f32.mxu0 0.0
    %v1571 = vand.u32 %v308, 4294901760
    %v1572 = vsub.f32 %v308, %v1571
    %v1573 = vand.u32 %v1572, 4294901760
    %1574 = vmatmul.mubr.f32.gmra.mxu0 %v1573
    %v1575 = vpop.f32.mrf.mxu0
    %v1576 = vadd.f32 %v1258, %v1575
    %v1577 = vpop.f32.mrf.mxu0
    %1578 = vmatprep.mubr.f32.mxu0 0.0
    %v1579 = vand.u32 %v311, 4294901760
    %v1580 = vsub.f32 %v311, %v1579
    %v1581 = vand.u32 %v1580, 4294901760
    %1582 = vmatmul.mubr.f32.gmra.mxu0 %v1581
    %v1583 = vpop.f32.mrf.mxu0
    %v1584 = vadd.f32 %v1265, %v1583
    %v1585 = vpop.f32.mrf.mxu0
    %1586 = vmatprep.mubr.f32.mxu0 0.0
    %v1587 = vand.u32 %v314, 4294901760
    %v1588 = vsub.f32 %v314, %v1587
    %v1589 = vand.u32 %v1588, 4294901760
    %1590 = vmatmul.mubr.f32.gmra.mxu0 %v1589
    %v1591 = vpop.f32.mrf.mxu0
    %v1592 = vadd.f32 %v1272, %v1591
    %v1593 = vpop.f32.mrf.mxu0
    %1594 = vmatprep.mubr.f32.mxu0 0.0
    %v1595 = vand.u32 %v317, 4294901760
    %v1596 = vsub.f32 %v317, %v1595
    %v1597 = vand.u32 %v1596, 4294901760
    %1598 = vmatmul.mubr.f32.gmra.mxu0 %v1597
    %v1599 = vpop.f32.mrf.mxu0
    %v1600 = vadd.f32 %v1279, %v1599
    %v1601 = vpop.f32.mrf.mxu0
    %1602 = vmatprep.mubr.f32.mxu0 0.0
    %v1603 = vand.u32 %v320, 4294901760
    %v1604 = vsub.f32 %v320, %v1603
    %v1605 = vand.u32 %v1604, 4294901760
    %1606 = vmatmul.mubr.f32.gmra.mxu0 %v1605
    %v1607 = vpop.f32.mrf.mxu0
    %v1608 = vadd.f32 %v1286, %v1607
    %v1609 = vpop.f32.mrf.mxu0
    %1610 = vmatprep.mubr.f32.mxu0 0.0
    %v1611 = vand.u32 %v323, 4294901760
    %v1612 = vsub.f32 %v323, %v1611
    %v1613 = vand.u32 %v1612, 4294901760
    %1614 = vmatmul.mubr.f32.gmra.mxu0 %v1613
    %v1615 = vpop.f32.mrf.mxu0
    %v1616 = vadd.f32 %v1293, %v1615
    %v1617 = vpop.f32.mrf.mxu0
    %1618 = vmatprep.mubr.f32.mxu0 0.0
    %v1619 = vand.u32 %v326, 4294901760
    %v1620 = vsub.f32 %v326, %v1619
    %v1621 = vand.u32 %v1620, 4294901760
    %1622 = vmatmul.mubr.f32.gmra.mxu0 %v1621
    %v1623 = vpop.f32.mrf.mxu0
    %v1624 = vadd.f32 %v1300, %v1623
    %v1625 = vpop.f32.mrf.mxu0
    %1626 = vmatprep.mubr.f32.mxu0 0.0
    %v1627 = vand.u32 %v329, 4294901760
    %v1628 = vsub.f32 %v329, %v1627
    %v1629 = vand.u32 %v1628, 4294901760
    %1630 = vmatmul.mubr.f32.gmra.mxu0 %v1629
    %v1631 = vpop.f32.mrf.mxu0
    %v1632 = vadd.f32 %v1307, %v1631
    %v1633 = vpop.f32.mrf.mxu0
    %1634 = vmatprep.mubr.f32.mxu0 0.0
    %v1635 = vand.u32 %v332, 4294901760
    %v1636 = vsub.f32 %v332, %v1635
    %v1637 = vand.u32 %v1636, 4294901760
    %1638 = vmatmul.mubr.f32.gmra.mxu0 %v1637
    %v1639 = vpop.f32.mrf.mxu0
    %v1640 = vadd.f32 %v1314, %v1639
    %v1641 = vpop.f32.mrf.mxu0
    %1642 = vmatprep.mubr.f32.mxu0 0.0
    %v1643 = vand.u32 %v335, 4294901760
    %v1644 = vsub.f32 %v335, %v1643
    %v1645 = vand.u32 %v1644, 4294901760
    %1646 = vmatmul.mubr.f32.gmra.mxu0 %v1645
    %v1647 = vpop.f32.mrf.mxu0
    %v1648 = vadd.f32 %v1321, %v1647
    %v1649 = vpop.f32.mrf.mxu0
    %1650 = vmatprep.mubr.f32.mxu0 0.0
    %v1651 = vand.u32 %v338, 4294901760
    %v1652 = vsub.f32 %v338, %v1651
    %v1653 = vand.u32 %v1652, 4294901760
    %1654 = vmatmul.mubr.f32.gmra.mxu0 %v1653
    %v1655 = vpop.f32.mrf.mxu0
    %v1656 = vadd.f32 %v1328, %v1655
    %v1657 = vpop.f32.mrf.mxu0
    %1658 = vmatprep.mubr.f32.mxu0 0.0
    %v1659 = vand.u32 %v341, 4294901760
    %v1660 = vsub.f32 %v341, %v1659
    %v1661 = vand.u32 %v1660, 4294901760
    %1662 = vmatmul.mubr.f32.gmra.mxu0 %v1661
    %v1663 = vpop.f32.mrf.mxu0
    %v1664 = vadd.f32 %v1335, %v1663
    %v1665 = vpop.f32.mrf.mxu0
    %1666 = vdwg.mxu0
    %1667 = vmatprep.subr.mxu0 0.0
    %1668 = vmatpush1.msra.mxu0 0.0
    %1669 = vmatprep.subr.mxu0 0.0
    %1670 = vmatpush1.msra.mxu0 0.0
    %1671 = vmatprep.subr.mxu0 0.0
    %1672 = vmatpush1.msra.mxu0 0.0
    %1673 = vmatprep.subr.mxu0 0.0
    %1674 = vmatpush1.msra.mxu0 0.0
    %1675 = vmatprep.subr.mxu0 0.0
    %1676 = vmatpush1.msra.mxu0 0.0
    %1677 = vmatprep.subr.mxu0 0.0
    %1678 = vmatpush1.msra.mxu0 0.0
    %1679 = vmatprep.subr.mxu0 0.0
    %1680 = vmatpush1.msra.mxu0 0.0
    %1681 = vmatprep.subr.mxu0 0.0
    %1682 = vmatpush1.msra.mxu0 0.0
    %1683 = vmatprep.subr.mxu0 0.0
    %v1684 = vand.u32 %v245, 4294901760
    %v1685 = vsub.f32 %v245, %v1684
    %v1686 = vand.u32 %v1685, 4294901760
    %1687 = vmatpush1.msra.mxu0 %v1686
    %1688 = vmatprep.subr.mxu0 0.0
    %v1689 = vand.u32 %v244, 4294901760
    %v1690 = vsub.f32 %v244, %v1689
    %v1691 = vand.u32 %v1690, 4294901760
    %1692 = vmatpush1.msra.mxu0 %v1691
    %1693 = vmatprep.subr.mxu0 0.0
    %v1694 = vand.u32 %v243, 4294901760
    %v1695 = vsub.f32 %v243, %v1694
    %v1696 = vand.u32 %v1695, 4294901760
    %1697 = vmatpush1.msra.mxu0 %v1696
    %1698 = vmatprep.subr.mxu0 0.0
    %v1699 = vand.u32 %v242, 4294901760
    %v1700 = vsub.f32 %v242, %v1699
    %v1701 = vand.u32 %v1700, 4294901760
    %1702 = vmatpush1.msra.mxu0 %v1701
    %1703 = vmatprep.subr.mxu0 0.0
    %v1704 = vand.u32 %v241, 4294901760
    %v1705 = vsub.f32 %v241, %v1704
    %v1706 = vand.u32 %v1705, 4294901760
    %1707 = vmatpush1.msra.mxu0 %v1706
    %1708 = vmatprep.subr.mxu0 0.0
    %v1709 = vand.u32 %v240, 4294901760
    %v1710 = vsub.f32 %v240, %v1709
    %v1711 = vand.u32 %v1710, 4294901760
    %1712 = vmatpush1.msra.mxu0 %v1711
    %1713 = vmatprep.subr.mxu0 0.0
    %v1714 = vand.u32 %v239, 4294901760
    %v1715 = vsub.f32 %v239, %v1714
    %v1716 = vand.u32 %v1715, 4294901760
    %1717 = vmatpush1.msra.mxu0 %v1716
    %1718 = vmatprep.subr.mxu0 0.0
    %v1719 = vand.u32 %v238, 4294901760
    %v1720 = vsub.f32 %v238, %v1719
    %v1721 = vand.u32 %v1720, 4294901760
    %1722 = vmatpush1.msra.mxu0 %v1721
    %1723 = vmatprep.subr.mxu0 0.0
    %1724 = vmatpush2.msra.mxu0 0.0
    %1725 = vmatprep.subr.mxu0 0.0
    %1726 = vmatpush2.msra.mxu0 0.0
    %1727 = vmatprep.subr.mxu0 0.0
    %1728 = vmatpush2.msra.mxu0 0.0
    %1729 = vmatprep.subr.mxu0 0.0
    %1730 = vmatpush2.msra.mxu0 0.0
    %1731 = vmatprep.subr.mxu0 0.0
    %1732 = vmatpush2.msra.mxu0 0.0
    %1733 = vmatprep.subr.mxu0 0.0
    %1734 = vmatpush2.msra.mxu0 0.0
    %1735 = vmatprep.subr.mxu0 0.0
    %1736 = vmatpush2.msra.mxu0 0.0
    %1737 = vmatprep.subr.mxu0 0.0
    %1738 = vmatpush2.msra.mxu0 0.0
    %1739 = vmatprep.subr.mxu0 0.0
    %1740 = vmatpush2.msra.mxu0 0.0
    %1741 = vmatprep.subr.mxu0 0.0
    %1742 = vmatpush2.msra.mxu0 0.0
    %1743 = vmatprep.subr.mxu0 0.0
    %1744 = vmatpush2.msra.mxu0 0.0
    %1745 = vmatprep.subr.mxu0 0.0
    %1746 = vmatpush2.msra.mxu0 0.0
    %1747 = vmatprep.subr.mxu0 0.0
    %1748 = vmatpush2.msra.mxu0 0.0
    %1749 = vmatprep.subr.mxu0 0.0
    %1750 = vmatpush2.msra.mxu0 0.0
    %1751 = vmatprep.subr.mxu0 0.0
    %1752 = vmatpush2.msra.mxu0 0.0
    %1753 = vmatprep.subr.mxu0 0.0
    %1754 = vmatpush2.msra.mxu0 0.0
    %1755 = vmatprep.mubr.f32.mxu0 0.0
    %v1756 = vand.u32 %v248, 4294901760
    %1757 = vmatmul.mubr.f32.gmra.mxu0 %v1756
    %v1758 = vpop.f32.mrf.mxu0
    %v1759 = vadd.f32 %v1416, %v1758
    %v1760 = vpop.f32.mrf.mxu0
    %1761 = vmatprep.mubr.f32.mxu0 0.0
    %v1762 = vand.u32 %v251, 4294901760
    %1763 = vmatmul.mubr.f32.gmra.mxu0 %v1762
    %v1764 = vpop.f32.mrf.mxu0
    %v1765 = vadd.f32 %v1424, %v1764
    %v1766 = vpop.f32.mrf.mxu0
    %1767 = vmatprep.mubr.f32.mxu0 0.0
    %v1768 = vand.u32 %v254, 4294901760
    %1769 = vmatmul.mubr.f32.gmra.mxu0 %v1768
    %v1770 = vpop.f32.mrf.mxu0
    %v1771 = vadd.f32 %v1432, %v1770
    %v1772 = vpop.f32.mrf.mxu0
    %1773 = vmatprep.mubr.f32.mxu0 0.0
    %v1774 = vand.u32 %v257, 4294901760
    %1775 = vmatmul.mubr.f32.gmra.mxu0 %v1774
    %v1776 = vpop.f32.mrf.mxu0
    %v1777 = vadd.f32 %v1440, %v1776
    %v1778 = vpop.f32.mrf.mxu0
    %1779 = vmatprep.mubr.f32.mxu0 0.0
    %v1780 = vand.u32 %v260, 4294901760
    %1781 = vmatmul.mubr.f32.gmra.mxu0 %v1780
    %v1782 = vpop.f32.mrf.mxu0
    %v1783 = vadd.f32 %v1448, %v1782
    %v1784 = vpop.f32.mrf.mxu0
    %1785 = vmatprep.mubr.f32.mxu0 0.0
    %v1786 = vand.u32 %v263, 4294901760
    %1787 = vmatmul.mubr.f32.gmra.mxu0 %v1786
    %v1788 = vpop.f32.mrf.mxu0
    %v1789 = vadd.f32 %v1456, %v1788
    %v1790 = vpop.f32.mrf.mxu0
    %1791 = vmatprep.mubr.f32.mxu0 0.0
    %v1792 = vand.u32 %v266, 4294901760
    %1793 = vmatmul.mubr.f32.gmra.mxu0 %v1792
    %v1794 = vpop.f32.mrf.mxu0
    %v1795 = vadd.f32 %v1464, %v1794
    %v1796 = vpop.f32.mrf.mxu0
    %1797 = vmatprep.mubr.f32.mxu0 0.0
    %v1798 = vand.u32 %v269, 4294901760
    %1799 = vmatmul.mubr.f32.gmra.mxu0 %v1798
    %v1800 = vpop.f32.mrf.mxu0
    %v1801 = vadd.f32 %v1472, %v1800
    %v1802 = vpop.f32.mrf.mxu0
    %1803 = vmatprep.mubr.f32.mxu0 0.0
    %v1804 = vand.u32 %v272, 4294901760
    %1805 = vmatmul.mubr.f32.gmra.mxu0 %v1804
    %v1806 = vpop.f32.mrf.mxu0
    %v1807 = vadd.f32 %v1480, %v1806
    %v1808 = vpop.f32.mrf.mxu0
    %1809 = vmatprep.mubr.f32.mxu0 0.0
    %v1810 = vand.u32 %v275, 4294901760
    %1811 = vmatmul.mubr.f32.gmra.mxu0 %v1810
    %v1812 = vpop.f32.mrf.mxu0
    %v1813 = vadd.f32 %v1488, %v1812
    %v1814 = vpop.f32.mrf.mxu0
    %1815 = vmatprep.mubr.f32.mxu0 0.0
    %v1816 = vand.u32 %v278, 4294901760
    %1817 = vmatmul.mubr.f32.gmra.mxu0 %v1816
    %v1818 = vpop.f32.mrf.mxu0
    %v1819 = vadd.f32 %v1496, %v1818
    %v1820 = vpop.f32.mrf.mxu0
    %1821 = vmatprep.mubr.f32.mxu0 0.0
    %v1822 = vand.u32 %v281, 4294901760
    %1823 = vmatmul.mubr.f32.gmra.mxu0 %v1822
    %v1824 = vpop.f32.mrf.mxu0
    %v1825 = vadd.f32 %v1504, %v1824
    %v1826 = vpop.f32.mrf.mxu0
    %1827 = vmatprep.mubr.f32.mxu0 0.0
    %v1828 = vand.u32 %v284, 4294901760
    %1829 = vmatmul.mubr.f32.gmra.mxu0 %v1828
    %v1830 = vpop.f32.mrf.mxu0
    %v1831 = vadd.f32 %v1512, %v1830
    %v1832 = vpop.f32.mrf.mxu0
    %1833 = vmatprep.mubr.f32.mxu0 0.0
    %v1834 = vand.u32 %v287, 4294901760
    %1835 = vmatmul.mubr.f32.gmra.mxu0 %v1834
    %v1836 = vpop.f32.mrf.mxu0
    %v1837 = vadd.f32 %v1520, %v1836
    %v1838 = vpop.f32.mrf.mxu0
    %1839 = vmatprep.mubr.f32.mxu0 0.0
    %v1840 = vand.u32 %v290, 4294901760
    %1841 = vmatmul.mubr.f32.gmra.mxu0 %v1840
    %v1842 = vpop.f32.mrf.mxu0
    %v1843 = vadd.f32 %v1528, %v1842
    %v1844 = vpop.f32.mrf.mxu0
    %1845 = vmatprep.mubr.f32.mxu0 0.0
    %v1846 = vand.u32 %v293, 4294901760
    %1847 = vmatmul.mubr.f32.gmra.mxu0 %v1846
    %v1848 = vpop.f32.mrf.mxu0
    %v1849 = vadd.f32 %v1536, %v1848
    %v1850 = vpop.f32.mrf.mxu0
    %1851 = vmatprep.mubr.f32.mxu0 0.0
    %v1852 = vand.u32 %v296, 4294901760
    %1853 = vmatmul.mubr.f32.gmra.mxu0 %v1852
    %v1854 = vpop.f32.mrf.mxu0
    %v1855 = vadd.f32 %v1544, %v1854
    %v1856 = vpop.f32.mrf.mxu0
    %1857 = vmatprep.mubr.f32.mxu0 0.0
    %v1858 = vand.u32 %v299, 4294901760
    %1859 = vmatmul.mubr.f32.gmra.mxu0 %v1858
    %v1860 = vpop.f32.mrf.mxu0
    %v1861 = vadd.f32 %v1552, %v1860
    %v1862 = vpop.f32.mrf.mxu0
    %1863 = vmatprep.mubr.f32.mxu0 0.0
    %v1864 = vand.u32 %v302, 4294901760
    %1865 = vmatmul.mubr.f32.gmra.mxu0 %v1864
    %v1866 = vpop.f32.mrf.mxu0
    %v1867 = vadd.f32 %v1560, %v1866
    %v1868 = vpop.f32.mrf.mxu0
    %1869 = vmatprep.mubr.f32.mxu0 0.0
    %v1870 = vand.u32 %v305, 4294901760
    %1871 = vmatmul.mubr.f32.gmra.mxu0 %v1870
    %v1872 = vpop.f32.mrf.mxu0
    %v1873 = vadd.f32 %v1568, %v1872
    %v1874 = vpop.f32.mrf.mxu0
    %1875 = vmatprep.mubr.f32.mxu0 0.0
    %v1876 = vand.u32 %v308, 4294901760
    %1877 = vmatmul.mubr.f32.gmra.mxu0 %v1876
    %v1878 = vpop.f32.mrf.mxu0
    %v1879 = vadd.f32 %v1576, %v1878
    %v1880 = vpop.f32.mrf.mxu0
    %1881 = vmatprep.mubr.f32.mxu0 0.0
    %v1882 = vand.u32 %v311, 4294901760
    %1883 = vmatmul.mubr.f32.gmra.mxu0 %v1882
    %v1884 = vpop.f32.mrf.mxu0
    %v1885 = vadd.f32 %v1584, %v1884
    %v1886 = vpop.f32.mrf.mxu0
    %1887 = vmatprep.mubr.f32.mxu0 0.0
    %v1888 = vand.u32 %v314, 4294901760
    %1889 = vmatmul.mubr.f32.gmra.mxu0 %v1888
    %v1890 = vpop.f32.mrf.mxu0
    %v1891 = vadd.f32 %v1592, %v1890
    %v1892 = vpop.f32.mrf.mxu0
    %1893 = vmatprep.mubr.f32.mxu0 0.0
    %v1894 = vand.u32 %v317, 4294901760
    %1895 = vmatmul.mubr.f32.gmra.mxu0 %v1894
    %v1896 = vpop.f32.mrf.mxu0
    %v1897 = vadd.f32 %v1600, %v1896
    %v1898 = vpop.f32.mrf.mxu0
    %1899 = vmatprep.mubr.f32.mxu0 0.0
    %v1900 = vand.u32 %v320, 4294901760
    %1901 = vmatmul.mubr.f32.gmra.mxu0 %v1900
    %v1902 = vpop.f32.mrf.mxu0
    %v1903 = vadd.f32 %v1608, %v1902
    %v1904 = vpop.f32.mrf.mxu0
    %1905 = vmatprep.mubr.f32.mxu0 0.0
    %v1906 = vand.u32 %v323, 4294901760
    %1907 = vmatmul.mubr.f32.gmra.mxu0 %v1906
    %v1908 = vpop.f32.mrf.mxu0
    %v1909 = vadd.f32 %v1616, %v1908
    %v1910 = vpop.f32.mrf.mxu0
    %1911 = vmatprep.mubr.f32.mxu0 0.0
    %v1912 = vand.u32 %v326, 4294901760
    %1913 = vmatmul.mubr.f32.gmra.mxu0 %v1912
    %v1914 = vpop.f32.mrf.mxu0
    %v1915 = vadd.f32 %v1624, %v1914
    %v1916 = vpop.f32.mrf.mxu0
    %1917 = vmatprep.mubr.f32.mxu0 0.0
    %v1918 = vand.u32 %v329, 4294901760
    %1919 = vmatmul.mubr.f32.gmra.mxu0 %v1918
    %v1920 = vpop.f32.mrf.mxu0
    %v1921 = vadd.f32 %v1632, %v1920
    %v1922 = vpop.f32.mrf.mxu0
    %1923 = vmatprep.mubr.f32.mxu0 0.0
    %v1924 = vand.u32 %v332, 4294901760
    %1925 = vmatmul.mubr.f32.gmra.mxu0 %v1924
    %v1926 = vpop.f32.mrf.mxu0
    %v1927 = vadd.f32 %v1640, %v1926
    %v1928 = vpop.f32.mrf.mxu0
    %1929 = vmatprep.mubr.f32.mxu0 0.0
    %v1930 = vand.u32 %v335, 4294901760
    %1931 = vmatmul.mubr.f32.gmra.mxu0 %v1930
    %v1932 = vpop.f32.mrf.mxu0
    %v1933 = vadd.f32 %v1648, %v1932
    %v1934 = vpop.f32.mrf.mxu0
    %1935 = vmatprep.mubr.f32.mxu0 0.0
    %v1936 = vand.u32 %v338, 4294901760
    %1937 = vmatmul.mubr.f32.gmra.mxu0 %v1936
    %v1938 = vpop.f32.mrf.mxu0
    %v1939 = vadd.f32 %v1656, %v1938
    %v1940 = vpop.f32.mrf.mxu0
    %1941 = vmatprep.mubr.f32.mxu0 0.0
    %v1942 = vand.u32 %v341, 4294901760
    %1943 = vmatmul.mubr.f32.gmra.mxu0 %v1942
    %v1944 = vpop.f32.mrf.mxu0
    %v1945 = vadd.f32 %v1664, %v1944
    %v1946 = vpop.f32.mrf.mxu0
    %1947 = vdwg.mxu0
    %1948 = vmatprep.subr.mxu0 0.0
    %1949 = vmatpush1.msra.mxu0 0.0
    %1950 = vmatprep.subr.mxu0 0.0
    %1951 = vmatpush1.msra.mxu0 0.0
    %1952 = vmatprep.subr.mxu0 0.0
    %1953 = vmatpush1.msra.mxu0 0.0
    %1954 = vmatprep.subr.mxu0 0.0
    %1955 = vmatpush1.msra.mxu0 0.0
    %1956 = vmatprep.subr.mxu0 0.0
    %1957 = vmatpush1.msra.mxu0 0.0
    %1958 = vmatprep.subr.mxu0 0.0
    %1959 = vmatpush1.msra.mxu0 0.0
    %1960 = vmatprep.subr.mxu0 0.0
    %1961 = vmatpush1.msra.mxu0 0.0
    %1962 = vmatprep.subr.mxu0 0.0
    %1963 = vmatpush1.msra.mxu0 0.0
    %1964 = vmatprep.subr.mxu0 0.0
    %v1965 = vand.u32 %v245, 4294901760
    %1966 = vmatpush1.msra.mxu0 %v1965
    %1967 = vmatprep.subr.mxu0 0.0
    %v1968 = vand.u32 %v244, 4294901760
    %1969 = vmatpush1.msra.mxu0 %v1968
    %1970 = vmatprep.subr.mxu0 0.0
    %v1971 = vand.u32 %v243, 4294901760
    %1972 = vmatpush1.msra.mxu0 %v1971
    %1973 = vmatprep.subr.mxu0 0.0
    %v1974 = vand.u32 %v242, 4294901760
    %1975 = vmatpush1.msra.mxu0 %v1974
    %1976 = vmatprep.subr.mxu0 0.0
    %v1977 = vand.u32 %v241, 4294901760
    %1978 = vmatpush1.msra.mxu0 %v1977
    %1979 = vmatprep.subr.mxu0 0.0
    %v1980 = vand.u32 %v240, 4294901760
    %1981 = vmatpush1.msra.mxu0 %v1980
    %1982 = vmatprep.subr.mxu0 0.0
    %v1983 = vand.u32 %v239, 4294901760
    %1984 = vmatpush1.msra.mxu0 %v1983
    %1985 = vmatprep.subr.mxu0 0.0
    %v1986 = vand.u32 %v238, 4294901760
    %1987 = vmatpush1.msra.mxu0 %v1986
    %1988 = vmatprep.subr.mxu0 0.0
    %1989 = vmatpush2.msra.mxu0 0.0
    %1990 = vmatprep.subr.mxu0 0.0
    %1991 = vmatpush2.msra.mxu0 0.0
    %1992 = vmatprep.subr.mxu0 0.0
    %1993 = vmatpush2.msra.mxu0 0.0
    %1994 = vmatprep.subr.mxu0 0.0
    %1995 = vmatpush2.msra.mxu0 0.0
    %1996 = vmatprep.subr.mxu0 0.0
    %1997 = vmatpush2.msra.mxu0 0.0
    %1998 = vmatprep.subr.mxu0 0.0
    %1999 = vmatpush2.msra.mxu0 0.0
    %2000 = vmatprep.subr.mxu0 0.0
    %2001 = vmatpush2.msra.mxu0 0.0
    %2002 = vmatprep.subr.mxu0 0.0
    %2003 = vmatpush2.msra.mxu0 0.0
    %2004 = vmatprep.subr.mxu0 0.0
    %2005 = vmatpush2.msra.mxu0 0.0
    %2006 = vmatprep.subr.mxu0 0.0
    %2007 = vmatpush2.msra.mxu0 0.0
    %2008 = vmatprep.subr.mxu0 0.0
    %2009 = vmatpush2.msra.mxu0 0.0
    %2010 = vmatprep.subr.mxu0 0.0
    %2011 = vmatpush2.msra.mxu0 0.0
    %2012 = vmatprep.subr.mxu0 0.0
    %2013 = vmatpush2.msra.mxu0 0.0
    %2014 = vmatprep.subr.mxu0 0.0
    %2015 = vmatpush2.msra.mxu0 0.0
    %2016 = vmatprep.subr.mxu0 0.0
    %2017 = vmatpush2.msra.mxu0 0.0
    %2018 = vmatprep.subr.mxu0 0.0
    %2019 = vmatpush2.msra.mxu0 0.0
    %2020 = vmatprep.mubr.f32.mxu0 0.0
    %v2021 = vand.u32 %v248, 4294901760
    %2022 = vmatmul.mubr.f32.gmra.mxu0 %v2021
    %v2023 = vpop.f32.mrf.mxu0
    %v2024 = vadd.f32 %v1759, %v2023
    %v2025 = vpop.f32.mrf.mxu0
    %2026 = vmatprep.mubr.f32.mxu0 0.0
    %v2027 = vand.u32 %v251, 4294901760
    %2028 = vmatmul.mubr.f32.gmra.mxu0 %v2027
    %v2029 = vpop.f32.mrf.mxu0
    %v2030 = vadd.f32 %v1765, %v2029
    %v2031 = vpop.f32.mrf.mxu0
    %2032 = vmatprep.mubr.f32.mxu0 0.0
    %v2033 = vand.u32 %v254, 4294901760
    %2034 = vmatmul.mubr.f32.gmra.mxu0 %v2033
    %v2035 = vpop.f32.mrf.mxu0
    %v2036 = vadd.f32 %v1771, %v2035
    %v2037 = vpop.f32.mrf.mxu0
    %2038 = vmatprep.mubr.f32.mxu0 0.0
    %v2039 = vand.u32 %v257, 4294901760
    %2040 = vmatmul.mubr.f32.gmra.mxu0 %v2039
    %v2041 = vpop.f32.mrf.mxu0
    %v2042 = vadd.f32 %v1777, %v2041
    %v2043 = vpop.f32.mrf.mxu0
    %2044 = vmatprep.mubr.f32.mxu0 0.0
    %v2045 = vand.u32 %v260, 4294901760
    %2046 = vmatmul.mubr.f32.gmra.mxu0 %v2045
    %v2047 = vpop.f32.mrf.mxu0
    %v2048 = vadd.f32 %v1783, %v2047
    %v2049 = vpop.f32.mrf.mxu0
    %2050 = vmatprep.mubr.f32.mxu0 0.0
    %v2051 = vand.u32 %v263, 4294901760
    %2052 = vmatmul.mubr.f32.gmra.mxu0 %v2051
    %v2053 = vpop.f32.mrf.mxu0
    %v2054 = vadd.f32 %v1789, %v2053
    %v2055 = vpop.f32.mrf.mxu0
    %2056 = vmatprep.mubr.f32.mxu0 0.0
    %v2057 = vand.u32 %v266, 4294901760
    %2058 = vmatmul.mubr.f32.gmra.mxu0 %v2057
    %v2059 = vpop.f32.mrf.mxu0
    %v2060 = vadd.f32 %v1795, %v2059
    %v2061 = vpop.f32.mrf.mxu0
    %2062 = vmatprep.mubr.f32.mxu0 0.0
    %v2063 = vand.u32 %v269, 4294901760
    %2064 = vmatmul.mubr.f32.gmra.mxu0 %v2063
    %v2065 = vpop.f32.mrf.mxu0
    %v2066 = vadd.f32 %v1801, %v2065
    %v2067 = vpop.f32.mrf.mxu0
    %2068 = vmatprep.mubr.f32.mxu0 0.0
    %v2069 = vand.u32 %v272, 4294901760
    %2070 = vmatmul.mubr.f32.gmra.mxu0 %v2069
    %v2071 = vpop.f32.mrf.mxu0
    %v2072 = vadd.f32 %v1807, %v2071
    %v2073 = vpop.f32.mrf.mxu0
    %2074 = vmatprep.mubr.f32.mxu0 0.0
    %v2075 = vand.u32 %v275, 4294901760
    %2076 = vmatmul.mubr.f32.gmra.mxu0 %v2075
    %v2077 = vpop.f32.mrf.mxu0
    %v2078 = vadd.f32 %v1813, %v2077
    %v2079 = vpop.f32.mrf.mxu0
    %2080 = vmatprep.mubr.f32.mxu0 0.0
    %v2081 = vand.u32 %v278, 4294901760
    %2082 = vmatmul.mubr.f32.gmra.mxu0 %v2081
    %v2083 = vpop.f32.mrf.mxu0
    %v2084 = vadd.f32 %v1819, %v2083
    %v2085 = vpop.f32.mrf.mxu0
    %2086 = vmatprep.mubr.f32.mxu0 0.0
    %v2087 = vand.u32 %v281, 4294901760
    %2088 = vmatmul.mubr.f32.gmra.mxu0 %v2087
    %v2089 = vpop.f32.mrf.mxu0
    %v2090 = vadd.f32 %v1825, %v2089
    %v2091 = vpop.f32.mrf.mxu0
    %2092 = vmatprep.mubr.f32.mxu0 0.0
    %v2093 = vand.u32 %v284, 4294901760
    %2094 = vmatmul.mubr.f32.gmra.mxu0 %v2093
    %v2095 = vpop.f32.mrf.mxu0
    %v2096 = vadd.f32 %v1831, %v2095
    %v2097 = vpop.f32.mrf.mxu0
    %2098 = vmatprep.mubr.f32.mxu0 0.0
    %v2099 = vand.u32 %v287, 4294901760
    %2100 = vmatmul.mubr.f32.gmra.mxu0 %v2099
    %v2101 = vpop.f32.mrf.mxu0
    %v2102 = vadd.f32 %v1837, %v2101
    %v2103 = vpop.f32.mrf.mxu0
    %2104 = vmatprep.mubr.f32.mxu0 0.0
    %v2105 = vand.u32 %v290, 4294901760
    %2106 = vmatmul.mubr.f32.gmra.mxu0 %v2105
    %v2107 = vpop.f32.mrf.mxu0
    %v2108 = vadd.f32 %v1843, %v2107
    %v2109 = vpop.f32.mrf.mxu0
    %2110 = vmatprep.mubr.f32.mxu0 0.0
    %v2111 = vand.u32 %v293, 4294901760
    %2112 = vmatmul.mubr.f32.gmra.mxu0 %v2111
    %v2113 = vpop.f32.mrf.mxu0
    %v2114 = vadd.f32 %v1849, %v2113
    %v2115 = vpop.f32.mrf.mxu0
    %2116 = vmatprep.mubr.f32.mxu0 0.0
    %v2117 = vand.u32 %v296, 4294901760
    %2118 = vmatmul.mubr.f32.gmra.mxu0 %v2117
    %v2119 = vpop.f32.mrf.mxu0
    %v2120 = vadd.f32 %v1855, %v2119
    %v2121 = vpop.f32.mrf.mxu0
    %2122 = vmatprep.mubr.f32.mxu0 0.0
    %v2123 = vand.u32 %v299, 4294901760
    %2124 = vmatmul.mubr.f32.gmra.mxu0 %v2123
    %v2125 = vpop.f32.mrf.mxu0
    %v2126 = vadd.f32 %v1861, %v2125
    %v2127 = vpop.f32.mrf.mxu0
    %2128 = vmatprep.mubr.f32.mxu0 0.0
    %v2129 = vand.u32 %v302, 4294901760
    %2130 = vmatmul.mubr.f32.gmra.mxu0 %v2129
    %v2131 = vpop.f32.mrf.mxu0
    %v2132 = vadd.f32 %v1867, %v2131
    %v2133 = vpop.f32.mrf.mxu0
    %2134 = vmatprep.mubr.f32.mxu0 0.0
    %v2135 = vand.u32 %v305, 4294901760
    %2136 = vmatmul.mubr.f32.gmra.mxu0 %v2135
    %v2137 = vpop.f32.mrf.mxu0
    %v2138 = vadd.f32 %v1873, %v2137
    %v2139 = vpop.f32.mrf.mxu0
    %2140 = vmatprep.mubr.f32.mxu0 0.0
    %v2141 = vand.u32 %v308, 4294901760
    %2142 = vmatmul.mubr.f32.gmra.mxu0 %v2141
    %v2143 = vpop.f32.mrf.mxu0
    %v2144 = vadd.f32 %v1879, %v2143
    %v2145 = vpop.f32.mrf.mxu0
    %2146 = vmatprep.mubr.f32.mxu0 0.0
    %v2147 = vand.u32 %v311, 4294901760
    %2148 = vmatmul.mubr.f32.gmra.mxu0 %v2147
    %v2149 = vpop.f32.mrf.mxu0
    %v2150 = vadd.f32 %v1885, %v2149
    %v2151 = vpop.f32.mrf.mxu0
    %2152 = vmatprep.mubr.f32.mxu0 0.0
    %v2153 = vand.u32 %v314, 4294901760
    %2154 = vmatmul.mubr.f32.gmra.mxu0 %v2153
    %v2155 = vpop.f32.mrf.mxu0
    %v2156 = vadd.f32 %v1891, %v2155
    %v2157 = vpop.f32.mrf.mxu0
    %2158 = vmatprep.mubr.f32.mxu0 0.0
    %v2159 = vand.u32 %v317, 4294901760
    %2160 = vmatmul.mubr.f32.gmra.mxu0 %v2159
    %v2161 = vpop.f32.mrf.mxu0
    %v2162 = vadd.f32 %v1897, %v2161
    %v2163 = vpop.f32.mrf.mxu0
    %2164 = vmatprep.mubr.f32.mxu0 0.0
    %v2165 = vand.u32 %v320, 4294901760
    %2166 = vmatmul.mubr.f32.gmra.mxu0 %v2165
    %v2167 = vpop.f32.mrf.mxu0
    %v2168 = vadd.f32 %v1903, %v2167
    %v2169 = vpop.f32.mrf.mxu0
    %2170 = vmatprep.mubr.f32.mxu0 0.0
    %v2171 = vand.u32 %v323, 4294901760
    %2172 = vmatmul.mubr.f32.gmra.mxu0 %v2171
    %v2173 = vpop.f32.mrf.mxu0
    %v2174 = vadd.f32 %v1909, %v2173
    %v2175 = vpop.f32.mrf.mxu0
    %2176 = vmatprep.mubr.f32.mxu0 0.0
    %v2177 = vand.u32 %v326, 4294901760
    %2178 = vmatmul.mubr.f32.gmra.mxu0 %v2177
    %v2179 = vpop.f32.mrf.mxu0
    %v2180 = vadd.f32 %v1915, %v2179
    %v2181 = vpop.f32.mrf.mxu0
    %2182 = vmatprep.mubr.f32.mxu0 0.0
    %v2183 = vand.u32 %v329, 4294901760
    %2184 = vmatmul.mubr.f32.gmra.mxu0 %v2183
    %v2185 = vpop.f32.mrf.mxu0
    %v2186 = vadd.f32 %v1921, %v2185
    %v2187 = vpop.f32.mrf.mxu0
    %2188 = vmatprep.mubr.f32.mxu0 0.0
    %v2189 = vand.u32 %v332, 4294901760
    %2190 = vmatmul.mubr.f32.gmra.mxu0 %v2189
    %v2191 = vpop.f32.mrf.mxu0
    %v2192 = vadd.f32 %v1927, %v2191
    %v2193 = vpop.f32.mrf.mxu0
    %2194 = vmatprep.mubr.f32.mxu0 0.0
    %v2195 = vand.u32 %v335, 4294901760
    %2196 = vmatmul.mubr.f32.gmra.mxu0 %v2195
    %v2197 = vpop.f32.mrf.mxu0
    %v2198 = vadd.f32 %v1933, %v2197
    %v2199 = vpop.f32.mrf.mxu0
    %2200 = vmatprep.mubr.f32.mxu0 0.0
    %v2201 = vand.u32 %v338, 4294901760
    %2202 = vmatmul.mubr.f32.gmra.mxu0 %v2201
    %v2203 = vpop.f32.mrf.mxu0
    %v2204 = vadd.f32 %v1939, %v2203
    %v2205 = vpop.f32.mrf.mxu0
    %2206 = vmatprep.mubr.f32.mxu0 0.0
    %v2207 = vand.u32 %v341, 4294901760
    %2208 = vmatmul.mubr.f32.gmra.mxu0 %v2207
    %v2209 = vpop.f32.mrf.mxu0
    %v2210 = vadd.f32 %v1945, %v2209
    %v2211 = vpop.f32.mrf.mxu0
    %2212 = vdwg.mxu0
    %2213 = vst [vmem:[#allocation2] sm:$0xff] %v2024
    %2214 = vst [vmem:[#allocation2 + $0x8] sm:$0xff] %v2030
    %2215 = vst [vmem:[#allocation2 + $0x10] sm:$0xff] %v2036
    %2216 = vst [vmem:[#allocation2 + $0x18] sm:$0xff] %v2042
    %2217 = vst [vmem:[#allocation2 + $0x20] sm:$0xff] %v2048
    %2218 = vst [vmem:[#allocation2 + $0x28] sm:$0xff] %v2054
    %2219 = vst [vmem:[#allocation2 + $0x30] sm:$0xff] %v2060
    %2220 = vst [vmem:[#allocation2 + $0x38] sm:$0xff] %v2066
    %2221 = vst [vmem:[#allocation2 + $0x40] sm:$0xff] %v2072
    %2222 = vst [vmem:[#allocation2 + $0x48] sm:$0xff] %v2078
    %2223 = vst [vmem:[#allocation2 + $0x50] sm:$0xff] %v2084
    %2224 = vst [vmem:[#allocation2 + $0x58] sm:$0xff] %v2090
    %2225 = vst [vmem:[#allocation2 + $0x60] sm:$0xff] %v2096
    %2226 = vst [vmem:[#allocation2 + $0x68] sm:$0xff] %v2102
    %2227 = vst [vmem:[#allocation2 + $0x70] sm:$0xff] %v2108
    %2228 = vst [vmem:[#allocation2 + $0x78] sm:$0xff] %v2114
    %2229 = vst [vmem:[#allocation2 + $0x80] sm:$0xff] %v2120
    %2230 = vst [vmem:[#allocation2 + $0x88] sm:$0xff] %v2126
    %2231 = vst [vmem:[#allocation2 + $0x90] sm:$0xff] %v2132
    %2232 = vst [vmem:[#allocation2 + $0x98] sm:$0xff] %v2138
    %2233 = vst [vmem:[#allocation2 + $0xa0] sm:$0xff] %v2144
    %2234 = vst [vmem:[#allocation2 + $0xa8] sm:$0xff] %v2150
    %2235 = vst [vmem:[#allocation2 + $0xb0] sm:$0xff] %v2156
    %2236 = vst [vmem:[#allocation2 + $0xb8] sm:$0xff] %v2162
    %2237 = vst [vmem:[#allocation2 + $0xc0] sm:$0xff] %v2168
    %2238 = vst [vmem:[#allocation2 + $0xc8] sm:$0xff] %v2174
    %2239 = vst [vmem:[#allocation2 + $0xd0] sm:$0xff] %v2180
    %2240 = vst [vmem:[#allocation2 + $0xd8] sm:$0xff] %v2186
    %2241 = vst [vmem:[#allocation2 + $0xe0] sm:$0xff] %v2192
    %2242 = vst [vmem:[#allocation2 + $0xe8] sm:$0xff] %v2198
    %2243 = vst [vmem:[#allocation2 + $0xf0] sm:$0xff] %v2204
    %2244 = vst [vmem:[#allocation2 + $0xf8] sm:$0xff] %v2210
    // Predicated region
    $region10: #{tpu_custom_call.1} parent=1 // pred_check
      _
    $region11: #{tpu_custom_call.1} parent=1 // pred_check_branch
      %2246 = sbr.rel (0) target = $region13
    $region12: #{tpu_custom_call.1} parent=1 // pred_region
      %s2248 = ssub.s32 4096, 4096
      %2249 = vsyncadd [#allocation3], %s2248
      %s2250 = sshll.u32 [#allocation2], 4
      %s2251 = int_to_ptr.vmem [resolvable:$true] %s2250
      %2256 = dma.vmem_to_hbm [thread:$0]  %s2251, 4096, %s2, [#allocation3], 128, 128, 8
    $region13: #{tpu_custom_call.1} parent=1 // pred_fallthru
      _
    // Predicated region
    $region14: #{tpu_custom_call.1} parent=1 // pred_check
      _
    $region15: #{tpu_custom_call.1} parent=1 // pred_check_branch
      %2258 = sbr.rel (0) target = $region17
    $region16: #{tpu_custom_call.1} parent=1 // pred_region
      %2259 = dma.done [#allocation3], 4096
    $region17: #{tpu_custom_call.1} parent=1 // pred_fallthru
      _
    %2260 = vsyncpa [#allocation3], 1

</llo_original>
